<compile_context>
chip_gen: v5e
topology: v5e:2x2
jax: 0.10.0
libtpu: 0.0.40
codegen_flags: <defaults>
</compile_context>

<pallas_src>
import jax
import jax.numpy as jnp
from jax.experimental import pallas as pl
from jax.experimental.pallas import tpu as pltpu

# ---------------------------------------------------------------------------
# Model dimensions (small, fixed by the synthetic encoder)
# ---------------------------------------------------------------------------
B = 8            # batch
C_IN = 4         # input channels
HW = 16          # input spatial size
N_C1 = 16        # conv1 out channels
N_C2 = 16        # conv2 out channels
HO2 = 5          # conv2 output spatial (16 -k3s2-> 7 -k3s1-> 5)
FEAT = 256       # encoder.linear_out_dim (256 so mlp(z)+z residual is valid)
FLAT = N_C2 * HO2 * HO2          # 400
K1 = C_IN * 9                    # 36  : conv1 patch length
K1D = 9 * K1                     # 324 : conv1 patches for all 9 conv2 taps
K2 = 9 * N_C1                    # 144 : conv2 patch length
NROW = HO2 * HO2 * B             # 200 : (ho, wo, b) rows


# ---------------------------------------------------------------------------
# Fused Pallas kernel: grid step 0/1 = encoders, step 2 = tail
# ---------------------------------------------------------------------------
def _make_fused_kernel(use_mlp):
    def kernel(*refs):
        if use_mlp:
            (p1_ref, w1m_ref, b1t_ref, w2m_ref, b2_ref,
             fcw_ref, fcb_ref, lng_ref, lnb_ref,
             mw1_ref, mb1_ref, mw2_ref, mb2_ref, wb_ref,
             out_ref, zfeat_ref, w1d_ref, flat_ref) = refs
        else:
            (p1_ref, w1m_ref, b1t_ref, w2m_ref, b2_ref,
             fcw_ref, fcb_ref, lng_ref, lnb_ref, wb_ref,
             out_ref, zfeat_ref, w1d_ref, flat_ref) = refs

        i = pl.program_id(0)

        # Zero the block-diagonal conv1-weight scratch once; the off-diagonal
        # zeros persist across grid steps (VMEM scratch is persistent), so
        # steps 0/1 only rewrite the 9 diagonal blocks.
        @pl.when(i == 0)
        def _():
            w1d_ref[...] = jnp.zeros_like(w1d_ref)

        # ---------------- steps 0 / 1: one encoder each --------------------
        @pl.when(i < 2)
        def _():
            # Build block-diagonal conv1 weights from the dense (36,16) slab
            # (the 89%-zero (324,144) matrix never crosses HBM).
            w1m = w1m_ref[0]                                       # (36, 16)
            for j in range(9):
                w1d_ref[j * K1:(j + 1) * K1,
                        j * N_C1:(j + 1) * N_C1] = w1m

            # conv1 for every conv2 tap at once (single GEMM) + ReLU.
            # rows = (ho, wo, b); cols = (tap, c1).
            h1 = jnp.dot(p1_ref[0], w1d_ref[...],
                         preferred_element_type=jnp.float32)       # (200,144)
            h1 = jnp.maximum(h1 + b1t_ref[0], 0.0)

            # conv2 + ReLU.  rows = (ho, wo, b); cols = c2.
            h2 = jnp.dot(h1.astype(jnp.bfloat16), w2m_ref[0],
                         preferred_element_type=jnp.float32)       # (200, 16)
            h2 = jnp.maximum(h2 + b2_ref[0], 0.0)

            # Repack to PyTorch-flatten-compatible (B, 400) in bf16:
            #   flat[b, s*16 + c2] = h2[s*8 + b, c2]  (fc weights row-permuted).
            for s in range(HO2 * HO2):
                flat_ref[:, s * N_C2:(s + 1) * N_C2] = (
                    h2[s * B:(s + 1) * B, :].astype(jnp.bfloat16))

            # fc + LayerNorm(eps=1e-5, biased var) + tanh (f32 math).
            z = jnp.dot(flat_ref[...], fcw_ref[0],
                        preferred_element_type=jnp.float32) + fcb_ref[0]
            mu = jnp.mean(z, axis=-1, keepdims=True)
            var = jnp.mean((z - mu) ** 2, axis=-1, keepdims=True)
            zn = (z - mu) * jax.lax.rsqrt(var + 1e-5)
            zfeat_ref[i] = jnp.tanh(zn * lng_ref[0] + lnb_ref[0])  # (B, 256)

        # ---------------- step 2: anchor MLP + bilinear logits -------------
        @pl.when(i == 2)
        def _():
            z_a = zfeat_ref[0]                    # encoder(anc)        (B,256)
            z_p = zfeat_ref[1]                    # encoder_target(pos), no_grad
            if use_mlp:
                h = jnp.dot(z_a.astype(jnp.bfloat16), mw1_ref[...],
                            preferred_element_type=jnp.float32) + mb1_ref[...]
                h = jnp.maximum(h, 0.0)
                z_a = (jnp.dot(h.astype(jnp.bfloat16), mw2_ref[...],
                               preferred_element_type=jnp.float32)
                       + mb2_ref[...] + z_a)      # residual mlp(z)+z
            mw = jnp.dot(z_a.astype(jnp.bfloat16), wb_ref[...],
                         preferred_element_type=jnp.float32)        # z_a @ W
            # Final contraction kept in f32 (negligible MXU cost, better parity).
            logits = jax.lax.dot_general(
                mw, z_p, (((1,), (1,)), ((), ())),
                preferred_element_type=jnp.float32)                 # (B, B)
            out_ref[...] = logits - jnp.max(logits, axis=1, keepdims=True)

    return kernel


# ---------------------------------------------------------------------------
# pallas_call wrapper
# ---------------------------------------------------------------------------
def _enc_spec(shape):
    """Leading dim indexes the encoder; step 2 re-uses step 1's block (no DMA)."""
    nd = len(shape)
    return pl.BlockSpec((1,) + tuple(shape[1:]),
                        lambda i: (jnp.minimum(i, 1),) + (0,) * (nd - 1))


def _tail_spec(shape):
    """Single full-array block, fetched once and kept resident."""
    nd = len(shape)
    return pl.BlockSpec(tuple(shape), lambda i: (0,) * nd)


_FUSED_PARAMS = pltpu.CompilerParams(
    dimension_semantics=("arbitrary",),          # steps are order-dependent
    vmem_limit_bytes=32 * 1024 * 1024,           # safe on v5e/v6e/v7x
)


def curl_atc_fused(packed, p1g):
    """p1g: (2, NROW, K1D) bf16 double-im2col patches -> logits (B, B)."""
    enc = packed["enc"]
    mlp = packed["anchor_mlp"]
    use_mlp = mlp is not None

    enc_args = (p1g, enc["w1m"], enc["b1t"], enc["w2m"], enc["b2"],
                enc["fcw"], enc["fcb"], enc["lng"], enc["lnb"])
    tail_args = ((mlp["w1"], mlp["b1"], mlp["w2"], mlp["b2"]) if use_mlp else ())
    tail_args = tail_args + (packed["W"],)

    in_specs = ([_enc_spec(a.shape) for a in enc_args]
                + [_tail_spec(a.shape) for a in tail_args])

    return pl.pallas_call(
        _make_fused_kernel(use_mlp),
        grid=(3,),
        in_specs=in_specs,
        out_specs=pl.BlockSpec((B, B), lambda i: (0, 0)),
        out_shape=jax.ShapeDtypeStruct((B, B), jnp.float32),
        scratch_shapes=[
            pltpu.VMEM((2, B, FEAT), jnp.float32),   # encoder features (resident)
            pltpu.VMEM((K1D, K2), jnp.bfloat16),     # block-diag conv1 weights
            pltpu.VMEM((B, FLAT), jnp.bfloat16),     # repacked conv2 output
        ],
        compiler_params=_FUSED_PARAMS,
    )(*(enc_args + tail_args))


# ---------------------------------------------------------------------------
# Wrapper glue: double im2col of the raw NCHW input (XLA-fused, tiny, bf16)
# ---------------------------------------------------------------------------
def _conv1_double_patches(x):
    """x: (N, B, C, 16, 16) NCHW stacked over the 2 encoders (bf16).

    Returns (N, HO2*HO2*B, 9*C*9) where
      row = ho*HO2*B + wo*B + b                 (conv2 output position, batch)
      col = (dh*3+dw)*C*9 + c*9 + kh*3 + kw     (conv2 tap, conv1 patch element)
    i.e. for every conv2 output position, the conv1 im2col patch of each of the
    nine conv1 outputs that conv2's 3x3 window touches.
    """
    N, Bs, C, H, W = x.shape
    span = 2 * HO2 - 1  # 9
    taps = []
    for dh in range(3):
        for dw in range(3):
            k = []
            for kh in range(3):
                for kw in range(3):
                    h0 = 2 * dh + kh
                    w0 = 2 * dw + kw
                    k.append(x[:, :, :, h0:h0 + span:2, w0:w0 + span:2])
            taps.append(jnp.stack(k, axis=3))          # (N, B, C, 9, 5, 5)
    p = jnp.stack(taps, axis=2)                        # (N, B, 9, C, 9, 5, 5)
    p = jnp.transpose(p, (0, 5, 6, 1, 2, 3, 4))        # (N, ho, wo, B, tap, C, k)
    return p.reshape(N, HO2 * HO2 * Bs, 9 * C * 9)


# ---------------------------------------------------------------------------
# Forward
# ---------------------------------------------------------------------------
def curl_atc_forward(packed, anc, pos):
    # Patches shipped to the kernel in bf16 (halves the largest DMA input).
    x = jnp.stack([anc, pos], axis=0).astype(jnp.bfloat16)   # (2, B, C, H, W)
    p1g = _conv1_double_patches(x)                           # (2, 200, 324) bf16
    # encoder_target runs under torch.no_grad in the reference -> forward-only
    # no-op here (the whole Pallas forward is non-differentiated anyway).
    return curl_atc_fused(packed, p1g)                       # (B, B) logits


# ---------------------------------------------------------------------------
# Parameter construction (PyTorch conventions) + one-time packing
# ---------------------------------------------------------------------------
def _uniform(key, shape, fan_in):
    bound = 1.0 / jnp.sqrt(jnp.float32(fan_in))
    return jax.random.uniform(key, shape, jnp.float32, -bound, bound)


def make_encoder_params(key, in_ch, feat_dim, flat_dim):
    ks = jax.random.split(key, 6)
    return {
        "conv1_w": _uniform(ks[0], (N_C1, in_ch, 3, 3), in_ch * 9),
        "conv1_b": _uniform(ks[1], (N_C1,), in_ch * 9),
        "conv2_w": _uniform(ks[2], (N_C2, N_C1, 3, 3), N_C1 * 9),
        "conv2_b": _uniform(ks[3], (N_C2,), N_C1 * 9),
        "fc_w": _uniform(ks[4], (flat_dim, feat_dim), flat_dim),
        "fc_b": _uniform(ks[5], (feat_dim,), flat_dim),
        "ln_g": jnp.ones((feat_dim,), jnp.float32),
        "ln_b": jnp.zeros((feat_dim,), jnp.float32),
    }


def make_curl_params(key, in_ch, feat_dim, flat_dim, anchor_projection=True):
    k_enc, k_tgt, k_mlp, k_w = jax.random.split(key, 4)
    params = {
        "encoder": make_encoder_params(k_enc, in_ch, feat_dim, flat_dim),
        "encoder_target": make_encoder_params(k_tgt, in_ch, feat_dim, flat_dim),
    }
    if anchor_projection:
        km = jax.random.split(k_mlp, 4)
        params["anchor_mlp"] = {
            "w1": _uniform(km[0], (feat_dim, 256), feat_dim),
            "b1": _uniform(km[1], (256,), feat_dim),
            "w2": _uniform(km[2], (256, 256), 256),
            "b2": _uniform(km[3], (256,), 256),
        }
        out_dim = 256
    else:
        params["anchor_mlp"] = None
        out_dim = feat_dim
    # self.W = nn.Parameter(torch.rand(feature_dim, feature_dim)) -> U[0, 1)
    params["W"] = jax.random.uniform(k_w, (out_dim, out_dim), jnp.float32)
    return params


def _pack_encoder(p):
    c_in = p["conv1_w"].shape[1]
    feat = p["fc_w"].shape[1]
    assert p["fc_w"].shape[0] == N_C2 * HO2 * HO2
    # conv1: (O, C, kh, kw) -> (C*9, O) dense; block-diag is built in-kernel.
    w1m = p["conv1_w"].reshape(N_C1, c_in * 9).T                    # (36, 16)
    b1t = jnp.tile(p["conv1_b"], 9).reshape(1, 9 * N_C1)            # (1, 144)
    # conv2: rows ordered (dh, dw, c1) to match the conv1-GEMM column order.
    w2m = jnp.transpose(p["conv2_w"], (2, 3, 1, 0)).reshape(9 * N_C1, N_C2)
    # fc: permute rows from NCHW-flatten (c2*25+s) to kernel order (s*16+c2).
    fcw = p["fc_w"].reshape(N_C2, HO2 * HO2, feat)
    fcw = jnp.transpose(fcw, (1, 0, 2)).reshape(N_C2 * HO2 * HO2, feat)
    return {
        "w1m": w1m.astype(jnp.bfloat16),
        "b1t": b1t,
        "w2m": w2m.astype(jnp.bfloat16),
        "b2": p["conv2_b"].reshape(1, N_C2),
        "fcw": fcw.astype(jnp.bfloat16),
        "fcb": p["fc_b"].reshape(1, feat),
        "lng": p["ln_g"].reshape(1, feat),
        "lnb": p["ln_b"].reshape(1, feat),
    }


def pack_curl_params(params):
    enc = _pack_encoder(params["encoder"])
    tgt = _pack_encoder(params["encoder_target"])
    packed_enc = {k: jnp.stack([enc[k], tgt[k]], axis=0) for k in enc}
    if params["anchor_mlp"] is not None:
        m = params["anchor_mlp"]
        mlp = {
            "w1": m["w1"].astype(jnp.bfloat16),
            "b1": m["b1"].reshape(1, -1),
            "w2": m["w2"].astype(jnp.bfloat16),
            "b2": m["b2"].reshape(1, -1),
        }
    else:
        mlp = None
    return {
        "enc": packed_enc,
        "anchor_mlp": mlp,
        "W": params["W"].astype(jnp.bfloat16),
    }


# ---------------------------------------------------------------------------
# Main
# ---------------------------------------------------------------------------
if __name__ == "__main__":
    key = jax.random.PRNGKey(0)
    k_p, k_a, k_b = jax.random.split(key, 3)

    params = make_curl_params(k_p, C_IN, FEAT, FLAT, anchor_projection=True)
    packed = pack_curl_params(params)      # one-time weight re-layout / bf16

    anc = jax.random.normal(k_a, (B, C_IN, HW, HW), jnp.float32)
    pos = jax.random.normal(k_b, (B, C_IN, HW, HW), jnp.float32)

    fwd = jax.jit(curl_atc_forward)
    logits = jax.block_until_ready(fwd(packed, anc, pos))

    assert logits.shape == (B, B), logits.shape
    assert bool(jnp.all(jnp.isfinite(logits)))
    # row-max subtraction => every row's max is exactly 0
    assert jnp.allclose(jnp.max(logits, axis=1), 0.0, atol=1e-5)
    print("KERNEL_OK")
</pallas_src>

<mosaic_0001>
module attributes {stable_mosaic.version = 11 : i64} {
  func.func @kernel(%arg0: i32, %arg1: memref<1x200x324xbf16, #tpu.memory_space<vmem>>, %arg2: memref<1x36x16xbf16, #tpu.memory_space<vmem>>, %arg3: memref<1x1x144xf32, #tpu.memory_space<vmem>>, %arg4: memref<1x144x16xbf16, #tpu.memory_space<vmem>>, %arg5: memref<1x1x16xf32, #tpu.memory_space<vmem>>, %arg6: memref<1x400x256xbf16, #tpu.memory_space<vmem>>, %arg7: memref<1x1x256xf32, #tpu.memory_space<vmem>>, %arg8: memref<1x1x256xf32, #tpu.memory_space<vmem>>, %arg9: memref<1x1x256xf32, #tpu.memory_space<vmem>>, %arg10: memref<256x256xbf16, #tpu.memory_space<vmem>>, %arg11: memref<1x256xf32, #tpu.memory_space<vmem>>, %arg12: memref<256x256xbf16, #tpu.memory_space<vmem>>, %arg13: memref<1x256xf32, #tpu.memory_space<vmem>>, %arg14: memref<256x256xbf16, #tpu.memory_space<vmem>>, %arg15: memref<8x8xf32, #tpu.memory_space<vmem>>, %arg16: memref<2x8x256xf32, #tpu.memory_space<vmem>>, %arg17: memref<324x144xbf16, #tpu.memory_space<vmem>>, %arg18: memref<8x400xbf16, #tpu.memory_space<vmem>>) attributes {dimension_semantics = [#tpu.dimension_semantics<arbitrary>], iteration_bounds = array<i64: 3>, scalar_prefetch = 0 : i64, scratch_operands = 3 : i64, tpu.core_type = #tpu.core_type<tc>, window_params = [{transform_indices = @transform_0, window_bounds = array<i64: 1, 200, 324>}, {transform_indices = @transform_1, window_bounds = array<i64: 1, 36, 16>}, {transform_indices = @transform_2, window_bounds = array<i64: 1, 1, 144>}, {transform_indices = @transform_3, window_bounds = array<i64: 1, 144, 16>}, {transform_indices = @transform_4, window_bounds = array<i64: 1, 1, 16>}, {transform_indices = @transform_5, window_bounds = array<i64: 1, 400, 256>}, {transform_indices = @transform_6, window_bounds = array<i64: 1, 1, 256>}, {transform_indices = @transform_7, window_bounds = array<i64: 1, 1, 256>}, {transform_indices = @transform_8, window_bounds = array<i64: 1, 1, 256>}, {pipeline_mode = #tpu.pipeline_mode<synchronous>, transform_indices = @transform_9, window_bounds = array<i64: 256, 256>}, {pipeline_mode = #tpu.pipeline_mode<synchronous>, transform_indices = @transform_10, window_bounds = array<i64: 1, 256>}, {pipeline_mode = #tpu.pipeline_mode<synchronous>, transform_indices = @transform_11, window_bounds = array<i64: 256, 256>}, {pipeline_mode = #tpu.pipeline_mode<synchronous>, transform_indices = @transform_12, window_bounds = array<i64: 1, 256>}, {pipeline_mode = #tpu.pipeline_mode<synchronous>, transform_indices = @transform_13, window_bounds = array<i64: 256, 256>}, {pipeline_mode = #tpu.pipeline_mode<synchronous>, transform_indices = @transform_14, window_bounds = array<i64: 8, 8>}]} {
    %c0_i32 = arith.constant 0 : i32
    %0 = arith.cmpi eq, %arg0, %c0_i32 : i32
    %1 = arith.extui %0 : i1 to i32
    %c0_i32_0 = arith.constant 0 : i32
    %2 = arith.cmpi ne, %1, %c0_i32_0 : i32
    scf.if %2 {
      %cst = arith.constant 0.000000e+00 : bf16
      %9 = vector.broadcast %cst : bf16 to vector<324x144xbf16>
      %c0 = arith.constant 0 : index
      %c0_4 = arith.constant 0 : index
      %10 = vector.load %arg17[%c0, %c0_4] : memref<324x144xbf16, #tpu.memory_space<vmem>>, vector<324x144xbf16>
      tpu.vector_store %arg17[%c0, %c0_4], %9 {strides = array<i32>} : memref<324x144xbf16, #tpu.memory_space<vmem>>, vector<324x144xbf16>,
    } else {
    }
    %c2_i32 = arith.constant 2 : i32
    %3 = arith.cmpi slt, %arg0, %c2_i32 : i32
    %4 = arith.extui %3 : i1 to i32
    %c0_i32_1 = arith.constant 0 : i32
    %5 = arith.cmpi ne, %4, %c0_i32_1 : i32
    scf.if %5 {
      %c0 = arith.constant 0 : index
      %c0_4 = arith.constant 0 : index
      %c0_5 = arith.constant 0 : index
      %9 = vector.load %arg2[%c0, %c0_4, %c0_5] : memref<1x36x16xbf16, #tpu.memory_space<vmem>>, vector<1x36x16xbf16>
      %10 = vector.shape_cast %9 : vector<1x36x16xbf16> to vector<36x16xbf16>
      %c0_6 = arith.constant 0 : index
      %c0_7 = arith.constant 0 : index
      %11 = vector.load %arg17[%c0_6, %c0_7] : memref<324x144xbf16, #tpu.memory_space<vmem>>, vector<36x16xbf16>
      tpu.vector_store %arg17[%c0_6, %c0_7], %10 {strides = array<i32>} : memref<324x144xbf16, #tpu.memory_space<vmem>>, vector<36x16xbf16>,
      %c36 = arith.constant 36 : index
      %c16 = arith.constant 16 : index
      %12 = vector.load %arg17[%c36, %c16] : memref<324x144xbf16, #tpu.memory_space<vmem>>, vector<36x16xbf16>
      tpu.vector_store %arg17[%c36, %c16], %10 {strides = array<i32>} : memref<324x144xbf16, #tpu.memory_space<vmem>>, vector<36x16xbf16>,
      %c72 = arith.constant 72 : index
      %c32 = arith.constant 32 : index
      %13 = vector.load %arg17[%c72, %c32] : memref<324x144xbf16, #tpu.memory_space<vmem>>, vector<36x16xbf16>
      tpu.vector_store %arg17[%c72, %c32], %10 {strides = array<i32>} : memref<324x144xbf16, #tpu.memory_space<vmem>>, vector<36x16xbf16>,
      %c108 = arith.constant 108 : index
      %c48 = arith.constant 48 : index
      %14 = vector.load %arg17[%c108, %c48] : memref<324x144xbf16, #tpu.memory_space<vmem>>, vector<36x16xbf16>
      tpu.vector_store %arg17[%c108, %c48], %10 {strides = array<i32>} : memref<324x144xbf16, #tpu.memory_space<vmem>>, vector<36x16xbf16>,
      %c144 = arith.constant 144 : index
      %c64 = arith.constant 64 : index
      %15 = vector.load %arg17[%c144, %c64] : memref<324x144xbf16, #tpu.memory_space<vmem>>, vector<36x16xbf16>
      tpu.vector_store %arg17[%c144, %c64], %10 {strides = array<i32>} : memref<324x144xbf16, #tpu.memory_space<vmem>>, vector<36x16xbf16>,
      %c180 = arith.constant 180 : index
      %c80 = arith.constant 80 : index
      %16 = vector.load %arg17[%c180, %c80] : memref<324x144xbf16, #tpu.memory_space<vmem>>, vector<36x16xbf16>
      tpu.vector_store %arg17[%c180, %c80], %10 {strides = array<i32>} : memref<324x144xbf16, #tpu.memory_space<vmem>>, vector<36x16xbf16>,
      %c216 = arith.constant 216 : index
      %c96 = arith.constant 96 : index
      %17 = vector.load %arg17[%c216, %c96] : memref<324x144xbf16, #tpu.memory_space<vmem>>, vector<36x16xbf16>
      tpu.vector_store %arg17[%c216, %c96], %10 {strides = array<i32>} : memref<324x144xbf16, #tpu.memory_space<vmem>>, vector<36x16xbf16>,
      %c252 = arith.constant 252 : index
      %c112 = arith.constant 112 : index
      %18 = vector.load %arg17[%c252, %c112] : memref<324x144xbf16, #tpu.memory_space<vmem>>, vector<36x16xbf16>
      tpu.vector_store %arg17[%c252, %c112], %10 {strides = array<i32>} : memref<324x144xbf16, #tpu.memory_space<vmem>>, vector<36x16xbf16>,
      %c288 = arith.constant 288 : index
      %c128 = arith.constant 128 : index
      %19 = vector.load %arg17[%c288, %c128] : memref<324x144xbf16, #tpu.memory_space<vmem>>, vector<36x16xbf16>
      tpu.vector_store %arg17[%c288, %c128], %10 {strides = array<i32>} : memref<324x144xbf16, #tpu.memory_space<vmem>>, vector<36x16xbf16>,
      %c0_8 = arith.constant 0 : index
      %c0_9 = arith.constant 0 : index
      %c0_10 = arith.constant 0 : index
      %20 = vector.load %arg1[%c0_8, %c0_9, %c0_10] : memref<1x200x324xbf16, #tpu.memory_space<vmem>>, vector<1x200x324xbf16>
      %21 = vector.shape_cast %20 : vector<1x200x324xbf16> to vector<200x324xbf16>
      %c0_11 = arith.constant 0 : index
      %c0_12 = arith.constant 0 : index
      %22 = vector.load %arg17[%c0_11, %c0_12] : memref<324x144xbf16, #tpu.memory_space<vmem>>, vector<324x144xbf16>
      %cst = arith.constant dense<0.000000e+00> : vector<200x144xf32>
      %23 = tpu.matmul %21, %22, %cst {dimension_numbers = #tpu.dot_dimension_numbers<[1], [0], [0], [1], [0, 0, 1, 1], [], []>} : vector<200x324xbf16>, vector<324x144xbf16>, vector<200x144xf32> -> vector<200x144xf32>
      %c0_13 = arith.constant 0 : index
      %c0_14 = arith.constant 0 : index
      %c0_15 = arith.constant 0 : index
      %24 = vector.load %arg3[%c0_13, %c0_14, %c0_15] : memref<1x1x144xf32, #tpu.memory_space<vmem>>, vector<1x1x144xf32>
      %25 = vector.shape_cast %24 : vector<1x1x144xf32> to vector<1x144xf32>
      %26 = vector.broadcast %25 : vector<1x144xf32> to vector<200x144xf32>
      %27 = arith.addf %23, %26 : vector<200x144xf32>
      %cst_16 = arith.constant 0.000000e+00 : f32
      %28 = vector.broadcast %cst_16 : f32 to vector<200x144xf32>
      %29 = arith.maximumf %27, %28 : vector<200x144xf32>
      %30 = arith.truncf %29 : vector<200x144xf32> to vector<200x144xbf16>
      %c0_17 = arith.constant 0 : index
      %c0_18 = arith.constant 0 : index
      %c0_19 = arith.constant 0 : index
      %31 = vector.load %arg4[%c0_17, %c0_18, %c0_19] : memref<1x144x16xbf16, #tpu.memory_space<vmem>>, vector<1x144x16xbf16>
      %32 = vector.shape_cast %31 : vector<1x144x16xbf16> to vector<144x16xbf16>
      %cst_20 = arith.constant dense<0.000000e+00> : vector<200x16xf32>
      %33 = tpu.matmul %30, %32, %cst_20 {dimension_numbers = #tpu.dot_dimension_numbers<[1], [0], [0], [1], [0, 0, 1, 1], [], []>} : vector<200x144xbf16>, vector<144x16xbf16>, vector<200x16xf32> -> vector<200x16xf32>
      %c0_21 = arith.constant 0 : index
      %c0_22 = arith.constant 0 : index
      %c0_23 = arith.constant 0 : index
      %34 = vector.load %arg5[%c0_21, %c0_22, %c0_23] : memref<1x1x16xf32, #tpu.memory_space<vmem>>, vector<1x1x16xf32>
      %35 = vector.shape_cast %34 : vector<1x1x16xf32> to vector<1x16xf32>
      %36 = vector.broadcast %35 : vector<1x16xf32> to vector<200x16xf32>
      %37 = arith.addf %33, %36 : vector<200x16xf32>
      %cst_24 = arith.constant 0.000000e+00 : f32
      %38 = vector.broadcast %cst_24 : f32 to vector<200x16xf32>
      %39 = arith.maximumf %37, %38 : vector<200x16xf32>
      %40 = vector.extract_strided_slice %39 {offsets = [0, 0], sizes = [8, 16], strides = [1, 1]} : vector<200x16xf32> to vector<8x16xf32>
      %41 = arith.truncf %40 : vector<8x16xf32> to vector<8x16xbf16>
      %c0_25 = arith.constant 0 : index
      %c0_26 = arith.constant 0 : index
      %42 = vector.load %arg18[%c0_25, %c0_26] : memref<8x400xbf16, #tpu.memory_space<vmem>>, vector<8x16xbf16>
      tpu.vector_store %arg18[%c0_25, %c0_26], %41 {strides = array<i32>} : memref<8x400xbf16, #tpu.memory_space<vmem>>, vector<8x16xbf16>,
      %43 = vector.extract_strided_slice %39 {offsets = [8, 0], sizes = [8, 16], strides = [1, 1]} : vector<200x16xf32> to vector<8x16xf32>
      %44 = arith.truncf %43 : vector<8x16xf32> to vector<8x16xbf16>
      %c0_27 = arith.constant 0 : index
      %c16_28 = arith.constant 16 : index
      %45 = vector.load %arg18[%c0_27, %c16_28] : memref<8x400xbf16, #tpu.memory_space<vmem>>, vector<8x16xbf16>
      tpu.vector_store %arg18[%c0_27, %c16_28], %44 {strides = array<i32>} : memref<8x400xbf16, #tpu.memory_space<vmem>>, vector<8x16xbf16>,
      %46 = vector.extract_strided_slice %39 {offsets = [16, 0], sizes = [8, 16], strides = [1, 1]} : vector<200x16xf32> to vector<8x16xf32>
      %47 = arith.truncf %46 : vector<8x16xf32> to vector<8x16xbf16>
      %c0_29 = arith.constant 0 : index
      %c32_30 = arith.constant 32 : index
      %48 = vector.load %arg18[%c0_29, %c32_30] : memref<8x400xbf16, #tpu.memory_space<vmem>>, vector<8x16xbf16>
      tpu.vector_store %arg18[%c0_29, %c32_30], %47 {strides = array<i32>} : memref<8x400xbf16, #tpu.memory_space<vmem>>, vector<8x16xbf16>,
      %49 = vector.extract_strided_slice %39 {offsets = [24, 0], sizes = [8, 16], strides = [1, 1]} : vector<200x16xf32> to vector<8x16xf32>
      %50 = arith.truncf %49 : vector<8x16xf32> to vector<8x16xbf16>
      %c0_31 = arith.constant 0 : index
      %c48_32 = arith.constant 48 : index
      %51 = vector.load %arg18[%c0_31, %c48_32] : memref<8x400xbf16, #tpu.memory_space<vmem>>, vector<8x16xbf16>
      tpu.vector_store %arg18[%c0_31, %c48_32], %50 {strides = array<i32>} : memref<8x400xbf16, #tpu.memory_space<vmem>>, vector<8x16xbf16>,
      %52 = vector.extract_strided_slice %39 {offsets = [32, 0], sizes = [8, 16], strides = [1, 1]} : vector<200x16xf32> to vector<8x16xf32>
      %53 = arith.truncf %52 : vector<8x16xf32> to vector<8x16xbf16>
      %c0_33 = arith.constant 0 : index
      %c64_34 = arith.constant 64 : index
      %54 = vector.load %arg18[%c0_33, %c64_34] : memref<8x400xbf16, #tpu.memory_space<vmem>>, vector<8x16xbf16>
      tpu.vector_store %arg18[%c0_33, %c64_34], %53 {strides = array<i32>} : memref<8x400xbf16, #tpu.memory_space<vmem>>, vector<8x16xbf16>,
      %55 = vector.extract_strided_slice %39 {offsets = [40, 0], sizes = [8, 16], strides = [1, 1]} : vector<200x16xf32> to vector<8x16xf32>
      %56 = arith.truncf %55 : vector<8x16xf32> to vector<8x16xbf16>
      %c0_35 = arith.constant 0 : index
      %c80_36 = arith.constant 80 : index
      %57 = vector.load %arg18[%c0_35, %c80_36] : memref<8x400xbf16, #tpu.memory_space<vmem>>, vector<8x16xbf16>
      tpu.vector_store %arg18[%c0_35, %c80_36], %56 {strides = array<i32>} : memref<8x400xbf16, #tpu.memory_space<vmem>>, vector<8x16xbf16>,
      %58 = vector.extract_strided_slice %39 {offsets = [48, 0], sizes = [8, 16], strides = [1, 1]} : vector<200x16xf32> to vector<8x16xf32>
      %59 = arith.truncf %58 : vector<8x16xf32> to vector<8x16xbf16>
      %c0_37 = arith.constant 0 : index
      %c96_38 = arith.constant 96 : index
      %60 = vector.load %arg18[%c0_37, %c96_38] : memref<8x400xbf16, #tpu.memory_space<vmem>>, vector<8x16xbf16>
      tpu.vector_store %arg18[%c0_37, %c96_38], %59 {strides = array<i32>} : memref<8x400xbf16, #tpu.memory_space<vmem>>, vector<8x16xbf16>,
      %61 = vector.extract_strided_slice %39 {offsets = [56, 0], sizes = [8, 16], strides = [1, 1]} : vector<200x16xf32> to vector<8x16xf32>
      %62 = arith.truncf %61 : vector<8x16xf32> to vector<8x16xbf16>
      %c0_39 = arith.constant 0 : index
      %c112_40 = arith.constant 112 : index
      %63 = vector.load %arg18[%c0_39, %c112_40] : memref<8x400xbf16, #tpu.memory_space<vmem>>, vector<8x16xbf16>
      tpu.vector_store %arg18[%c0_39, %c112_40], %62 {strides = array<i32>} : memref<8x400xbf16, #tpu.memory_space<vmem>>, vector<8x16xbf16>,
      %64 = vector.extract_strided_slice %39 {offsets = [64, 0], sizes = [8, 16], strides = [1, 1]} : vector<200x16xf32> to vector<8x16xf32>
      %65 = arith.truncf %64 : vector<8x16xf32> to vector<8x16xbf16>
      %c0_41 = arith.constant 0 : index
      %c128_42 = arith.constant 128 : index
      %66 = vector.load %arg18[%c0_41, %c128_42] : memref<8x400xbf16, #tpu.memory_space<vmem>>, vector<8x16xbf16>
      tpu.vector_store %arg18[%c0_41, %c128_42], %65 {strides = array<i32>} : memref<8x400xbf16, #tpu.memory_space<vmem>>, vector<8x16xbf16>,
      %67 = vector.extract_strided_slice %39 {offsets = [72, 0], sizes = [8, 16], strides = [1, 1]} : vector<200x16xf32> to vector<8x16xf32>
      %68 = arith.truncf %67 : vector<8x16xf32> to vector<8x16xbf16>
      %c0_43 = arith.constant 0 : index
      %c144_44 = arith.constant 144 : index
      %69 = vector.load %arg18[%c0_43, %c144_44] : memref<8x400xbf16, #tpu.memory_space<vmem>>, vector<8x16xbf16>
      tpu.vector_store %arg18[%c0_43, %c144_44], %68 {strides = array<i32>} : memref<8x400xbf16, #tpu.memory_space<vmem>>, vector<8x16xbf16>,
      %70 = vector.extract_strided_slice %39 {offsets = [80, 0], sizes = [8, 16], strides = [1, 1]} : vector<200x16xf32> to vector<8x16xf32>
      %71 = arith.truncf %70 : vector<8x16xf32> to vector<8x16xbf16>
      %c0_45 = arith.constant 0 : index
      %c160 = arith.constant 160 : index
      %72 = vector.load %arg18[%c0_45, %c160] : memref<8x400xbf16, #tpu.memory_space<vmem>>, vector<8x16xbf16>
      tpu.vector_store %arg18[%c0_45, %c160], %71 {strides = array<i32>} : memref<8x400xbf16, #tpu.memory_space<vmem>>, vector<8x16xbf16>,
      %73 = vector.extract_strided_slice %39 {offsets = [88, 0], sizes = [8, 16], strides = [1, 1]} : vector<200x16xf32> to vector<8x16xf32>
      %74 = arith.truncf %73 : vector<8x16xf32> to vector<8x16xbf16>
      %c0_46 = arith.constant 0 : index
      %c176 = arith.constant 176 : index
      %75 = vector.load %arg18[%c0_46, %c176] : memref<8x400xbf16, #tpu.memory_space<vmem>>, vector<8x16xbf16>
      tpu.vector_store %arg18[%c0_46, %c176], %74 {strides = array<i32>} : memref<8x400xbf16, #tpu.memory_space<vmem>>, vector<8x16xbf16>,
      %76 = vector.extract_strided_slice %39 {offsets = [96, 0], sizes = [8, 16], strides = [1, 1]} : vector<200x16xf32> to vector<8x16xf32>
      %77 = arith.truncf %76 : vector<8x16xf32> to vector<8x16xbf16>
      %c0_47 = arith.constant 0 : index
      %c192 = arith.constant 192 : index
      %78 = vector.load %arg18[%c0_47, %c192] : memref<8x400xbf16, #tpu.memory_space<vmem>>, vector<8x16xbf16>
      tpu.vector_store %arg18[%c0_47, %c192], %77 {strides = array<i32>} : memref<8x400xbf16, #tpu.memory_space<vmem>>, vector<8x16xbf16>,
      %79 = vector.extract_strided_slice %39 {offsets = [104, 0], sizes = [8, 16], strides = [1, 1]} : vector<200x16xf32> to vector<8x16xf32>
      %80 = arith.truncf %79 : vector<8x16xf32> to vector<8x16xbf16>
      %c0_48 = arith.constant 0 : index
      %c208 = arith.constant 208 : index
      %81 = vector.load %arg18[%c0_48, %c208] : memref<8x400xbf16, #tpu.memory_space<vmem>>, vector<8x16xbf16>
      tpu.vector_store %arg18[%c0_48, %c208], %80 {strides = array<i32>} : memref<8x400xbf16, #tpu.memory_space<vmem>>, vector<8x16xbf16>,
      %82 = vector.extract_strided_slice %39 {offsets = [112, 0], sizes = [8, 16], strides = [1, 1]} : vector<200x16xf32> to vector<8x16xf32>
      %83 = arith.truncf %82 : vector<8x16xf32> to vector<8x16xbf16>
      %c0_49 = arith.constant 0 : index
      %c224 = arith.constant 224 : index
      %84 = vector.load %arg18[%c0_49, %c224] : memref<8x400xbf16, #tpu.memory_space<vmem>>, vector<8x16xbf16>
      tpu.vector_store %arg18[%c0_49, %c224], %83 {strides = array<i32>} : memref<8x400xbf16, #tpu.memory_space<vmem>>, vector<8x16xbf16>,
      %85 = vector.extract_strided_slice %39 {offsets = [120, 0], sizes = [8, 16], strides = [1, 1]} : vector<200x16xf32> to vector<8x16xf32>
      %86 = arith.truncf %85 : vector<8x16xf32> to vector<8x16xbf16>
      %c0_50 = arith.constant 0 : index
      %c240 = arith.constant 240 : index
      %87 = vector.load %arg18[%c0_50, %c240] : memref<8x400xbf16, #tpu.memory_space<vmem>>, vector<8x16xbf16>
      tpu.vector_store %arg18[%c0_50, %c240], %86 {strides = array<i32>} : memref<8x400xbf16, #tpu.memory_space<vmem>>, vector<8x16xbf16>,
      %88 = vector.extract_strided_slice %39 {offsets = [128, 0], sizes = [8, 16], strides = [1, 1]} : vector<200x16xf32> to vector<8x16xf32>
      %89 = arith.truncf %88 : vector<8x16xf32> to vector<8x16xbf16>
      %c0_51 = arith.constant 0 : index
      %c256 = arith.constant 256 : index
      %90 = vector.load %arg18[%c0_51, %c256] : memref<8x400xbf16, #tpu.memory_space<vmem>>, vector<8x16xbf16>
      tpu.vector_store %arg18[%c0_51, %c256], %89 {strides = array<i32>} : memref<8x400xbf16, #tpu.memory_space<vmem>>, vector<8x16xbf16>,
      %91 = vector.extract_strided_slice %39 {offsets = [136, 0], sizes = [8, 16], strides = [1, 1]} : vector<200x16xf32> to vector<8x16xf32>
      %92 = arith.truncf %91 : vector<8x16xf32> to vector<8x16xbf16>
      %c0_52 = arith.constant 0 : index
      %c272 = arith.constant 272 : index
      %93 = vector.load %arg18[%c0_52, %c272] : memref<8x400xbf16, #tpu.memory_space<vmem>>, vector<8x16xbf16>
      tpu.vector_store %arg18[%c0_52, %c272], %92 {strides = array<i32>} : memref<8x400xbf16, #tpu.memory_space<vmem>>, vector<8x16xbf16>,
      %94 = vector.extract_strided_slice %39 {offsets = [144, 0], sizes = [8, 16], strides = [1, 1]} : vector<200x16xf32> to vector<8x16xf32>
      %95 = arith.truncf %94 : vector<8x16xf32> to vector<8x16xbf16>
      %c0_53 = arith.constant 0 : index
      %c288_54 = arith.constant 288 : index
      %96 = vector.load %arg18[%c0_53, %c288_54] : memref<8x400xbf16, #tpu.memory_space<vmem>>, vector<8x16xbf16>
      tpu.vector_store %arg18[%c0_53, %c288_54], %95 {strides = array<i32>} : memref<8x400xbf16, #tpu.memory_space<vmem>>, vector<8x16xbf16>,
      %97 = vector.extract_strided_slice %39 {offsets = [152, 0], sizes = [8, 16], strides = [1, 1]} : vector<200x16xf32> to vector<8x16xf32>
      %98 = arith.truncf %97 : vector<8x16xf32> to vector<8x16xbf16>
      %c0_55 = arith.constant 0 : index
      %c304 = arith.constant 304 : index
      %99 = vector.load %arg18[%c0_55, %c304] : memref<8x400xbf16, #tpu.memory_space<vmem>>, vector<8x16xbf16>
      tpu.vector_store %arg18[%c0_55, %c304], %98 {strides = array<i32>} : memref<8x400xbf16, #tpu.memory_space<vmem>>, vector<8x16xbf16>,
      %100 = vector.extract_strided_slice %39 {offsets = [160, 0], sizes = [8, 16], strides = [1, 1]} : vector<200x16xf32> to vector<8x16xf32>
      %101 = arith.truncf %100 : vector<8x16xf32> to vector<8x16xbf16>
      %c0_56 = arith.constant 0 : index
      %c320 = arith.constant 320 : index
      %102 = vector.load %arg18[%c0_56, %c320] : memref<8x400xbf16, #tpu.memory_space<vmem>>, vector<8x16xbf16>
      tpu.vector_store %arg18[%c0_56, %c320], %101 {strides = array<i32>} : memref<8x400xbf16, #tpu.memory_space<vmem>>, vector<8x16xbf16>,
      %103 = vector.extract_strided_slice %39 {offsets = [168, 0], sizes = [8, 16], strides = [1, 1]} : vector<200x16xf32> to vector<8x16xf32>
      %104 = arith.truncf %103 : vector<8x16xf32> to vector<8x16xbf16>
      %c0_57 = arith.constant 0 : index
      %c336 = arith.constant 336 : index
      %105 = vector.load %arg18[%c0_57, %c336] : memref<8x400xbf16, #tpu.memory_space<vmem>>, vector<8x16xbf16>
      tpu.vector_store %arg18[%c0_57, %c336], %104 {strides = array<i32>} : memref<8x400xbf16, #tpu.memory_space<vmem>>, vector<8x16xbf16>,
      %106 = vector.extract_strided_slice %39 {offsets = [176, 0], sizes = [8, 16], strides = [1, 1]} : vector<200x16xf32> to vector<8x16xf32>
      %107 = arith.truncf %106 : vector<8x16xf32> to vector<8x16xbf16>
      %c0_58 = arith.constant 0 : index
      %c352 = arith.constant 352 : index
      %108 = vector.load %arg18[%c0_58, %c352] : memref<8x400xbf16, #tpu.memory_space<vmem>>, vector<8x16xbf16>
      tpu.vector_store %arg18[%c0_58, %c352], %107 {strides = array<i32>} : memref<8x400xbf16, #tpu.memory_space<vmem>>, vector<8x16xbf16>,
      %109 = vector.extract_strided_slice %39 {offsets = [184, 0], sizes = [8, 16], strides = [1, 1]} : vector<200x16xf32> to vector<8x16xf32>
      %110 = arith.truncf %109 : vector<8x16xf32> to vector<8x16xbf16>
      %c0_59 = arith.constant 0 : index
      %c368 = arith.constant 368 : index
      %111 = vector.load %arg18[%c0_59, %c368] : memref<8x400xbf16, #tpu.memory_space<vmem>>, vector<8x16xbf16>
      tpu.vector_store %arg18[%c0_59, %c368], %110 {strides = array<i32>} : memref<8x400xbf16, #tpu.memory_space<vmem>>, vector<8x16xbf16>,
      %112 = vector.extract_strided_slice %39 {offsets = [192, 0], sizes = [8, 16], strides = [1, 1]} : vector<200x16xf32> to vector<8x16xf32>
      %113 = arith.truncf %112 : vector<8x16xf32> to vector<8x16xbf16>
      %c0_60 = arith.constant 0 : index
      %c384 = arith.constant 384 : index
      %114 = vector.load %arg18[%c0_60, %c384] : memref<8x400xbf16, #tpu.memory_space<vmem>>, vector<8x16xbf16>
      tpu.vector_store %arg18[%c0_60, %c384], %113 {strides = array<i32>} : memref<8x400xbf16, #tpu.memory_space<vmem>>, vector<8x16xbf16>,
      %c0_61 = arith.constant 0 : index
      %c0_62 = arith.constant 0 : index
      %115 = vector.load %arg18[%c0_61, %c0_62] : memref<8x400xbf16, #tpu.memory_space<vmem>>, vector<8x400xbf16>
      %c0_63 = arith.constant 0 : index
      %c0_64 = arith.constant 0 : index
      %c0_65 = arith.constant 0 : index
      %116 = vector.load %arg6[%c0_63, %c0_64, %c0_65] : memref<1x400x256xbf16, #tpu.memory_space<vmem>>, vector<1x400x256xbf16>
      %117 = vector.shape_cast %116 : vector<1x400x256xbf16> to vector<400x256xbf16>
      %cst_66 = arith.constant dense<0.000000e+00> : vector<8x256xf32>
      %118 = tpu.matmul %115, %117, %cst_66 {dimension_numbers = #tpu.dot_dimension_numbers<[1], [0], [0], [1], [0, 0, 1, 1], [], []>} : vector<8x400xbf16>, vector<400x256xbf16>, vector<8x256xf32> -> vector<8x256xf32>
      %c0_67 = arith.constant 0 : index
      %c0_68 = arith.constant 0 : index
      %c0_69 = arith.constant 0 : index
      %119 = vector.load %arg7[%c0_67, %c0_68, %c0_69] : memref<1x1x256xf32, #tpu.memory_space<vmem>>, vector<1x1x256xf32>
      %120 = vector.shape_cast %119 : vector<1x1x256xf32> to vector<1x256xf32>
      %121 = vector.broadcast %120 : vector<1x256xf32> to vector<8x256xf32>
      %122 = arith.addf %118, %121 : vector<8x256xf32>
      %cst_70 = arith.constant dense<0.000000e+00> : vector<8xf32>
      %123 = vector.multi_reduction <add>, %122, %cst_70 [1] : vector<8x256xf32> to vector<8xf32>
      %124 = vector.shape_cast %123 : vector<8xf32> to vector<8x1xf32>
      %cst_71 = arith.constant 2.560000e+02 : f32
      %125 = vector.broadcast %cst_71 : f32 to vector<8x1xf32>
      %126 = arith.divf %124, %125 : vector<8x1xf32>
      %127 = vector.broadcast %126 : vector<8x1xf32> to vector<8x256xf32>
      %128 = arith.subf %122, %127 : vector<8x256xf32>
      %129 = arith.mulf %128, %128 : vector<8x256xf32>
      %cst_72 = arith.constant dense<0.000000e+00> : vector<8xf32>
      %130 = vector.multi_reduction <add>, %129, %cst_72 [1] : vector<8x256xf32> to vector<8xf32>
      %131 = vector.shape_cast %130 : vector<8xf32> to vector<8x1xf32>
      %cst_73 = arith.constant 2.560000e+02 : f32
      %132 = vector.broadcast %cst_73 : f32 to vector<8x1xf32>
      %133 = arith.divf %131, %132 : vector<8x1xf32>
      %134 = vector.broadcast %126 : vector<8x1xf32> to vector<8x256xf32>
      %135 = arith.subf %122, %134 : vector<8x256xf32>
      %cst_74 = arith.constant 9.99999974E-6 : f32
      %136 = vector.broadcast %cst_74 : f32 to vector<8x1xf32>
      %137 = arith.addf %133, %136 : vector<8x1xf32>
      %138 = math.rsqrt %137 : vector<8x1xf32>
      %139 = vector.broadcast %138 : vector<8x1xf32> to vector<8x256xf32>
      %140 = arith.mulf %135, %139 : vector<8x256xf32>
      %c0_75 = arith.constant 0 : index
      %c0_76 = arith.constant 0 : index
      %c0_77 = arith.constant 0 : index
      %141 = vector.load %arg8[%c0_75, %c0_76, %c0_77] : memref<1x1x256xf32, #tpu.memory_space<vmem>>, vector<1x1x256xf32>
      %142 = vector.shape_cast %141 : vector<1x1x256xf32> to vector<1x256xf32>
      %143 = vector.broadcast %142 : vector<1x256xf32> to vector<8x256xf32>
      %144 = arith.mulf %140, %143 : vector<8x256xf32>
      %c0_78 = arith.constant 0 : index
      %c0_79 = arith.constant 0 : index
      %c0_80 = arith.constant 0 : index
      %145 = vector.load %arg9[%c0_78, %c0_79, %c0_80] : memref<1x1x256xf32, #tpu.memory_space<vmem>>, vector<1x1x256xf32>
      %146 = vector.shape_cast %145 : vector<1x1x256xf32> to vector<1x256xf32>
      %147 = vector.broadcast %146 : vector<1x256xf32> to vector<8x256xf32>
      %148 = arith.addf %144, %147 : vector<8x256xf32>
      %149 = math.tanh %148 : vector<8x256xf32>
      %150 = arith.index_cast %arg0 : i32 to index
      %c0_81 = arith.constant 0 : index
      %c0_82 = arith.constant 0 : index
      %151 = vector.load %arg16[%150, %c0_81, %c0_82] : memref<2x8x256xf32, #tpu.memory_space<vmem>>, vector<1x8x256xf32>
      %152 = vector.shape_cast %151 : vector<1x8x256xf32> to vector<8x256xf32>
      %153 = vector.shape_cast %149 : vector<8x256xf32> to vector<1x8x256xf32>
      tpu.vector_store %arg16[%150, %c0_81, %c0_82], %153 {strides = array<i32>} : memref<2x8x256xf32, #tpu.memory_space<vmem>>, vector<1x8x256xf32>,
    } else {
    }
    %c2_i32_2 = arith.constant 2 : i32
    %6 = arith.cmpi eq, %arg0, %c2_i32_2 : i32
    %7 = arith.extui %6 : i1 to i32
    %c0_i32_3 = arith.constant 0 : i32
    %8 = arith.cmpi ne, %7, %c0_i32_3 : i32
    scf.if %8 {
      %c0 = arith.constant 0 : index
      %c0_4 = arith.constant 0 : index
      %c0_5 = arith.constant 0 : index
      %9 = vector.load %arg16[%c0, %c0_4, %c0_5] : memref<2x8x256xf32, #tpu.memory_space<vmem>>, vector<1x8x256xf32>
      %10 = vector.shape_cast %9 : vector<1x8x256xf32> to vector<8x256xf32>
      %c1 = arith.constant 1 : index
      %c0_6 = arith.constant 0 : index
      %c0_7 = arith.constant 0 : index
      %11 = vector.load %arg16[%c1, %c0_6, %c0_7] : memref<2x8x256xf32, #tpu.memory_space<vmem>>, vector<1x8x256xf32>
      %12 = vector.shape_cast %11 : vector<1x8x256xf32> to vector<8x256xf32>
      %13 = arith.truncf %10 : vector<8x256xf32> to vector<8x256xbf16>
      %c0_8 = arith.constant 0 : index
      %c0_9 = arith.constant 0 : index
      %14 = vector.load %arg10[%c0_8, %c0_9] : memref<256x256xbf16, #tpu.memory_space<vmem>>, vector<256x256xbf16>
      %cst = arith.constant dense<0.000000e+00> : vector<8x256xf32>
      %15 = tpu.matmul %13, %14, %cst {dimension_numbers = #tpu.dot_dimension_numbers<[1], [0], [0], [1], [0, 0, 1, 1], [], []>} : vector<8x256xbf16>, vector<256x256xbf16>, vector<8x256xf32> -> vector<8x256xf32>
      %c0_10 = arith.constant 0 : index
      %c0_11 = arith.constant 0 : index
      %16 = vector.load %arg11[%c0_10, %c0_11] : memref<1x256xf32, #tpu.memory_space<vmem>>, vector<1x256xf32>
      %17 = vector.broadcast %16 : vector<1x256xf32> to vector<8x256xf32>
      %18 = arith.addf %15, %17 : vector<8x256xf32>
      %cst_12 = arith.constant 0.000000e+00 : f32
      %19 = vector.broadcast %cst_12 : f32 to vector<8x256xf32>
      %20 = arith.maximumf %18, %19 : vector<8x256xf32>
      %21 = arith.truncf %20 : vector<8x256xf32> to vector<8x256xbf16>
      %c0_13 = arith.constant 0 : index
      %c0_14 = arith.constant 0 : index
      %22 = vector.load %arg12[%c0_13, %c0_14] : memref<256x256xbf16, #tpu.memory_space<vmem>>, vector<256x256xbf16>
      %cst_15 = arith.constant dense<0.000000e+00> : vector<8x256xf32>
      %23 = tpu.matmul %21, %22, %cst_15 {dimension_numbers = #tpu.dot_dimension_numbers<[1], [0], [0], [1], [0, 0, 1, 1], [], []>} : vector<8x256xbf16>, vector<256x256xbf16>, vector<8x256xf32> -> vector<8x256xf32>
      %c0_16 = arith.constant 0 : index
      %c0_17 = arith.constant 0 : index
      %24 = vector.load %arg13[%c0_16, %c0_17] : memref<1x256xf32, #tpu.memory_space<vmem>>, vector<1x256xf32>
      %25 = vector.broadcast %24 : vector<1x256xf32> to vector<8x256xf32>
      %26 = arith.addf %23, %25 : vector<8x256xf32>
      %27 = arith.addf %26, %10 : vector<8x256xf32>
      %28 = arith.truncf %27 : vector<8x256xf32> to vector<8x256xbf16>
      %c0_18 = arith.constant 0 : index
      %c0_19 = arith.constant 0 : index
      %29 = vector.load %arg14[%c0_18, %c0_19] : memref<256x256xbf16, #tpu.memory_space<vmem>>, vector<256x256xbf16>
      %cst_20 = arith.constant dense<0.000000e+00> : vector<8x256xf32>
      %30 = tpu.matmul %28, %29, %cst_20 {dimension_numbers = #tpu.dot_dimension_numbers<[1], [0], [0], [1], [0, 0, 1, 1], [], []>} : vector<8x256xbf16>, vector<256x256xbf16>, vector<8x256xf32> -> vector<8x256xf32>
      %cst_21 = arith.constant dense<0.000000e+00> : vector<8x8xf32>
      %31 = tpu.matmul %30, %12, %cst_21 {dimension_numbers = #tpu.dot_dimension_numbers<[1], [1], [0], [0], [0, 0, 1, 0], [], []>} : vector<8x256xf32>, vector<8x256xf32>, vector<8x8xf32> -> vector<8x8xf32>
      %cst_22 = arith.constant dense<0xFF800000> : vector<8xf32>
      %32 = vector.multi_reduction <maximumf>, %31, %cst_22 [1] : vector<8x8xf32> to vector<8xf32>
      %33 = vector.shape_cast %32 : vector<8xf32> to vector<8x1xf32>
      %34 = vector.broadcast %33 : vector<8x1xf32> to vector<8x8xf32>
      %35 = arith.subf %31, %34 : vector<8x8xf32>
      %c0_23 = arith.constant 0 : index
      %c0_24 = arith.constant 0 : index
      %36 = vector.load %arg15[%c0_23, %c0_24] : memref<8x8xf32, #tpu.memory_space<vmem>>, vector<8x8xf32>
      tpu.vector_store %arg15[%c0_23, %c0_24], %35 {strides = array<i32>} : memref<8x8xf32, #tpu.memory_space<vmem>>, vector<8x8xf32>,
    } else {
    }
    return
  }
  func.func @transform_0(%arg0: i32) -> (i32, i32, i32) {
    %c1_i32 = arith.constant 1 : i32
    %0 = arith.minsi %arg0, %c1_i32 : i32
    %c0_i32 = arith.constant 0 : i32
    %c0_i32_0 = arith.constant 0 : i32
    %c0_i32_1 = arith.constant 0 : i32
    return %0, %c0_i32, %c0_i32_0 : i32, i32, i32
  }
  func.func @transform_1(%arg0: i32) -> (i32, i32, i32) {
    %c1_i32 = arith.constant 1 : i32
    %0 = arith.minsi %arg0, %c1_i32 : i32
    %c0_i32 = arith.constant 0 : i32
    %c0_i32_0 = arith.constant 0 : i32
    %c0_i32_1 = arith.constant 0 : i32
    return %0, %c0_i32, %c0_i32_0 : i32, i32, i32
  }
  func.func @transform_2(%arg0: i32) -> (i32, i32, i32) {
    %c1_i32 = arith.constant 1 : i32
    %0 = arith.minsi %arg0, %c1_i32 : i32
    %c0_i32 = arith.constant 0 : i32
    %c0_i32_0 = arith.constant 0 : i32
    %c0_i32_1 = arith.constant 0 : i32
    return %0, %c0_i32, %c0_i32_0 : i32, i32, i32
  }
  func.func @transform_3(%arg0: i32) -> (i32, i32, i32) {
    %c1_i32 = arith.constant 1 : i32
    %0 = arith.minsi %arg0, %c1_i32 : i32
    %c0_i32 = arith.constant 0 : i32
    %c0_i32_0 = arith.constant 0 : i32
    %c0_i32_1 = arith.constant 0 : i32
    return %0, %c0_i32, %c0_i32_0 : i32, i32, i32
  }
  func.func @transform_4(%arg0: i32) -> (i32, i32, i32) {
    %c1_i32 = arith.constant 1 : i32
    %0 = arith.minsi %arg0, %c1_i32 : i32
    %c0_i32 = arith.constant 0 : i32
    %c0_i32_0 = arith.constant 0 : i32
    %c0_i32_1 = arith.constant 0 : i32
    return %0, %c0_i32, %c0_i32_0 : i32, i32, i32
  }
  func.func @transform_5(%arg0: i32) -> (i32, i32, i32) {
    %c1_i32 = arith.constant 1 : i32
    %0 = arith.minsi %arg0, %c1_i32 : i32
    %c0_i32 = arith.constant 0 : i32
    %c0_i32_0 = arith.constant 0 : i32
    %c0_i32_1 = arith.constant 0 : i32
    return %0, %c0_i32, %c0_i32_0 : i32, i32, i32
  }
  func.func @transform_6(%arg0: i32) -> (i32, i32, i32) {
    %c1_i32 = arith.constant 1 : i32
    %0 = arith.minsi %arg0, %c1_i32 : i32
    %c0_i32 = arith.constant 0 : i32
    %c0_i32_0 = arith.constant 0 : i32
    %c0_i32_1 = arith.constant 0 : i32
    return %0, %c0_i32, %c0_i32_0 : i32, i32, i32
  }
  func.func @transform_7(%arg0: i32) -> (i32, i32, i32) {
    %c1_i32 = arith.constant 1 : i32
    %0 = arith.minsi %arg0, %c1_i32 : i32
    %c0_i32 = arith.constant 0 : i32
    %c0_i32_0 = arith.constant 0 : i32
    %c0_i32_1 = arith.constant 0 : i32
    return %0, %c0_i32, %c0_i32_0 : i32, i32, i32
  }
  func.func @transform_8(%arg0: i32) -> (i32, i32, i32) {
    %c1_i32 = arith.constant 1 : i32
    %0 = arith.minsi %arg0, %c1_i32 : i32
    %c0_i32 = arith.constant 0 : i32
    %c0_i32_0 = arith.constant 0 : i32
    %c0_i32_1 = arith.constant 0 : i32
    return %0, %c0_i32, %c0_i32_0 : i32, i32, i32
  }
  func.func @transform_9(%arg0: i32) -> (i32, i32) {
    %c0_i32 = arith.constant 0 : i32
    %c0_i32_0 = arith.constant 0 : i32
    %c0_i32_1 = arith.constant 0 : i32
    return %c0_i32, %c0_i32_0 : i32, i32
  }
  func.func @transform_10(%arg0: i32) -> (i32, i32) {
    %c0_i32 = arith.constant 0 : i32
    %c0_i32_0 = arith.constant 0 : i32
    %c0_i32_1 = arith.constant 0 : i32
    return %c0_i32, %c0_i32_0 : i32, i32
  }
  func.func @transform_11(%arg0: i32) -> (i32, i32) {
    %c0_i32 = arith.constant 0 : i32
    %c0_i32_0 = arith.constant 0 : i32
    %c0_i32_1 = arith.constant 0 : i32
    return %c0_i32, %c0_i32_0 : i32, i32
  }
  func.func @transform_12(%arg0: i32) -> (i32, i32) {
    %c0_i32 = arith.constant 0 : i32
    %c0_i32_0 = arith.constant 0 : i32
    %c0_i32_1 = arith.constant 0 : i32
    return %c0_i32, %c0_i32_0 : i32, i32
  }
  func.func @transform_13(%arg0: i32) -> (i32, i32) {
    %c0_i32 = arith.constant 0 : i32
    %c0_i32_0 = arith.constant 0 : i32
    %c0_i32_1 = arith.constant 0 : i32
    return %c0_i32, %c0_i32_0 : i32, i32
  }
  func.func @transform_14(%arg0: i32) -> (i32, i32) {
    %c0_i32 = arith.constant 0 : i32
    %c0_i32_0 = arith.constant 0 : i32
    %c0_i32_1 = arith.constant 0 : i32
    return %c0_i32, %c0_i32_0 : i32, i32
  }
}

</mosaic_0001>

<llo_original>
// kernel: curl_atc_forward.1
$region0: #{curl_atc_forward.1}
  #allocation0 [shape = 'u32[]', space=smem, size = 0x4, offset = 0x4, fixed_abs, tag = 'smem constant byte address 0x4 - core index']
  #allocation1 [shape = 'u32[72,128]{1,0:T(1,128)}', space=vmem, size = 0x9000, scoped, tag = 'internal scratch']
  #allocation2 [shape = 'f32[2,8,256]{2,1,0:T(8,128)}', space=vmem, size = 0x4000, scoped, tag = 'scratch operand']
  #allocation3 [shape = 'bf16[324,144]{1,0:T(8,128)(2,1)}', space=vmem, size = 0x29000, scoped, tag = 'scratch operand']
  #allocation4 [shape = 'bf16[8,400]{1,0:T(8,128)(2,1)}', space=vmem, size = 0x2000, scoped, tag = 'scratch operand']
  %s0 = inlined_call_operand.vmem [shape: bf16[2,200,324], index: 0, kind: input, shape index: {}]
  %s1 = inlined_call_operand.vmem [shape: bf16[2,36,16], index: 1, kind: input, shape index: {}]
  %s2 = inlined_call_operand.vmem [shape: f32[2,1,144], index: 2, kind: input, shape index: {}]
  %s3 = inlined_call_operand.vmem [shape: bf16[2,144,16], index: 3, kind: input, shape index: {}]
  %s4 = inlined_call_operand.vmem [shape: f32[2,1,16], index: 4, kind: input, shape index: {}]
  %s5 = inlined_call_operand.vmem [shape: bf16[2,400,256], index: 5, kind: input, shape index: {}]
  %s6 = inlined_call_operand.vmem [shape: f32[2,1,256], index: 6, kind: input, shape index: {}]
  %s7 = inlined_call_operand.vmem [shape: f32[2,1,256], index: 7, kind: input, shape index: {}]
  %s8 = inlined_call_operand.vmem [shape: f32[2,1,256], index: 8, kind: input, shape index: {}]
  %s9 = inlined_call_operand.vmem [shape: bf16[256,256], index: 9, kind: input, shape index: {}]
  %s10 = inlined_call_operand.vmem [shape: f32[1,256], index: 10, kind: input, shape index: {}]
  %s11 = inlined_call_operand.vmem [shape: bf16[256,256], index: 11, kind: input, shape index: {}]
  %s12 = inlined_call_operand.vmem [shape: f32[1,256], index: 12, kind: input, shape index: {}]
  %s13 = inlined_call_operand.vmem [shape: bf16[256,256], index: 13, kind: input, shape index: {}]
  %s14 = inlined_call_operand.hbm [shape: f32[8,8], index: 14, kind: output, shape index: {}]
  %s15 = sld [smem:[#allocation0]]
  $region101: #{curl_atc_forward.1} parent=0
    _
  %s17 = ssub.s32 1, %s15
  %s18 = scalar_select 0, %s17, %s15
  $region1: #{curl_atc_forward.1} parent=0
    #allocation5 [shape = 'u8[4096]{0}', space=vmem, size = 0x1000, scoped, tag = 'output window, operand 0, single buffered']
    #allocation6 [shape = 's32[2]{0}', space=sflag, size = 0x8, scoped, tag = 'scoped memory for curl_atc_forward.1']
    %19 = vsyncpa [#allocation6], 0
    loop: start=0, step=1, limit=5
    $region2: #{curl_atc_forward.1} parent=1 // loop_pre_header
      _
    $region3: #{curl_atc_forward.1} parent=1 // loop_header
      %s21 = sphi 0, %s25
      %p22 = scmp.ge.s32.totalorder %s21, 5
      %s35 = sphi 0, %s37
      %s38 = sphi 0, %s35
      %s39 = sphi 0, %s38
      %s55 = sphi 0, %s39
      %s65 = sphi 0, %s67
      %s68 = sphi 0, %s65
      %s69 = sphi 0, %s68
      %s85 = sphi 0, %s69
      %s95 = sphi 0, %s97
      %s98 = sphi 0, %s95
      %s99 = sphi 0, %s98
      %s115 = sphi 0, %s99
      %s125 = sphi 0, %s127
      %s128 = sphi 0, %s125
      %s129 = sphi 0, %s128
      %s145 = sphi 0, %s129
      %s155 = sphi 0, %s157
      %s158 = sphi 0, %s155
      %s159 = sphi 0, %s158
      %s175 = sphi 0, %s159
      %s185 = sphi 0, %s187
      %s188 = sphi 0, %s185
      %s189 = sphi 0, %s188
      %s205 = sphi 0, %s189
      %s215 = sphi 0, %s217
      %s218 = sphi 0, %s215
      %s219 = sphi 0, %s218
      %s235 = sphi 0, %s219
      %s245 = sphi 0, %s247
      %s248 = sphi 0, %s245
      %s249 = sphi 0, %s248
      %s265 = sphi 0, %s249
      %s275 = sphi 0, %s277
      %s278 = sphi 0, %s275
      %s279 = sphi 0, %s278
      %s295 = sphi 0, %s279
      %s299 = sphi 0, %s299
      %s301 = sphi 0, %s299
      %s302 = sphi 0, %s301
      %s316 = sphi 0, %s302
      %s320 = sphi 0, %s320
      %s322 = sphi 0, %s320
      %s323 = sphi 0, %s322
      %s337 = sphi 0, %s323
      %s341 = sphi 0, %s341
      %s343 = sphi 0, %s341
      %s344 = sphi 0, %s343
      %s358 = sphi 0, %s344
      %s362 = sphi 0, %s362
      %s364 = sphi 0, %s362
      %s365 = sphi 0, %s364
      %s379 = sphi 0, %s365
      %s383 = sphi 0, %s383
      %s385 = sphi 0, %s383
      %s386 = sphi 0, %s385
      %s400 = sphi 0, %s386
      %s404 = sphi 0, %s404
      %s406 = sphi 0, %s404
      %s407 = sphi 0, %s406
      %s421 = sphi 0, %s407
    $region4: #{curl_atc_forward.1} parent=1 // loop_header_branch
      %24 = sbr.rel (%p22) target = $region8
    $region5: #{curl_atc_forward.1} parent=1 // loop_body
      %s26 = ssub.s32 %s21, 1
      %s27 = ssub.s32 %s21, 2
      %s28 = sadd.s32 %s21, 1
      %p29 = scmp.lt.s32.totalorder %s21, 1
      %s30 = scalar_select %p29, %s21, 1
      %p31 = scmp.lt.s32.totalorder %s28, 1
      %s32 = scalar_select %p31, %s28, 1
      %s33 = ssub.s32 %s30, %s32
      %p34 = scmp.eq.s32.totalorder %s33, 0
      %s36 = sadd.s32 %s35, 1
      %s37 = scalar_select %p34, %s35, %s36
      %p40 = pneg %p34
      %p41 = scmp.eq.s32.totalorder %s21, 2
      %p42 = por %p40, %p41
      %p43 = scmp.ne.s32.totalorder %s35, %s38
      %p44 = scmp.eq.s32.totalorder %s21, 0
      %p45 = por %p43, %p44
      %p46 = scmp.ne.s32.totalorder %s35, %s38
      %p47 = scmp.eq.s32.totalorder %s26, 2
      %p48 = por %p46, %p47
      %p49 = scmp.ne.s32.totalorder %s38, %s39
      %p50 = scmp.eq.s32.totalorder %s26, 0
      %p51 = por %p49, %p50
      %p52 = scmp.ne.s32.totalorder %s38, %s39
      %p53 = scmp.eq.s32.totalorder %s27, 2
      %p54 = por %p52, %p53
      %p56 = scmp.ne.s32.totalorder %s39, %s55
      %p57 = scmp.eq.s32.totalorder %s27, 0
      %p58 = por %p56, %p57
      %p59 = scmp.lt.s32.totalorder %s21, 1
      %s60 = scalar_select %p59, %s21, 1
      %p61 = scmp.lt.s32.totalorder %s28, 1
      %s62 = scalar_select %p61, %s28, 1
      %s63 = ssub.s32 %s60, %s62
      %p64 = scmp.eq.s32.totalorder %s63, 0
      %s66 = sadd.s32 %s65, 1
      %s67 = scalar_select %p64, %s65, %s66
      %p70 = pneg %p64
      %p71 = scmp.eq.s32.totalorder %s21, 2
      %p72 = por %p70, %p71
      %p73 = scmp.ne.s32.totalorder %s65, %s68
      %p74 = scmp.eq.s32.totalorder %s21, 0
      %p75 = por %p73, %p74
      %p76 = scmp.ne.s32.totalorder %s65, %s68
      %p77 = scmp.eq.s32.totalorder %s26, 2
      %p78 = por %p76, %p77
      %p79 = scmp.ne.s32.totalorder %s68, %s69
      %p80 = scmp.eq.s32.totalorder %s26, 0
      %p81 = por %p79, %p80
      %p82 = scmp.ne.s32.totalorder %s68, %s69
      %p83 = scmp.eq.s32.totalorder %s27, 2
      %p84 = por %p82, %p83
      %p86 = scmp.ne.s32.totalorder %s69, %s85
      %p87 = scmp.eq.s32.totalorder %s27, 0
      %p88 = por %p86, %p87
      %p89 = scmp.lt.s32.totalorder %s21, 1
      %s90 = scalar_select %p89, %s21, 1
      %p91 = scmp.lt.s32.totalorder %s28, 1
      %s92 = scalar_select %p91, %s28, 1
      %s93 = ssub.s32 %s90, %s92
      %p94 = scmp.eq.s32.totalorder %s93, 0
      %s96 = sadd.s32 %s95, 1
      %s97 = scalar_select %p94, %s95, %s96
      %p100 = pneg %p94
      %p101 = scmp.eq.s32.totalorder %s21, 2
      %p102 = por %p100, %p101
      %p103 = scmp.ne.s32.totalorder %s95, %s98
      %p104 = scmp.eq.s32.totalorder %s21, 0
      %p105 = por %p103, %p104
      %p106 = scmp.ne.s32.totalorder %s95, %s98
      %p107 = scmp.eq.s32.totalorder %s26, 2
      %p108 = por %p106, %p107
      %p109 = scmp.ne.s32.totalorder %s98, %s99
      %p110 = scmp.eq.s32.totalorder %s26, 0
      %p111 = por %p109, %p110
      %p112 = scmp.ne.s32.totalorder %s98, %s99
      %p113 = scmp.eq.s32.totalorder %s27, 2
      %p114 = por %p112, %p113
      %p116 = scmp.ne.s32.totalorder %s99, %s115
      %p117 = scmp.eq.s32.totalorder %s27, 0
      %p118 = por %p116, %p117
      %p119 = scmp.lt.s32.totalorder %s21, 1
      %s120 = scalar_select %p119, %s21, 1
      %p121 = scmp.lt.s32.totalorder %s28, 1
      %s122 = scalar_select %p121, %s28, 1
      %s123 = ssub.s32 %s120, %s122
      %p124 = scmp.eq.s32.totalorder %s123, 0
      %s126 = sadd.s32 %s125, 1
      %s127 = scalar_select %p124, %s125, %s126
      %p130 = pneg %p124
      %p131 = scmp.eq.s32.totalorder %s21, 2
      %p132 = por %p130, %p131
      %p133 = scmp.ne.s32.totalorder %s125, %s128
      %p134 = scmp.eq.s32.totalorder %s21, 0
      %p135 = por %p133, %p134
      %p136 = scmp.ne.s32.totalorder %s125, %s128
      %p137 = scmp.eq.s32.totalorder %s26, 2
      %p138 = por %p136, %p137
      %p139 = scmp.ne.s32.totalorder %s128, %s129
      %p140 = scmp.eq.s32.totalorder %s26, 0
      %p141 = por %p139, %p140
      %p142 = scmp.ne.s32.totalorder %s128, %s129
      %p143 = scmp.eq.s32.totalorder %s27, 2
      %p144 = por %p142, %p143
      %p146 = scmp.ne.s32.totalorder %s129, %s145
      %p147 = scmp.eq.s32.totalorder %s27, 0
      %p148 = por %p146, %p147
      %p149 = scmp.lt.s32.totalorder %s21, 1
      %s150 = scalar_select %p149, %s21, 1
      %p151 = scmp.lt.s32.totalorder %s28, 1
      %s152 = scalar_select %p151, %s28, 1
      %s153 = ssub.s32 %s150, %s152
      %p154 = scmp.eq.s32.totalorder %s153, 0
      %s156 = sadd.s32 %s155, 1
      %s157 = scalar_select %p154, %s155, %s156
      %p160 = pneg %p154
      %p161 = scmp.eq.s32.totalorder %s21, 2
      %p162 = por %p160, %p161
      %p163 = scmp.ne.s32.totalorder %s155, %s158
      %p164 = scmp.eq.s32.totalorder %s21, 0
      %p165 = por %p163, %p164
      %p166 = scmp.ne.s32.totalorder %s155, %s158
      %p167 = scmp.eq.s32.totalorder %s26, 2
      %p168 = por %p166, %p167
      %p169 = scmp.ne.s32.totalorder %s158, %s159
      %p170 = scmp.eq.s32.totalorder %s26, 0
      %p171 = por %p169, %p170
      %p172 = scmp.ne.s32.totalorder %s158, %s159
      %p173 = scmp.eq.s32.totalorder %s27, 2
      %p174 = por %p172, %p173
      %p176 = scmp.ne.s32.totalorder %s159, %s175
      %p177 = scmp.eq.s32.totalorder %s27, 0
      %p178 = por %p176, %p177
      %p179 = scmp.lt.s32.totalorder %s21, 1
      %s180 = scalar_select %p179, %s21, 1
      %p181 = scmp.lt.s32.totalorder %s28, 1
      %s182 = scalar_select %p181, %s28, 1
      %s183 = ssub.s32 %s180, %s182
      %p184 = scmp.eq.s32.totalorder %s183, 0
      %s186 = sadd.s32 %s185, 1
      %s187 = scalar_select %p184, %s185, %s186
      %p190 = pneg %p184
      %p191 = scmp.eq.s32.totalorder %s21, 2
      %p192 = por %p190, %p191
      %p193 = scmp.ne.s32.totalorder %s185, %s188
      %p194 = scmp.eq.s32.totalorder %s21, 0
      %p195 = por %p193, %p194
      %p196 = scmp.ne.s32.totalorder %s185, %s188
      %p197 = scmp.eq.s32.totalorder %s26, 2
      %p198 = por %p196, %p197
      %p199 = scmp.ne.s32.totalorder %s188, %s189
      %p200 = scmp.eq.s32.totalorder %s26, 0
      %p201 = por %p199, %p200
      %p202 = scmp.ne.s32.totalorder %s188, %s189
      %p203 = scmp.eq.s32.totalorder %s27, 2
      %p204 = por %p202, %p203
      %p206 = scmp.ne.s32.totalorder %s189, %s205
      %p207 = scmp.eq.s32.totalorder %s27, 0
      %p208 = por %p206, %p207
      %p209 = scmp.lt.s32.totalorder %s21, 1
      %s210 = scalar_select %p209, %s21, 1
      %p211 = scmp.lt.s32.totalorder %s28, 1
      %s212 = scalar_select %p211, %s28, 1
      %s213 = ssub.s32 %s210, %s212
      %p214 = scmp.eq.s32.totalorder %s213, 0
      %s216 = sadd.s32 %s215, 1
      %s217 = scalar_select %p214, %s215, %s216
      %p220 = pneg %p214
      %p221 = scmp.eq.s32.totalorder %s21, 2
      %p222 = por %p220, %p221
      %p223 = scmp.ne.s32.totalorder %s215, %s218
      %p224 = scmp.eq.s32.totalorder %s21, 0
      %p225 = por %p223, %p224
      %p226 = scmp.ne.s32.totalorder %s215, %s218
      %p227 = scmp.eq.s32.totalorder %s26, 2
      %p228 = por %p226, %p227
      %p229 = scmp.ne.s32.totalorder %s218, %s219
      %p230 = scmp.eq.s32.totalorder %s26, 0
      %p231 = por %p229, %p230
      %p232 = scmp.ne.s32.totalorder %s218, %s219
      %p233 = scmp.eq.s32.totalorder %s27, 2
      %p234 = por %p232, %p233
      %p236 = scmp.ne.s32.totalorder %s219, %s235
      %p237 = scmp.eq.s32.totalorder %s27, 0
      %p238 = por %p236, %p237
      %p239 = scmp.lt.s32.totalorder %s21, 1
      %s240 = scalar_select %p239, %s21, 1
      %p241 = scmp.lt.s32.totalorder %s28, 1
      %s242 = scalar_select %p241, %s28, 1
      %s243 = ssub.s32 %s240, %s242
      %p244 = scmp.eq.s32.totalorder %s243, 0
      %s246 = sadd.s32 %s245, 1
      %s247 = scalar_select %p244, %s245, %s246
      %p250 = pneg %p244
      %p251 = scmp.eq.s32.totalorder %s21, 2
      %p252 = por %p250, %p251
      %p253 = scmp.ne.s32.totalorder %s245, %s248
      %p254 = scmp.eq.s32.totalorder %s21, 0
      %p255 = por %p253, %p254
      %p256 = scmp.ne.s32.totalorder %s245, %s248
      %p257 = scmp.eq.s32.totalorder %s26, 2
      %p258 = por %p256, %p257
      %p259 = scmp.ne.s32.totalorder %s248, %s249
      %p260 = scmp.eq.s32.totalorder %s26, 0
      %p261 = por %p259, %p260
      %p262 = scmp.ne.s32.totalorder %s248, %s249
      %p263 = scmp.eq.s32.totalorder %s27, 2
      %p264 = por %p262, %p263
      %p266 = scmp.ne.s32.totalorder %s249, %s265
      %p267 = scmp.eq.s32.totalorder %s27, 0
      %p268 = por %p266, %p267
      %p269 = scmp.lt.s32.totalorder %s21, 1
      %s270 = scalar_select %p269, %s21, 1
      %p271 = scmp.lt.s32.totalorder %s28, 1
      %s272 = scalar_select %p271, %s28, 1
      %s273 = ssub.s32 %s270, %s272
      %p274 = scmp.eq.s32.totalorder %s273, 0
      %s276 = sadd.s32 %s275, 1
      %s277 = scalar_select %p274, %s275, %s276
      %p280 = pneg %p274
      %p281 = scmp.eq.s32.totalorder %s21, 2
      %p282 = por %p280, %p281
      %p283 = scmp.ne.s32.totalorder %s275, %s278
      %p284 = scmp.eq.s32.totalorder %s21, 0
      %p285 = por %p283, %p284
      %p286 = scmp.ne.s32.totalorder %s275, %s278
      %p287 = scmp.eq.s32.totalorder %s26, 2
      %p288 = por %p286, %p287
      %p289 = scmp.ne.s32.totalorder %s278, %s279
      %p290 = scmp.eq.s32.totalorder %s26, 0
      %p291 = por %p289, %p290
      %p292 = scmp.ne.s32.totalorder %s278, %s279
      %p293 = scmp.eq.s32.totalorder %s27, 2
      %p294 = por %p292, %p293
      %p296 = scmp.ne.s32.totalorder %s279, %s295
      %p297 = scmp.eq.s32.totalorder %s27, 0
      %p298 = por %p296, %p297
      %s300 = sadd.s32 %s299, 1
      %p303 = scmp.eq.s32.totalorder %s21, 2
      %p304 = scmp.ne.s32.totalorder %s299, %s301
      %p305 = scmp.eq.s32.totalorder %s21, 0
      %p306 = por %p304, %p305
      %p307 = scmp.ne.s32.totalorder %s299, %s301
      %p308 = scmp.eq.s32.totalorder %s26, 2
      %p309 = por %p307, %p308
      %p310 = scmp.ne.s32.totalorder %s301, %s302
      %p311 = scmp.eq.s32.totalorder %s26, 0
      %p312 = por %p310, %p311
      %p313 = scmp.ne.s32.totalorder %s301, %s302
      %p314 = scmp.eq.s32.totalorder %s27, 2
      %p315 = por %p313, %p314
      %p317 = scmp.ne.s32.totalorder %s302, %s316
      %p318 = scmp.eq.s32.totalorder %s27, 0
      %p319 = por %p317, %p318
      %s321 = sadd.s32 %s320, 1
      %p324 = scmp.eq.s32.totalorder %s21, 2
      %p325 = scmp.ne.s32.totalorder %s320, %s322
      %p326 = scmp.eq.s32.totalorder %s21, 0
      %p327 = por %p325, %p326
      %p328 = scmp.ne.s32.totalorder %s320, %s322
      %p329 = scmp.eq.s32.totalorder %s26, 2
      %p330 = por %p328, %p329
      %p331 = scmp.ne.s32.totalorder %s322, %s323
      %p332 = scmp.eq.s32.totalorder %s26, 0
      %p333 = por %p331, %p332
      %p334 = scmp.ne.s32.totalorder %s322, %s323
      %p335 = scmp.eq.s32.totalorder %s27, 2
      %p336 = por %p334, %p335
      %p338 = scmp.ne.s32.totalorder %s323, %s337
      %p339 = scmp.eq.s32.totalorder %s27, 0
      %p340 = por %p338, %p339
      %s342 = sadd.s32 %s341, 1
      %p345 = scmp.eq.s32.totalorder %s21, 2
      %p346 = scmp.ne.s32.totalorder %s341, %s343
      %p347 = scmp.eq.s32.totalorder %s21, 0
      %p348 = por %p346, %p347
      %p349 = scmp.ne.s32.totalorder %s341, %s343
      %p350 = scmp.eq.s32.totalorder %s26, 2
      %p351 = por %p349, %p350
      %p352 = scmp.ne.s32.totalorder %s343, %s344
      %p353 = scmp.eq.s32.totalorder %s26, 0
      %p354 = por %p352, %p353
      %p355 = scmp.ne.s32.totalorder %s343, %s344
      %p356 = scmp.eq.s32.totalorder %s27, 2
      %p357 = por %p355, %p356
      %p359 = scmp.ne.s32.totalorder %s344, %s358
      %p360 = scmp.eq.s32.totalorder %s27, 0
      %p361 = por %p359, %p360
      %s363 = sadd.s32 %s362, 1
      %p366 = scmp.eq.s32.totalorder %s21, 2
      %p367 = scmp.ne.s32.totalorder %s362, %s364
      %p368 = scmp.eq.s32.totalorder %s21, 0
      %p369 = por %p367, %p368
      %p370 = scmp.ne.s32.totalorder %s362, %s364
      %p371 = scmp.eq.s32.totalorder %s26, 2
      %p372 = por %p370, %p371
      %p373 = scmp.ne.s32.totalorder %s364, %s365
      %p374 = scmp.eq.s32.totalorder %s26, 0
      %p375 = por %p373, %p374
      %p376 = scmp.ne.s32.totalorder %s364, %s365
      %p377 = scmp.eq.s32.totalorder %s27, 2
      %p378 = por %p376, %p377
      %p380 = scmp.ne.s32.totalorder %s365, %s379
      %p381 = scmp.eq.s32.totalorder %s27, 0
      %p382 = por %p380, %p381
      %s384 = sadd.s32 %s383, 1
      %p387 = scmp.eq.s32.totalorder %s21, 2
      %p388 = scmp.ne.s32.totalorder %s383, %s385
      %p389 = scmp.eq.s32.totalorder %s21, 0
      %p390 = por %p388, %p389
      %p391 = scmp.ne.s32.totalorder %s383, %s385
      %p392 = scmp.eq.s32.totalorder %s26, 2
      %p393 = por %p391, %p392
      %p394 = scmp.ne.s32.totalorder %s385, %s386
      %p395 = scmp.eq.s32.totalorder %s26, 0
      %p396 = por %p394, %p395
      %p397 = scmp.ne.s32.totalorder %s385, %s386
      %p398 = scmp.eq.s32.totalorder %s27, 2
      %p399 = por %p397, %p398
      %p401 = scmp.ne.s32.totalorder %s386, %s400
      %p402 = scmp.eq.s32.totalorder %s27, 0
      %p403 = por %p401, %p402
      %s405 = sadd.s32 %s404, 1
      %p408 = scmp.eq.s32.totalorder %s21, 2
      %p409 = scmp.ne.s32.totalorder %s404, %s406
      %p410 = scmp.eq.s32.totalorder %s21, 0
      %p411 = por %p409, %p410
      %p412 = scmp.ne.s32.totalorder %s404, %s406
      %p413 = scmp.eq.s32.totalorder %s26, 2
      %p414 = por %p412, %p413
      %p415 = scmp.ne.s32.totalorder %s406, %s407
      %p416 = scmp.eq.s32.totalorder %s26, 0
      %p417 = por %p415, %p416
      %p418 = scmp.ne.s32.totalorder %s406, %s407
      %p419 = scmp.eq.s32.totalorder %s27, 2
      %p420 = por %p418, %p419
      %p422 = scmp.ne.s32.totalorder %s407, %s421
      %p423 = scmp.eq.s32.totalorder %s27, 0
      %p424 = por %p422, %p423
      %p425 = scmp.le.s32.totalorder 1, %s21
      %p426 = scmp.lt.s32.totalorder %s21, 4
      %p427 = pnand %p425, %p426
      %p428 = pneg %p427
      // Predicated region
      $region9: #{curl_atc_forward.1} parent=5 // pred_check
        _
      $region10: #{curl_atc_forward.1} parent=5 // pred_check_branch
        %430 = sbr.rel (%p427) target = $region12
      $region11: #{curl_atc_forward.1} parent=5 // pred_region
        %s431 = ssub.s32 %s21, 1
        // Predicated region
        $region13: #{curl_atc_forward.1} parent=11 // pred_check
          %p432 = pneg %p312
        $region14: #{curl_atc_forward.1} parent=11 // pred_check_branch
          %434 = sbr.rel (%p432) target = $region16
        $region15: #{curl_atc_forward.1} parent=11 // pred_region
          _
        $region16: #{curl_atc_forward.1} parent=11 // pred_fallthru
          _
        // Predicated region
        $region17: #{curl_atc_forward.1} parent=11 // pred_check
          %p435 = pneg %p333
        $region18: #{curl_atc_forward.1} parent=11 // pred_check_branch
          %437 = sbr.rel (%p435) target = $region20
        $region19: #{curl_atc_forward.1} parent=11 // pred_region
          _
        $region20: #{curl_atc_forward.1} parent=11 // pred_fallthru
          _
        // Predicated region
        $region21: #{curl_atc_forward.1} parent=11 // pred_check
          %p438 = pneg %p354
        $region22: #{curl_atc_forward.1} parent=11 // pred_check_branch
          %440 = sbr.rel (%p438) target = $region24
        $region23: #{curl_atc_forward.1} parent=11 // pred_region
          _
        $region24: #{curl_atc_forward.1} parent=11 // pred_fallthru
          _
        // Predicated region
        $region25: #{curl_atc_forward.1} parent=11 // pred_check
          %p441 = pneg %p375
        $region26: #{curl_atc_forward.1} parent=11 // pred_check_branch
          %443 = sbr.rel (%p441) target = $region28
        $region27: #{curl_atc_forward.1} parent=11 // pred_region
          _
        $region28: #{curl_atc_forward.1} parent=11 // pred_fallthru
          _
        // Predicated region
        $region29: #{curl_atc_forward.1} parent=11 // pred_check
          %p444 = pneg %p396
        $region30: #{curl_atc_forward.1} parent=11 // pred_check_branch
          %446 = sbr.rel (%p444) target = $region32
        $region31: #{curl_atc_forward.1} parent=11 // pred_region
          _
        $region32: #{curl_atc_forward.1} parent=11 // pred_fallthru
          _
      $region12: #{curl_atc_forward.1} parent=5 // pred_fallthru
        _
      %p447 = scmp.lt.s32.totalorder %s21, 3
      // Predicated region
      $region33: #{curl_atc_forward.1} parent=5 // pred_check
        %p448 = pneg %p447
      $region34: #{curl_atc_forward.1} parent=5 // pred_check_branch
        %450 = sbr.rel (%p448) target = $region36
      $region35: #{curl_atc_forward.1} parent=5 // pred_region
        // Predicated region
        $region37: #{curl_atc_forward.1} parent=35 // pred_check
          %p451 = pneg %p45
        $region38: #{curl_atc_forward.1} parent=35 // pred_check_branch
          %453 = sbr.rel (%p451) target = $region40
        $region39: #{curl_atc_forward.1} parent=35 // pred_region
          %p454 = scmp.lt.s32.totalorder %s21, 1
          %s455 = scalar_select %p454, %s21, 1
          %p456 = scmp.lt.s32.totalorder %s455, 1
          %s457 = scalar_select %p456, %s455, 1
          %s458 = smul.addr %s457, 75
          %s459 = smul.addr %s458, 4
          %s460 = scalar_lea.vmem %s0, %s459
          %p461 = scmp.lt.s32.totalorder %s21, 1
          %s462 = scalar_select %p461, %s21, 1
        $region40: #{curl_atc_forward.1} parent=35 // pred_fallthru
          _
        // Predicated region
        $region41: #{curl_atc_forward.1} parent=35 // pred_check
          %p463 = pneg %p75
        $region42: #{curl_atc_forward.1} parent=35 // pred_check_branch
          %465 = sbr.rel (%p463) target = $region44
        $region43: #{curl_atc_forward.1} parent=35 // pred_region
          %p466 = scmp.lt.s32.totalorder %s21, 1
          %s467 = scalar_select %p466, %s21, 1
          %p468 = scmp.lt.s32.totalorder %s467, 1
          %s469 = scalar_select %p468, %s467, 1
          %s470 = smul.addr %s469, 5
          %s471 = smul.addr %s470, 4
          %s472 = scalar_lea.vmem %s1, %s471
          %p473 = scmp.lt.s32.totalorder %s21, 1
          %s474 = scalar_select %p473, %s21, 1
        $region44: #{curl_atc_forward.1} parent=35 // pred_fallthru
          _
        // Predicated region
        $region45: #{curl_atc_forward.1} parent=35 // pred_check
          %p475 = pneg %p105
        $region46: #{curl_atc_forward.1} parent=35 // pred_check_branch
          %477 = sbr.rel (%p475) target = $region48
        $region47: #{curl_atc_forward.1} parent=35 // pred_region
          %p478 = scmp.lt.s32.totalorder %s21, 1
          %s479 = scalar_select %p478, %s21, 1
          %p480 = scmp.lt.s32.totalorder %s479, 1
          %s481 = scalar_select %p480, %s479, 1
          %s482 = smul.addr %s481, 2
          %s483 = scalar_lea.vmem %s2, %s482
          %p484 = scmp.lt.s32.totalorder %s21, 1
          %s485 = scalar_select %p484, %s21, 1
        $region48: #{curl_atc_forward.1} parent=35 // pred_fallthru
          _
        // Predicated region
        $region49: #{curl_atc_forward.1} parent=35 // pred_check
          %p486 = pneg %p135
        $region50: #{curl_atc_forward.1} parent=35 // pred_check_branch
          %488 = sbr.rel (%p486) target = $region52
        $region51: #{curl_atc_forward.1} parent=35 // pred_region
          %p489 = scmp.lt.s32.totalorder %s21, 1
          %s490 = scalar_select %p489, %s21, 1
          %p491 = scmp.lt.s32.totalorder %s490, 1
          %s492 = scalar_select %p491, %s490, 1
          %s493 = smul.addr %s492, 18
          %s494 = smul.addr %s493, 4
          %s495 = scalar_lea.vmem %s3, %s494
          %p496 = scmp.lt.s32.totalorder %s21, 1
          %s497 = scalar_select %p496, %s21, 1
        $region52: #{curl_atc_forward.1} parent=35 // pred_fallthru
          _
        // Predicated region
        $region53: #{curl_atc_forward.1} parent=35 // pred_check
          %p498 = pneg %p165
        $region54: #{curl_atc_forward.1} parent=35 // pred_check_branch
          %500 = sbr.rel (%p498) target = $region56
        $region55: #{curl_atc_forward.1} parent=35 // pred_region
          %p501 = scmp.lt.s32.totalorder %s21, 1
          %s502 = scalar_select %p501, %s21, 1
          %p503 = scmp.lt.s32.totalorder %s502, 1
          %s504 = scalar_select %p503, %s502, 1
          %s505 = scalar_lea.vmem %s4, %s504
          %p506 = scmp.lt.s32.totalorder %s21, 1
          %s507 = scalar_select %p506, %s21, 1
        $region56: #{curl_atc_forward.1} parent=35 // pred_fallthru
          _
        // Predicated region
        $region57: #{curl_atc_forward.1} parent=35 // pred_check
          %p508 = pneg %p195
        $region58: #{curl_atc_forward.1} parent=35 // pred_check_branch
          %510 = sbr.rel (%p508) target = $region60
        $region59: #{curl_atc_forward.1} parent=35 // pred_region
          %p511 = scmp.lt.s32.totalorder %s21, 1
          %s512 = scalar_select %p511, %s21, 1
          %p513 = scmp.lt.s32.totalorder %s512, 1
          %s514 = scalar_select %p513, %s512, 1
          %s515 = smul.addr %s514, 100
          %s516 = smul.addr %s515, 4
          %s517 = scalar_lea.vmem %s5, %s516
          %p518 = scmp.lt.s32.totalorder %s21, 1
          %s519 = scalar_select %p518, %s21, 1
        $region60: #{curl_atc_forward.1} parent=35 // pred_fallthru
          _
        // Predicated region
        $region61: #{curl_atc_forward.1} parent=35 // pred_check
          %p520 = pneg %p225
        $region62: #{curl_atc_forward.1} parent=35 // pred_check_branch
          %522 = sbr.rel (%p520) target = $region64
        $region63: #{curl_atc_forward.1} parent=35 // pred_region
          %p523 = scmp.lt.s32.totalorder %s21, 1
          %s524 = scalar_select %p523, %s21, 1
          %p525 = scmp.lt.s32.totalorder %s524, 1
          %s526 = scalar_select %p525, %s524, 1
          %s527 = smul.addr %s526, 2
          %s528 = scalar_lea.vmem %s6, %s527
          %p529 = scmp.lt.s32.totalorder %s21, 1
          %s530 = scalar_select %p529, %s21, 1
        $region64: #{curl_atc_forward.1} parent=35 // pred_fallthru
          _
        // Predicated region
        $region65: #{curl_atc_forward.1} parent=35 // pred_check
          %p531 = pneg %p255
        $region66: #{curl_atc_forward.1} parent=35 // pred_check_branch
          %533 = sbr.rel (%p531) target = $region68
        $region67: #{curl_atc_forward.1} parent=35 // pred_region
          %p534 = scmp.lt.s32.totalorder %s21, 1
          %s535 = scalar_select %p534, %s21, 1
          %p536 = scmp.lt.s32.totalorder %s535, 1
          %s537 = scalar_select %p536, %s535, 1
          %s538 = smul.addr %s537, 2
          %s539 = scalar_lea.vmem %s7, %s538
          %p540 = scmp.lt.s32.totalorder %s21, 1
          %s541 = scalar_select %p540, %s21, 1
        $region68: #{curl_atc_forward.1} parent=35 // pred_fallthru
          _
        // Predicated region
        $region69: #{curl_atc_forward.1} parent=35 // pred_check
          %p542 = pneg %p285
        $region70: #{curl_atc_forward.1} parent=35 // pred_check_branch
          %544 = sbr.rel (%p542) target = $region72
        $region71: #{curl_atc_forward.1} parent=35 // pred_region
          %p545 = scmp.lt.s32.totalorder %s21, 1
          %s546 = scalar_select %p545, %s21, 1
          %p547 = scmp.lt.s32.totalorder %s546, 1
          %s548 = scalar_select %p547, %s546, 1
          %s549 = smul.addr %s548, 2
          %s550 = scalar_lea.vmem %s8, %s549
          %p551 = scmp.lt.s32.totalorder %s21, 1
          %s552 = scalar_select %p551, %s21, 1
        $region72: #{curl_atc_forward.1} parent=35 // pred_fallthru
          _
      $region36: #{curl_atc_forward.1} parent=5 // pred_fallthru
        _
      %p553 = scmp.le.s32.totalorder 1, %s21
      %p554 = scmp.lt.s32.totalorder %s21, 4
      %p555 = pnand %p553, %p554
      %p556 = pneg %p555
      // Predicated region
      $region73: #{curl_atc_forward.1} parent=5 // pred_check
        _
      $region74: #{curl_atc_forward.1} parent=5 // pred_check_branch
        %558 = sbr.rel (%p555) target = $region76
      $region75: #{curl_atc_forward.1} parent=5 // pred_region
        %s559 = ssub.s32 %s21, 1
        %p560 = scmp.lt.s32.totalorder %s26, 1
        %s561 = scalar_select %p560, %s26, 1
        %p562 = scmp.lt.s32.totalorder %s561, 1
        %s563 = scalar_select %p562, %s561, 1
        %s564 = smul.addr %s563, 75
        %s565 = smul.addr %s564, 4
        %s566 = scalar_lea.vmem %s0, %s565
        %p567 = pneg %p51
        %p568 = pneg %p48
        %p569 = scmp.lt.s32.totalorder %s26, 1
        %s570 = scalar_select %p569, %s26, 1
        %p571 = scmp.lt.s32.totalorder %s570, 1
        %s572 = scalar_select %p571, %s570, 1
        %s573 = smul.addr %s572, 5
        %s574 = smul.addr %s573, 4
        %s575 = scalar_lea.vmem %s1, %s574
        %p576 = pneg %p81
        %p577 = pneg %p78
        %p578 = scmp.lt.s32.totalorder %s26, 1
        %s579 = scalar_select %p578, %s26, 1
        %p580 = scmp.lt.s32.totalorder %s579, 1
        %s581 = scalar_select %p580, %s579, 1
        %s582 = smul.addr %s581, 2
        %s583 = scalar_lea.vmem %s2, %s582
        %p584 = pneg %p111
        %p585 = pneg %p108
        %p586 = scmp.lt.s32.totalorder %s26, 1
        %s587 = scalar_select %p586, %s26, 1
        %p588 = scmp.lt.s32.totalorder %s587, 1
        %s589 = scalar_select %p588, %s587, 1
        %s590 = smul.addr %s589, 18
        %s591 = smul.addr %s590, 4
        %s592 = scalar_lea.vmem %s3, %s591
        %p593 = pneg %p141
        %p594 = pneg %p138
        %p595 = scmp.lt.s32.totalorder %s26, 1
        %s596 = scalar_select %p595, %s26, 1
        %p597 = scmp.lt.s32.totalorder %s596, 1
        %s598 = scalar_select %p597, %s596, 1
        %s599 = scalar_lea.vmem %s4, %s598
        %p600 = pneg %p171
        %p601 = pneg %p168
        %p602 = scmp.lt.s32.totalorder %s26, 1
        %s603 = scalar_select %p602, %s26, 1
        %p604 = scmp.lt.s32.totalorder %s603, 1
        %s605 = scalar_select %p604, %s603, 1
        %s606 = smul.addr %s605, 100
        %s607 = smul.addr %s606, 4
        %s608 = scalar_lea.vmem %s5, %s607
        %p609 = pneg %p201
        %p610 = pneg %p198
        %p611 = scmp.lt.s32.totalorder %s26, 1
        %s612 = scalar_select %p611, %s26, 1
        %p613 = scmp.lt.s32.totalorder %s612, 1
        %s614 = scalar_select %p613, %s612, 1
        %s615 = smul.addr %s614, 2
        %s616 = scalar_lea.vmem %s6, %s615
        %p617 = pneg %p231
        %p618 = pneg %p228
        %p619 = scmp.lt.s32.totalorder %s26, 1
        %s620 = scalar_select %p619, %s26, 1
        %p621 = scmp.lt.s32.totalorder %s620, 1
        %s622 = scalar_select %p621, %s620, 1
        %s623 = smul.addr %s622, 2
        %s624 = scalar_lea.vmem %s7, %s623
        %p625 = pneg %p261
        %p626 = pneg %p258
        %p627 = scmp.lt.s32.totalorder %s26, 1
        %s628 = scalar_select %p627, %s26, 1
        %p629 = scmp.lt.s32.totalorder %s628, 1
        %s630 = scalar_select %p629, %s628, 1
        %s631 = smul.addr %s630, 2
        %s632 = scalar_lea.vmem %s8, %s631
        %p633 = pneg %p291
        %p634 = pneg %p288
        %p635 = pneg %p312
        %p636 = pneg %p309
        %p637 = pneg %p333
        %p638 = pneg %p330
        %p639 = pneg %p354
        %p640 = pneg %p351
        %p641 = pneg %p375
        %p642 = pneg %p372
        %p643 = pneg %p396
        %p644 = pneg %p393
        %p645 = pneg %p417
        %p646 = pneg %p414
        %p647 = scmp.lt.s32.totalorder %s26, 1
        %s648 = scalar_select %p647, %s26, 1
        %p649 = scmp.lt.s32.totalorder %s648, 1
        %s650 = scalar_select %p649, %s648, 1
        %s651 = smul.addr %s650, 75
        %s652 = smul.addr %s651, 4
        %s653 = scalar_lea.vmem %s0, %s652
        %p654 = scmp.lt.s32.totalorder %s26, 1
        %s655 = scalar_select %p654, %s26, 1
        %p656 = scmp.lt.s32.totalorder %s26, 1
        %s657 = scalar_select %p656, %s26, 1
        %p658 = scmp.lt.s32.totalorder %s657, 1
        %s659 = scalar_select %p658, %s657, 1
        %s660 = smul.addr %s659, 5
        %s661 = smul.addr %s660, 4
        %s662 = scalar_lea.vmem %s1, %s661
        %p663 = scmp.lt.s32.totalorder %s26, 1
        %s664 = scalar_select %p663, %s26, 1
        %p665 = scmp.lt.s32.totalorder %s26, 1
        %s666 = scalar_select %p665, %s26, 1
        %p667 = scmp.lt.s32.totalorder %s666, 1
        %s668 = scalar_select %p667, %s666, 1
        %s669 = smul.addr %s668, 2
        %s670 = scalar_lea.vmem %s2, %s669
        %p671 = scmp.lt.s32.totalorder %s26, 1
        %s672 = scalar_select %p671, %s26, 1
        %p673 = scmp.lt.s32.totalorder %s26, 1
        %s674 = scalar_select %p673, %s26, 1
        %p675 = scmp.lt.s32.totalorder %s674, 1
        %s676 = scalar_select %p675, %s674, 1
        %s677 = smul.addr %s676, 18
        %s678 = smul.addr %s677, 4
        %s679 = scalar_lea.vmem %s3, %s678
        %p680 = scmp.lt.s32.totalorder %s26, 1
        %s681 = scalar_select %p680, %s26, 1
        %p682 = scmp.lt.s32.totalorder %s26, 1
        %s683 = scalar_select %p682, %s26, 1
        %p684 = scmp.lt.s32.totalorder %s683, 1
        %s685 = scalar_select %p684, %s683, 1
        %s686 = scalar_lea.vmem %s4, %s685
        %p687 = scmp.lt.s32.totalorder %s26, 1
        %s688 = scalar_select %p687, %s26, 1
        %p689 = scmp.lt.s32.totalorder %s26, 1
        %s690 = scalar_select %p689, %s26, 1
        %p691 = scmp.lt.s32.totalorder %s690, 1
        %s692 = scalar_select %p691, %s690, 1
        %s693 = smul.addr %s692, 100
        %s694 = smul.addr %s693, 4
        %s695 = scalar_lea.vmem %s5, %s694
        %p696 = scmp.lt.s32.totalorder %s26, 1
        %s697 = scalar_select %p696, %s26, 1
        %p698 = scmp.lt.s32.totalorder %s26, 1
        %s699 = scalar_select %p698, %s26, 1
        %p700 = scmp.lt.s32.totalorder %s699, 1
        %s701 = scalar_select %p700, %s699, 1
        %s702 = smul.addr %s701, 2
        %s703 = scalar_lea.vmem %s6, %s702
        %p704 = scmp.lt.s32.totalorder %s26, 1
        %s705 = scalar_select %p704, %s26, 1
        %p706 = scmp.lt.s32.totalorder %s26, 1
        %s707 = scalar_select %p706, %s26, 1
        %p708 = scmp.lt.s32.totalorder %s707, 1
        %s709 = scalar_select %p708, %s707, 1
        %s710 = smul.addr %s709, 2
        %s711 = scalar_lea.vmem %s7, %s710
        %p712 = scmp.lt.s32.totalorder %s26, 1
        %s713 = scalar_select %p712, %s26, 1
        %p714 = scmp.lt.s32.totalorder %s26, 1
        %s715 = scalar_select %p714, %s26, 1
        %p716 = scmp.lt.s32.totalorder %s715, 1
        %s717 = scalar_select %p716, %s715, 1
        %s718 = smul.addr %s717, 2
        %s719 = scalar_lea.vmem %s8, %s718
        %p720 = scmp.lt.s32.totalorder %s26, 1
        %s721 = scalar_select %p720, %s26, 1
        %p723 = scmp.eq.s32.totalorder %s26, 0
        // Predicated region
        $region77: #{curl_atc_forward.1} parent=75 // pred_check
          %p724 = pneg %p723
        $region78: #{curl_atc_forward.1} parent=75 // pred_check_branch
          %726 = sbr.rel (%p724) target = $region80
        $region79: #{curl_atc_forward.1} parent=75 // pred_region
          %vm727 = vcmask 1043456
          %vm728 = vcmask 130052
          %vm729 = vmor %vm728, %vm727
          %730 = vst.msk [vmem:[#allocation3] sm:$0xff] %vm729, 0
          %731 = vst.msk [vmem:[#allocation3 + $0x8] sm:$0xff] %vm729, 0
          %732 = vst.msk [vmem:[#allocation3 + $0x10] sm:$0xff] %vm729, 0
          %733 = vst.msk [vmem:[#allocation3 + $0x18] sm:$0xff] %vm729, 0
          %734 = vst.msk [vmem:[#allocation3 + $0x20] sm:$0xff] %vm729, 0
          %735 = vst.msk [vmem:[#allocation3 + $0x28] sm:$0xff] %vm729, 0
          %736 = vst.msk [vmem:[#allocation3 + $0x30] sm:$0xff] %vm729, 0
          %737 = vst.msk [vmem:[#allocation3 + $0x38] sm:$0xff] %vm729, 0
          %738 = vst.msk [vmem:[#allocation3 + $0x40] sm:$0xff] %vm729, 0
          %739 = vst.msk [vmem:[#allocation3 + $0x48] sm:$0xff] %vm729, 0
          %740 = vst.msk [vmem:[#allocation3 + $0x50] sm:$0xff] %vm729, 0
          %741 = vst.msk [vmem:[#allocation3 + $0x58] sm:$0xff] %vm729, 0
          %742 = vst.msk [vmem:[#allocation3 + $0x60] sm:$0xff] %vm729, 0
          %743 = vst.msk [vmem:[#allocation3 + $0x68] sm:$0xff] %vm729, 0
          %744 = vst.msk [vmem:[#allocation3 + $0x70] sm:$0xff] %vm729, 0
          %745 = vst.msk [vmem:[#allocation3 + $0x78] sm:$0xff] %vm729, 0
          %746 = vst.msk [vmem:[#allocation3 + $0x80] sm:$0xff] %vm729, 0
          %747 = vst.msk [vmem:[#allocation3 + $0x88] sm:$0xff] %vm729, 0
          %748 = vst.msk [vmem:[#allocation3 + $0x90] sm:$0xff] %vm729, 0
          %749 = vst.msk [vmem:[#allocation3 + $0x98] sm:$0xff] %vm729, 0
          %750 = vst.msk [vmem:[#allocation3 + $0xa0] sm:$0xff] %vm729, 0
          %751 = vst.msk [vmem:[#allocation3 + $0xa8] sm:$0xff] %vm729, 0
          %752 = vst.msk [vmem:[#allocation3 + $0xb0] sm:$0xff] %vm729, 0
          %753 = vst.msk [vmem:[#allocation3 + $0xb8] sm:$0xff] %vm729, 0
          %754 = vst.msk [vmem:[#allocation3 + $0xc0] sm:$0xff] %vm729, 0
          %755 = vst.msk [vmem:[#allocation3 + $0xc8] sm:$0xff] %vm729, 0
          %756 = vst.msk [vmem:[#allocation3 + $0xd0] sm:$0xff] %vm729, 0
          %757 = vst.msk [vmem:[#allocation3 + $0xd8] sm:$0xff] %vm729, 0
          %758 = vst.msk [vmem:[#allocation3 + $0xe0] sm:$0xff] %vm729, 0
          %759 = vst.msk [vmem:[#allocation3 + $0xe8] sm:$0xff] %vm729, 0
          %760 = vst.msk [vmem:[#allocation3 + $0xf0] sm:$0xff] %vm729, 0
          %761 = vst.msk [vmem:[#allocation3 + $0xf8] sm:$0xff] %vm729, 0
          %762 = vst.msk [vmem:[#allocation3 + $0x100] sm:$0xff] %vm729, 0
          %763 = vst.msk [vmem:[#allocation3 + $0x108] sm:$0xff] %vm729, 0
          %764 = vst.msk [vmem:[#allocation3 + $0x110] sm:$0xff] %vm729, 0
          %765 = vst.msk [vmem:[#allocation3 + $0x118] sm:$0xff] %vm729, 0
          %766 = vst.msk [vmem:[#allocation3 + $0x120] sm:$0xff] %vm729, 0
          %767 = vst.msk [vmem:[#allocation3 + $0x128] sm:$0xff] %vm729, 0
          %768 = vst.msk [vmem:[#allocation3 + $0x130] sm:$0xff] %vm729, 0
          %769 = vst.msk [vmem:[#allocation3 + $0x138] sm:$0xff] %vm729, 0
          %vm770 = vcmask 1041408
          %vm771 = vcmask 128004
          %vm772 = vmor %vm771, %vm770
          %773 = vst.msk [vmem:[#allocation3 + $0x140] sm:$0x33] %vm772, 0
        $region80: #{curl_atc_forward.1} parent=75 // pred_fallthru
          _
        %p774 = scmp.lt.s32.totalorder %s26, 2
        // Predicated region
        $region81: #{curl_atc_forward.1} parent=75 // pred_check
          %p775 = pneg %p774
        $region82: #{curl_atc_forward.1} parent=75 // pred_check_branch
          %777 = sbr.rel (%p775) target = $region84
        $region83: #{curl_atc_forward.1} parent=75 // pred_region
          %v778 = vld [vmem:[%s662] sm:$0xf]
          %v779 = vld [vmem:[%s662 + $0x4] sm:$0xf]
          %v780 = vld [vmem:[%s662 + $0x8] sm:$0xf]
          %v781 = vld [vmem:[%s662 + $0xc] sm:$0xf]
          %v782 = vld [vmem:[%s662 + $0x10] sm:$0x3]
          %vm783 = vcmask 125952
          %784 = vst.msk [vmem:[#allocation3] sm:$0xf] %vm783, %v778
          %785 = vst.msk [vmem:[#allocation3 + $0x8] sm:$0xf] %vm783, %v779
          %786 = vst.msk [vmem:[#allocation3 + $0x10] sm:$0xf] %vm783, %v780
          %787 = vst.msk [vmem:[#allocation3 + $0x18] sm:$0xf] %vm783, %v781
          %vm788 = vcmask 123904
          %789 = vst.msk [vmem:[#allocation3 + $0x20] sm:$0x3] %vm788, %v782
          %vm795 = vcmask 1041408
          %vm796 = vcmask 1045508
          %vm797 = vmor %vm795, %vm796
          %v798 = vrot.slane %v778, 6
          %v799 = vrot.slane %v798, 4
          %v800 = vrot.slane %v779, 6
          %v801 = vsel %vm797, %v799, %v800
          %v802 = vrot.slane %v800, 4
          %v803 = vrot.slane %v780, 6
          %v804 = vsel %vm797, %v802, %v803
          %v805 = vrot.slane %v803, 4
          %v806 = vrot.slane %v781, 6
          %v807 = vsel %vm797, %v805, %v806
          %v808 = vrot.slane %v806, 4
          %v809 = vrot.slane %v782, 6
          %v810 = vsel %vm797, %v808, %v809
          %811 = vrot.lane.b32.xlu0 %v798, 16
          %v812 = vpop.permute.xlu0 %811
          %813 = vrot.lane.b32.xlu0 %v801, 16
          %v814 = vpop.permute.xlu0 %813
          %815 = vrot.lane.b32.xlu0 %v804, 16
          %v816 = vpop.permute.xlu0 %815
          %817 = vrot.lane.b32.xlu0 %v807, 16
          %v818 = vpop.permute.xlu0 %817
          %819 = vrot.lane.b32.xlu0 %v810, 16
          %v820 = vpop.permute.xlu0 %819
          %vm826 = vcmask 257154
          %827 = vst.msk [vmem:[#allocation3 + $0x20] sm:$0xc] %vm826, %v812
          %vm828 = vcmask 257152
          %829 = vst.msk [vmem:[#allocation3 + $0x28] sm:$0xf] %vm828, %v814
          %830 = vst.msk [vmem:[#allocation3 + $0x30] sm:$0xf] %vm828, %v816
          %831 = vst.msk [vmem:[#allocation3 + $0x38] sm:$0xf] %vm828, %v818
          %832 = vst.msk [vmem:[#allocation3 + $0x40] sm:$0xf] %vm828, %v820
          %833 = vrot.lane.b32.xlu0 %v778, 32
          %v834 = vpop.permute.xlu0 %833
          %835 = vrot.lane.b32.xlu0 %v779, 32
          %v836 = vpop.permute.xlu0 %835
          %837 = vrot.lane.b32.xlu0 %v780, 32
          %v838 = vpop.permute.xlu0 %837
          %839 = vrot.lane.b32.xlu0 %v781, 32
          %v840 = vpop.permute.xlu0 %839
          %841 = vrot.lane.b32.xlu0 %v782, 32
          %v842 = vpop.permute.xlu0 %841
          %vm848 = vcmask 388352
          %849 = vst.msk [vmem:[#allocation3 + $0x48] sm:$0xf] %vm848, %v834
          %850 = vst.msk [vmem:[#allocation3 + $0x50] sm:$0xf] %vm848, %v836
          %851 = vst.msk [vmem:[#allocation3 + $0x58] sm:$0xf] %vm848, %v838
          %852 = vst.msk [vmem:[#allocation3 + $0x60] sm:$0xf] %vm848, %v840
          %vm853 = vcmask 386304
          %854 = vst.msk [vmem:[#allocation3 + $0x68] sm:$0x3] %vm853, %v842
          %855 = vrot.lane.b32.xlu0 %v798, 48
          %v856 = vpop.permute.xlu0 %855
          %857 = vrot.lane.b32.xlu0 %v801, 48
          %v858 = vpop.permute.xlu0 %857
          %859 = vrot.lane.b32.xlu0 %v804, 48
          %v860 = vpop.permute.xlu0 %859
          %861 = vrot.lane.b32.xlu0 %v807, 48
          %v862 = vpop.permute.xlu0 %861
          %863 = vrot.lane.b32.xlu0 %v810, 48
          %v864 = vpop.permute.xlu0 %863
          %vm870 = vcmask 519554
          %871 = vst.msk [vmem:[#allocation3 + $0x68] sm:$0xc] %vm870, %v856
          %vm872 = vcmask 519552
          %873 = vst.msk [vmem:[#allocation3 + $0x70] sm:$0xf] %vm872, %v858
          %874 = vst.msk [vmem:[#allocation3 + $0x78] sm:$0xf] %vm872, %v860
          %875 = vst.msk [vmem:[#allocation3 + $0x80] sm:$0xf] %vm872, %v862
          %876 = vst.msk [vmem:[#allocation3 + $0x88] sm:$0xf] %vm872, %v864
          %877 = vrot.lane.b32.xlu0 %v778, 64
          %v878 = vpop.permute.xlu0 %877
          %879 = vrot.lane.b32.xlu0 %v779, 64
          %v880 = vpop.permute.xlu0 %879
          %881 = vrot.lane.b32.xlu0 %v780, 64
          %v882 = vpop.permute.xlu0 %881
          %883 = vrot.lane.b32.xlu0 %v781, 64
          %v884 = vpop.permute.xlu0 %883
          %885 = vrot.lane.b32.xlu0 %v782, 64
          %v886 = vpop.permute.xlu0 %885
          %vm892 = vcmask 650752
          %893 = vst.msk [vmem:[#allocation3 + $0x90] sm:$0xf] %vm892, %v878
          %894 = vst.msk [vmem:[#allocation3 + $0x98] sm:$0xf] %vm892, %v880
          %895 = vst.msk [vmem:[#allocation3 + $0xa0] sm:$0xf] %vm892, %v882
          %896 = vst.msk [vmem:[#allocation3 + $0xa8] sm:$0xf] %vm892, %v884
          %vm897 = vcmask 648704
          %898 = vst.msk [vmem:[#allocation3 + $0xb0] sm:$0x3] %vm897, %v886
          %899 = vrot.lane.b32.xlu0 %v798, 80
          %v900 = vpop.permute.xlu0 %899
          %901 = vrot.lane.b32.xlu0 %v801, 80
          %v902 = vpop.permute.xlu0 %901
          %903 = vrot.lane.b32.xlu0 %v804, 80
          %v904 = vpop.permute.xlu0 %903
          %905 = vrot.lane.b32.xlu0 %v807, 80
          %v906 = vpop.permute.xlu0 %905
          %907 = vrot.lane.b32.xlu0 %v810, 80
          %v908 = vpop.permute.xlu0 %907
          %vm914 = vcmask 781954
          %915 = vst.msk [vmem:[#allocation3 + $0xb0] sm:$0xc] %vm914, %v900
          %vm916 = vcmask 781952
          %917 = vst.msk [vmem:[#allocation3 + $0xb8] sm:$0xf] %vm916, %v902
          %918 = vst.msk [vmem:[#allocation3 + $0xc0] sm:$0xf] %vm916, %v904
          %919 = vst.msk [vmem:[#allocation3 + $0xc8] sm:$0xf] %vm916, %v906
          %920 = vst.msk [vmem:[#allocation3 + $0xd0] sm:$0xf] %vm916, %v908
          %921 = vrot.lane.b32.xlu0 %v778, 96
          %v922 = vpop.permute.xlu0 %921
          %923 = vrot.lane.b32.xlu0 %v779, 96
          %v924 = vpop.permute.xlu0 %923
          %925 = vrot.lane.b32.xlu0 %v780, 96
          %v926 = vpop.permute.xlu0 %925
          %927 = vrot.lane.b32.xlu0 %v781, 96
          %v928 = vpop.permute.xlu0 %927
          %929 = vrot.lane.b32.xlu0 %v782, 96
          %v930 = vpop.permute.xlu0 %929
          %vm936 = vcmask 913152
          %937 = vst.msk [vmem:[#allocation3 + $0xd8] sm:$0xf] %vm936, %v922
          %938 = vst.msk [vmem:[#allocation3 + $0xe0] sm:$0xf] %vm936, %v924
          %939 = vst.msk [vmem:[#allocation3 + $0xe8] sm:$0xf] %vm936, %v926
          %940 = vst.msk [vmem:[#allocation3 + $0xf0] sm:$0xf] %vm936, %v928
          %vm941 = vcmask 911104
          %942 = vst.msk [vmem:[#allocation3 + $0xf8] sm:$0x3] %vm941, %v930
          %943 = vrot.lane.b32.xlu0 %v798, 112
          %v944 = vpop.permute.xlu0 %943
          %945 = vrot.lane.b32.xlu0 %v801, 112
          %v946 = vpop.permute.xlu0 %945
          %947 = vrot.lane.b32.xlu0 %v804, 112
          %v948 = vpop.permute.xlu0 %947
          %949 = vrot.lane.b32.xlu0 %v807, 112
          %v950 = vpop.permute.xlu0 %949
          %951 = vrot.lane.b32.xlu0 %v810, 112
          %v952 = vpop.permute.xlu0 %951
          %vm958 = vcmask 1044354
          %959 = vst.msk [vmem:[#allocation3 + $0xf8] sm:$0xc] %vm958, %v944
          %vm960 = vcmask 1044352
          %961 = vst.msk [vmem:[#allocation3 + $0x100] sm:$0xf] %vm960, %v946
          %962 = vst.msk [vmem:[#allocation3 + $0x108] sm:$0xf] %vm960, %v948
          %963 = vst.msk [vmem:[#allocation3 + $0x110] sm:$0xf] %vm960, %v950
          %964 = vst.msk [vmem:[#allocation3 + $0x118] sm:$0xf] %vm960, %v952
          %965 = vst.msk [vmem:[#allocation3 + $0x124] sm:$0xf] %vm783, %v778
          %966 = vst.msk [vmem:[#allocation3 + $0x12c] sm:$0xf] %vm783, %v779
          %967 = vst.msk [vmem:[#allocation3 + $0x134] sm:$0xf] %vm783, %v780
          %968 = vst.msk [vmem:[#allocation3 + $0x13c] sm:$0xf] %vm783, %v781
          %969 = vst.msk [vmem:[#allocation3 + $0x144] sm:$0x3] %vm788, %v782
          %v970 = vld [vmem:[%s653] sm:$0xff]
          %v971 = vld [vmem:[%s653 + $0x8] sm:$0xf]
          %v972 = vld [vmem:[%s653 + $0xc] sm:$0xff]
          %v973 = vld [vmem:[%s653 + $0x14] sm:$0xf]
          %v974 = vld [vmem:[%s653 + $0x18] sm:$0xff]
          %v975 = vld [vmem:[%s653 + $0x20] sm:$0xf]
          %v976 = vld [vmem:[%s653 + $0x24] sm:$0xff]
          %v977 = vld [vmem:[%s653 + $0x2c] sm:$0xf]
          %v978 = vld [vmem:[%s653 + $0x30] sm:$0xff]
          %v979 = vld [vmem:[%s653 + $0x38] sm:$0xf]
          %v980 = vld [vmem:[%s653 + $0x3c] sm:$0xff]
          %v981 = vld [vmem:[%s653 + $0x44] sm:$0xf]
          %v982 = vld [vmem:[%s653 + $0x48] sm:$0xff]
          %v983 = vld [vmem:[%s653 + $0x50] sm:$0xf]
          %v984 = vld [vmem:[%s653 + $0x54] sm:$0xff]
          %v985 = vld [vmem:[%s653 + $0x5c] sm:$0xf]
          %v986 = vld [vmem:[%s653 + $0x60] sm:$0xff]
          %v987 = vld [vmem:[%s653 + $0x68] sm:$0xf]
          %v988 = vld [vmem:[%s653 + $0x6c] sm:$0xff]
          %v989 = vld [vmem:[%s653 + $0x74] sm:$0xf]
          %v990 = vld [vmem:[%s653 + $0x78] sm:$0xff]
          %v991 = vld [vmem:[%s653 + $0x80] sm:$0xf]
          %v992 = vld [vmem:[%s653 + $0x84] sm:$0xff]
          %v993 = vld [vmem:[%s653 + $0x8c] sm:$0xf]
          %v994 = vld [vmem:[%s653 + $0x90] sm:$0xff]
          %v995 = vld [vmem:[%s653 + $0x98] sm:$0xf]
          %v996 = vld [vmem:[%s653 + $0x9c] sm:$0xff]
          %v997 = vld [vmem:[%s653 + $0xa4] sm:$0xf]
          %v998 = vld [vmem:[%s653 + $0xa8] sm:$0xff]
          %v999 = vld [vmem:[%s653 + $0xb0] sm:$0xf]
          %v1000 = vld [vmem:[%s653 + $0xb4] sm:$0xff]
          %v1001 = vld [vmem:[%s653 + $0xbc] sm:$0xf]
          %v1002 = vld [vmem:[%s653 + $0xc0] sm:$0xff]
          %v1003 = vld [vmem:[%s653 + $0xc8] sm:$0xf]
          %v1004 = vld [vmem:[%s653 + $0xcc] sm:$0xff]
          %v1005 = vld [vmem:[%s653 + $0xd4] sm:$0xf]
          %v1006 = vld [vmem:[%s653 + $0xd8] sm:$0xff]
          %v1007 = vld [vmem:[%s653 + $0xe0] sm:$0xf]
          %v1008 = vld [vmem:[%s653 + $0xe4] sm:$0xff]
          %v1009 = vld [vmem:[%s653 + $0xec] sm:$0xf]
          %v1010 = vld [vmem:[%s653 + $0xf0] sm:$0xff]
          %v1011 = vld [vmem:[%s653 + $0xf8] sm:$0xf]
          %v1012 = vld [vmem:[%s653 + $0xfc] sm:$0xff]
          %v1013 = vld [vmem:[%s653 + $0x104] sm:$0xf]
          %v1014 = vld [vmem:[%s653 + $0x108] sm:$0xff]
          %v1015 = vld [vmem:[%s653 + $0x110] sm:$0xf]
          %v1016 = vld [vmem:[%s653 + $0x114] sm:$0xff]
          %v1017 = vld [vmem:[%s653 + $0x11c] sm:$0xf]
          %v1018 = vld [vmem:[%s653 + $0x120] sm:$0xff]
          %v1019 = vld [vmem:[%s653 + $0x128] sm:$0xf]
          %v1020 = vld [vmem:[#allocation3] sm:$0xff]
          %v1021 = vld [vmem:[#allocation3 + $0x8] sm:$0xff]
          %v1022 = vld [vmem:[#allocation3 + $0x10] sm:$0xff]
          %v1023 = vld [vmem:[#allocation3 + $0x18] sm:$0xff]
          %v1024 = vld [vmem:[#allocation3 + $0x20] sm:$0xff]
          %v1025 = vld [vmem:[#allocation3 + $0x28] sm:$0xff]
          %v1026 = vld [vmem:[#allocation3 + $0x30] sm:$0xff]
          %v1027 = vld [vmem:[#allocation3 + $0x38] sm:$0xff]
          %v1028 = vld [vmem:[#allocation3 + $0x40] sm:$0xff]
          %v1029 = vld [vmem:[#allocation3 + $0x48] sm:$0xff]
          %v1030 = vld [vmem:[#allocation3 + $0x50] sm:$0xff]
          %v1031 = vld [vmem:[#allocation3 + $0x58] sm:$0xff]
          %v1032 = vld [vmem:[#allocation3 + $0x60] sm:$0xff]
          %v1033 = vld [vmem:[#allocation3 + $0x68] sm:$0xff]
          %v1034 = vld [vmem:[#allocation3 + $0x70] sm:$0xff]
          %v1035 = vld [vmem:[#allocation3 + $0x78] sm:$0xff]
          %v1036 = vld [vmem:[#allocation3 + $0x80] sm:$0xff]
          %v1037 = vld [vmem:[#allocation3 + $0x88] sm:$0xff]
          %v1038 = vld [vmem:[#allocation3 + $0x90] sm:$0xff]
          %v1039 = vld [vmem:[#allocation3 + $0x98] sm:$0xff]
          %v1040 = vld [vmem:[#allocation3 + $0xa0] sm:$0xff]
          %v1041 = vld [vmem:[#allocation3 + $0xa8] sm:$0xff]
          %v1042 = vld [vmem:[#allocation3 + $0xb0] sm:$0xff]
          %v1043 = vld [vmem:[#allocation3 + $0xb8] sm:$0xff]
          %v1044 = vld [vmem:[#allocation3 + $0xc0] sm:$0xff]
          %v1045 = vld [vmem:[#allocation3 + $0xc8] sm:$0xff]
          %v1046 = vld [vmem:[#allocation3 + $0xd0] sm:$0xff]
          %v1047 = vld [vmem:[#allocation3 + $0xd8] sm:$0xff]
          %v1048 = vld [vmem:[#allocation3 + $0xe0] sm:$0xff]
          %v1049 = vld [vmem:[#allocation3 + $0xe8] sm:$0xff]
          %v1050 = vld [vmem:[#allocation3 + $0xf0] sm:$0xff]
          %v1051 = vld [vmem:[#allocation3 + $0xf8] sm:$0xff]
          %v1052 = vld [vmem:[#allocation3 + $0x100] sm:$0xff]
          %v1053 = vld [vmem:[#allocation3 + $0x108] sm:$0xff]
          %v1054 = vld [vmem:[#allocation3 + $0x110] sm:$0xff]
          %v1055 = vld [vmem:[#allocation3 + $0x118] sm:$0xff]
          %v1056 = vld [vmem:[#allocation3 + $0x120] sm:$0xff]
          %v1057 = vld [vmem:[#allocation3 + $0x128] sm:$0xff]
          %v1058 = vld [vmem:[#allocation3 + $0x130] sm:$0xff]
          %v1059 = vld [vmem:[#allocation3 + $0x138] sm:$0xff]
          %v1060 = vld [vmem:[#allocation3 + $0x140] sm:$0x33]
          %v1061 = vld [vmem:[%s670] sm:$0x3]
          %v1063 = vperm.slane %v1061, 0
          %v1064 = vperm.slane %v1061, 1
          %v1117 = vunpack.c.l.b16 %v970
          %v1118 = vunpack.c.h.b16 %v970
          %v1119 = vunpack.c.l.b16 %v971
          %v1120 = vunpack.c.l.b16 %v972
          %v1121 = vunpack.c.h.b16 %v972
          %v1122 = vunpack.c.l.b16 %v973
          %v1123 = vunpack.c.l.b16 %v974
          %v1124 = vunpack.c.h.b16 %v974
          %v1125 = vunpack.c.l.b16 %v975
          %v1126 = vunpack.c.l.b16 %v976
          %v1127 = vunpack.c.h.b16 %v976
          %v1128 = vunpack.c.l.b16 %v977
          %v1129 = vunpack.c.l.b16 %v978
          %v1130 = vunpack.c.h.b16 %v978
          %v1131 = vunpack.c.l.b16 %v979
          %v1132 = vunpack.c.l.b16 %v980
          %v1133 = vunpack.c.h.b16 %v980
          %v1134 = vunpack.c.l.b16 %v981
          %v1135 = vunpack.c.l.b16 %v982
          %v1136 = vunpack.c.h.b16 %v982
          %v1137 = vunpack.c.l.b16 %v983
          %v1138 = vunpack.c.l.b16 %v984
          %v1139 = vunpack.c.h.b16 %v984
          %v1140 = vunpack.c.l.b16 %v985
          %v1141 = vunpack.c.l.b16 %v986
          %v1142 = vunpack.c.h.b16 %v986
          %v1143 = vunpack.c.l.b16 %v987
          %v1144 = vunpack.c.l.b16 %v988
          %v1145 = vunpack.c.h.b16 %v988
          %v1146 = vunpack.c.l.b16 %v989
          %v1147 = vunpack.c.l.b16 %v990
          %v1148 = vunpack.c.h.b16 %v990
          %v1149 = vunpack.c.l.b16 %v991
          %v1150 = vunpack.c.l.b16 %v992
          %v1151 = vunpack.c.h.b16 %v992
          %v1152 = vunpack.c.l.b16 %v993
          %v1153 = vunpack.c.l.b16 %v994
          %v1154 = vunpack.c.h.b16 %v994
          %v1155 = vunpack.c.l.b16 %v995
          %v1156 = vunpack.c.l.b16 %v996
          %v1157 = vunpack.c.h.b16 %v996
          %v1158 = vunpack.c.l.b16 %v997
          %v1159 = vunpack.c.l.b16 %v998
          %v1160 = vunpack.c.h.b16 %v998
          %v1161 = vunpack.c.l.b16 %v999
          %v1162 = vunpack.c.l.b16 %v1000
          %v1163 = vunpack.c.h.b16 %v1000
          %v1164 = vunpack.c.l.b16 %v1001
          %v1165 = vunpack.c.l.b16 %v1002
          %v1166 = vunpack.c.h.b16 %v1002
          %v1167 = vunpack.c.l.b16 %v1003
          %v1168 = vunpack.c.l.b16 %v1004
          %v1169 = vunpack.c.h.b16 %v1004
          %v1170 = vunpack.c.l.b16 %v1005
          %v1171 = vunpack.c.l.b16 %v1006
          %v1172 = vunpack.c.h.b16 %v1006
          %v1173 = vunpack.c.l.b16 %v1007
          %v1174 = vunpack.c.l.b16 %v1008
          %v1175 = vunpack.c.h.b16 %v1008
          %v1176 = vunpack.c.l.b16 %v1009
          %v1177 = vunpack.c.l.b16 %v1010
          %v1178 = vunpack.c.h.b16 %v1010
          %v1179 = vunpack.c.l.b16 %v1011
          %v1180 = vunpack.c.l.b16 %v1012
          %v1181 = vunpack.c.h.b16 %v1012
          %v1182 = vunpack.c.l.b16 %v1013
          %v1183 = vunpack.c.l.b16 %v1014
          %v1184 = vunpack.c.h.b16 %v1014
          %v1185 = vunpack.c.l.b16 %v1015
          %v1186 = vunpack.c.l.b16 %v1016
          %v1187 = vunpack.c.h.b16 %v1016
          %v1188 = vunpack.c.l.b16 %v1017
          %v1189 = vunpack.c.l.b16 %v1018
          %v1190 = vunpack.c.h.b16 %v1018
          %v1191 = vunpack.c.l.b16 %v1019
          %v1192 = vpack.c.b16 %v1120, %v1117
          %v1193 = vpack.c.b16 %v1121, %v1118
          %v1194 = vpack.c.b16 %v1122, %v1119
          %v1195 = vpack.c.b16 %v1126, %v1123
          %v1196 = vpack.c.b16 %v1127, %v1124
          %v1197 = vpack.c.b16 %v1128, %v1125
          %v1198 = vpack.c.b16 %v1132, %v1129
          %v1199 = vpack.c.b16 %v1133, %v1130
          %v1200 = vpack.c.b16 %v1134, %v1131
          %v1201 = vpack.c.b16 %v1138, %v1135
          %v1202 = vpack.c.b16 %v1139, %v1136
          %v1203 = vpack.c.b16 %v1140, %v1137
          %v1204 = vpack.c.b16 %v1144, %v1141
          %v1205 = vpack.c.b16 %v1145, %v1142
          %v1206 = vpack.c.b16 %v1146, %v1143
          %v1207 = vpack.c.b16 %v1150, %v1147
          %v1208 = vpack.c.b16 %v1151, %v1148
          %v1209 = vpack.c.b16 %v1152, %v1149
          %v1210 = vpack.c.b16 %v1156, %v1153
          %v1211 = vpack.c.b16 %v1157, %v1154
          %v1212 = vpack.c.b16 %v1158, %v1155
          %v1213 = vpack.c.b16 %v1162, %v1159
          %v1214 = vpack.c.b16 %v1163, %v1160
          %v1215 = vpack.c.b16 %v1164, %v1161
          %v1216 = vpack.c.b16 %v1168, %v1165
          %v1217 = vpack.c.b16 %v1169, %v1166
          %v1218 = vpack.c.b16 %v1170, %v1167
          %v1219 = vpack.c.b16 %v1174, %v1171
          %v1220 = vpack.c.b16 %v1175, %v1172
          %v1221 = vpack.c.b16 %v1176, %v1173
          %v1222 = vpack.c.b16 %v1180, %v1177
          %v1223 = vpack.c.b16 %v1181, %v1178
          %v1224 = vpack.c.b16 %v1182, %v1179
          %v1225 = vpack.c.b16 %v1186, %v1183
          %v1226 = vpack.c.b16 %v1187, %v1184
          %v1227 = vpack.c.b16 %v1188, %v1185
          %v1228 = vpack.c.b16 %v1189, %v1189
          %v1229 = vpack.c.b16 %v1190, %v1190
          %v1230 = vpack.c.b16 %v1191, %v1191
          %v1298 = vunpack.c.l.b16 %v1020
          %v1299 = vunpack.c.h.b16 %v1020
          %v1300 = vunpack.c.l.b16 %v1021
          %v1301 = vunpack.c.h.b16 %v1021
          %v1302 = vunpack.c.l.b16 %v1022
          %v1303 = vunpack.c.h.b16 %v1022
          %v1304 = vunpack.c.l.b16 %v1023
          %v1305 = vunpack.c.h.b16 %v1023
          %v1306 = vunpack.c.l.b16 %v1024
          %v1307 = vunpack.c.h.b16 %v1024
          %v1308 = vunpack.c.l.b16 %v1025
          %v1309 = vunpack.c.h.b16 %v1025
          %v1310 = vunpack.c.l.b16 %v1026
          %v1311 = vunpack.c.h.b16 %v1026
          %v1312 = vunpack.c.l.b16 %v1027
          %v1313 = vunpack.c.h.b16 %v1027
          %v1314 = vunpack.c.l.b16 %v1028
          %v1315 = vunpack.c.h.b16 %v1028
          %v1316 = vunpack.c.l.b16 %v1029
          %v1317 = vunpack.c.h.b16 %v1029
          %v1318 = vunpack.c.l.b16 %v1030
          %v1319 = vunpack.c.h.b16 %v1030
          %v1320 = vunpack.c.l.b16 %v1031
          %v1321 = vunpack.c.h.b16 %v1031
          %v1322 = vunpack.c.l.b16 %v1032
          %v1323 = vunpack.c.h.b16 %v1032
          %v1324 = vunpack.c.l.b16 %v1033
          %v1325 = vunpack.c.h.b16 %v1033
          %v1326 = vunpack.c.l.b16 %v1034
          %v1327 = vunpack.c.h.b16 %v1034
          %v1328 = vunpack.c.l.b16 %v1035
          %v1329 = vunpack.c.h.b16 %v1035
          %v1330 = vunpack.c.l.b16 %v1036
          %v1331 = vunpack.c.h.b16 %v1036
          %v1332 = vunpack.c.l.b16 %v1037
          %v1333 = vunpack.c.h.b16 %v1037
          %v1334 = vunpack.c.l.b16 %v1038
          %v1335 = vunpack.c.h.b16 %v1038
          %v1336 = vunpack.c.l.b16 %v1039
          %v1337 = vunpack.c.h.b16 %v1039
          %v1338 = vunpack.c.l.b16 %v1040
          %v1339 = vunpack.c.h.b16 %v1040
          %v1340 = vunpack.c.l.b16 %v1041
          %v1341 = vunpack.c.h.b16 %v1041
          %v1342 = vunpack.c.l.b16 %v1042
          %v1343 = vunpack.c.h.b16 %v1042
          %v1344 = vunpack.c.l.b16 %v1043
          %v1345 = vunpack.c.h.b16 %v1043
          %v1346 = vunpack.c.l.b16 %v1044
          %v1347 = vunpack.c.h.b16 %v1044
          %v1348 = vunpack.c.l.b16 %v1045
          %v1349 = vunpack.c.h.b16 %v1045
          %v1350 = vunpack.c.l.b16 %v1046
          %v1351 = vunpack.c.h.b16 %v1046
          %v1352 = vunpack.c.l.b16 %v1047
          %v1353 = vunpack.c.h.b16 %v1047
          %v1354 = vunpack.c.l.b16 %v1048
          %v1355 = vunpack.c.h.b16 %v1048
          %v1356 = vunpack.c.l.b16 %v1049
          %v1357 = vunpack.c.h.b16 %v1049
          %v1358 = vunpack.c.l.b16 %v1050
          %v1359 = vunpack.c.h.b16 %v1050
          %v1360 = vunpack.c.l.b16 %v1051
          %v1361 = vunpack.c.h.b16 %v1051
          %v1362 = vunpack.c.l.b16 %v1052
          %v1363 = vunpack.c.h.b16 %v1052
          %v1364 = vunpack.c.l.b16 %v1053
          %v1365 = vunpack.c.h.b16 %v1053
          %v1366 = vunpack.c.l.b16 %v1054
          %v1367 = vunpack.c.h.b16 %v1054
          %v1368 = vunpack.c.l.b16 %v1055
          %v1369 = vunpack.c.h.b16 %v1055
          %v1370 = vunpack.c.l.b16 %v1056
          %v1371 = vunpack.c.h.b16 %v1056
          %v1372 = vunpack.c.l.b16 %v1057
          %v1373 = vunpack.c.h.b16 %v1057
          %v1374 = vunpack.c.l.b16 %v1058
          %v1375 = vunpack.c.h.b16 %v1058
          %v1376 = vunpack.c.l.b16 %v1059
          %v1377 = vunpack.c.h.b16 %v1059
          %v1378 = vunpack.c.l.b16 %v1060
          %v1379 = vunpack.c.h.b16 %v1060
          %v1380 = vpack.c.b16 %v1300, %v1298
          %v1381 = vpack.c.b16 %v1301, %v1299
          %v1382 = vpack.c.b16 %v1304, %v1302
          %v1383 = vpack.c.b16 %v1305, %v1303
          %v1384 = vpack.c.b16 %v1308, %v1306
          %v1385 = vpack.c.b16 %v1309, %v1307
          %v1386 = vpack.c.b16 %v1312, %v1310
          %v1387 = vpack.c.b16 %v1313, %v1311
          %v1388 = vpack.c.b16 %v1316, %v1314
          %v1389 = vpack.c.b16 %v1317, %v1315
          %v1390 = vpack.c.b16 %v1320, %v1318
          %v1391 = vpack.c.b16 %v1321, %v1319
          %v1392 = vpack.c.b16 %v1324, %v1322
          %v1393 = vpack.c.b16 %v1325, %v1323
          %v1394 = vpack.c.b16 %v1328, %v1326
          %v1395 = vpack.c.b16 %v1329, %v1327
          %v1396 = vpack.c.b16 %v1332, %v1330
          %v1397 = vpack.c.b16 %v1333, %v1331
          %v1398 = vpack.c.b16 %v1336, %v1334
          %v1399 = vpack.c.b16 %v1337, %v1335
          %v1400 = vpack.c.b16 %v1340, %v1338
          %v1401 = vpack.c.b16 %v1341, %v1339
          %v1402 = vpack.c.b16 %v1344, %v1342
          %v1403 = vpack.c.b16 %v1345, %v1343
          %v1404 = vpack.c.b16 %v1348, %v1346
          %v1405 = vpack.c.b16 %v1349, %v1347
          %v1406 = vpack.c.b16 %v1352, %v1350
          %v1407 = vpack.c.b16 %v1353, %v1351
          %v1408 = vpack.c.b16 %v1356, %v1354
          %v1409 = vpack.c.b16 %v1357, %v1355
          %v1410 = vpack.c.b16 %v1360, %v1358
          %v1411 = vpack.c.b16 %v1361, %v1359
          %v1412 = vpack.c.b16 %v1364, %v1362
          %v1413 = vpack.c.b16 %v1365, %v1363
          %v1414 = vpack.c.b16 %v1368, %v1366
          %v1415 = vpack.c.b16 %v1369, %v1367
          %v1416 = vpack.c.b16 %v1372, %v1370
          %v1417 = vpack.c.b16 %v1373, %v1371
          %v1418 = vpack.c.b16 %v1376, %v1374
          %v1419 = vpack.c.b16 %v1377, %v1375
          %v1420 = vpack.c.b16 %v1378, %v1378
          %v1421 = vpack.c.b16 %v1379, %v1379
          %vm1462 = vcmask 556032
          %v1464 = vsel %vm1462, %v1194, 0
          %v1467 = vsel %vm1462, %v1197, 0
          %v1470 = vsel %vm1462, %v1200, 0
          %v1473 = vsel %vm1462, %v1203, 0
          %v1476 = vsel %vm1462, %v1206, 0
          %v1479 = vsel %vm1462, %v1209, 0
          %v1482 = vsel %vm1462, %v1212, 0
          %v1485 = vsel %vm1462, %v1215, 0
          %v1488 = vsel %vm1462, %v1218, 0
          %v1491 = vsel %vm1462, %v1221, 0
          %v1494 = vsel %vm1462, %v1224, 0
          %v1497 = vsel %vm1462, %v1227, 0
          %v1500 = vsel %vm1462, %v1230, 0
          %vm1502 = vcmask 1041408
          %v1504 = vsel %vm1502, %v1420, 0
          %v1507 = vsel %vm1502, %v1421, 0
          %1509 = vmatpush.bf16.msra.mxu0 %v1394
          %1510 = vmatpush.bf16.msra.mxu0 %v1392
          %1511 = vmatpush.bf16.msra.mxu0 %v1390
          %1512 = vmatpush.bf16.msra.mxu0 %v1388
          %1513 = vmatpush.bf16.msra.mxu0 %v1386
          %1514 = vmatpush.bf16.msra.mxu0 %v1384
          %1515 = vmatpush.bf16.msra.mxu0 %v1382
          %1516 = vmatpush.bf16.msra.mxu0 %v1380
          %1517 = vmatmul.bf16.gmra.mxu0 %v1192
          %v1518 = vpop.f32.mrf.mxu0
          %v1519 = vadd.f32 %v1063, %v1518
          %v1520 = vpop.f32.mrf.mxu0
          %v1521 = vadd.f32 %v1063, %v1520
          %1522 = vmatmul.bf16.gmra.mxu0 %v1195
          %v1523 = vpop.f32.mrf.mxu0
          %v1524 = vadd.f32 %v1063, %v1523
          %v1525 = vpop.f32.mrf.mxu0
          %v1526 = vadd.f32 %v1063, %v1525
          %1527 = vmatmul.bf16.gmra.mxu0 %v1198
          %v1528 = vpop.f32.mrf.mxu0
          %v1529 = vadd.f32 %v1063, %v1528
          %v1530 = vpop.f32.mrf.mxu0
          %v1531 = vadd.f32 %v1063, %v1530
          %1532 = vmatmul.bf16.gmra.mxu0 %v1201
          %v1533 = vpop.f32.mrf.mxu0
          %v1534 = vadd.f32 %v1063, %v1533
          %v1535 = vpop.f32.mrf.mxu0
          %v1536 = vadd.f32 %v1063, %v1535
          %1537 = vmatmul.bf16.gmra.mxu0 %v1204
          %v1538 = vpop.f32.mrf.mxu0
          %v1539 = vadd.f32 %v1063, %v1538
          %v1540 = vpop.f32.mrf.mxu0
          %v1541 = vadd.f32 %v1063, %v1540
          %1542 = vmatmul.bf16.gmra.mxu0 %v1207
          %v1543 = vpop.f32.mrf.mxu0
          %v1544 = vadd.f32 %v1063, %v1543
          %v1545 = vpop.f32.mrf.mxu0
          %v1546 = vadd.f32 %v1063, %v1545
          %1547 = vmatmul.bf16.gmra.mxu0 %v1210
          %v1548 = vpop.f32.mrf.mxu0
          %v1549 = vadd.f32 %v1063, %v1548
          %v1550 = vpop.f32.mrf.mxu0
          %v1551 = vadd.f32 %v1063, %v1550
          %1552 = vmatmul.bf16.gmra.mxu0 %v1213
          %v1553 = vpop.f32.mrf.mxu0
          %v1554 = vadd.f32 %v1063, %v1553
          %v1555 = vpop.f32.mrf.mxu0
          %v1556 = vadd.f32 %v1063, %v1555
          %1557 = vmatmul.bf16.gmra.mxu0 %v1216
          %v1558 = vpop.f32.mrf.mxu0
          %v1559 = vadd.f32 %v1063, %v1558
          %v1560 = vpop.f32.mrf.mxu0
          %v1561 = vadd.f32 %v1063, %v1560
          %1562 = vmatmul.bf16.gmra.mxu0 %v1219
          %v1563 = vpop.f32.mrf.mxu0
          %v1564 = vadd.f32 %v1063, %v1563
          %v1565 = vpop.f32.mrf.mxu0
          %v1566 = vadd.f32 %v1063, %v1565
          %1567 = vmatmul.bf16.gmra.mxu0 %v1222
          %v1568 = vpop.f32.mrf.mxu0
          %v1569 = vadd.f32 %v1063, %v1568
          %v1570 = vpop.f32.mrf.mxu0
          %v1571 = vadd.f32 %v1063, %v1570
          %1572 = vmatmul.bf16.gmra.mxu0 %v1225
          %v1573 = vpop.f32.mrf.mxu0
          %v1574 = vadd.f32 %v1063, %v1573
          %v1575 = vpop.f32.mrf.mxu0
          %v1576 = vadd.f32 %v1063, %v1575
          %1577 = vmatmul.bf16.gmra.mxu0 %v1228
          %v1578 = vpop.f32.mrf.mxu0
          %v1579 = vadd.f32 %v1063, %v1578
          %v1580 = vpop.f32.mrf.mxu0
          %1581 = vdwg.mxu0
          %1582 = vmatpush.bf16.msra.mxu0 %v1410
          %1583 = vmatpush.bf16.msra.mxu0 %v1408
          %1584 = vmatpush.bf16.msra.mxu0 %v1406
          %1585 = vmatpush.bf16.msra.mxu0 %v1404
          %1586 = vmatpush.bf16.msra.mxu0 %v1402
          %1587 = vmatpush.bf16.msra.mxu0 %v1400
          %1588 = vmatpush.bf16.msra.mxu0 %v1398
          %1589 = vmatpush.bf16.msra.mxu0 %v1396
          %1590 = vmatmul.bf16.gmra.mxu0 %v1193
          %v1591 = vpop.f32.mrf.mxu0
          %v1592 = vadd.f32 %v1519, %v1591
          %v1593 = vpop.f32.mrf.mxu0
          %v1594 = vadd.f32 %v1521, %v1593
          %1595 = vmatmul.bf16.gmra.mxu0 %v1196
          %v1596 = vpop.f32.mrf.mxu0
          %v1597 = vadd.f32 %v1524, %v1596
          %v1598 = vpop.f32.mrf.mxu0
          %v1599 = vadd.f32 %v1526, %v1598
          %1600 = vmatmul.bf16.gmra.mxu0 %v1199
          %v1601 = vpop.f32.mrf.mxu0
          %v1602 = vadd.f32 %v1529, %v1601
          %v1603 = vpop.f32.mrf.mxu0
          %v1604 = vadd.f32 %v1531, %v1603
          %1605 = vmatmul.bf16.gmra.mxu0 %v1202
          %v1606 = vpop.f32.mrf.mxu0
          %v1607 = vadd.f32 %v1534, %v1606
          %v1608 = vpop.f32.mrf.mxu0
          %v1609 = vadd.f32 %v1536, %v1608
          %1610 = vmatmul.bf16.gmra.mxu0 %v1205
          %v1611 = vpop.f32.mrf.mxu0
          %v1612 = vadd.f32 %v1539, %v1611
          %v1613 = vpop.f32.mrf.mxu0
          %v1614 = vadd.f32 %v1541, %v1613
          %1615 = vmatmul.bf16.gmra.mxu0 %v1208
          %v1616 = vpop.f32.mrf.mxu0
          %v1617 = vadd.f32 %v1544, %v1616
          %v1618 = vpop.f32.mrf.mxu0
          %v1619 = vadd.f32 %v1546, %v1618
          %1620 = vmatmul.bf16.gmra.mxu0 %v1211
          %v1621 = vpop.f32.mrf.mxu0
          %v1622 = vadd.f32 %v1549, %v1621
          %v1623 = vpop.f32.mrf.mxu0
          %v1624 = vadd.f32 %v1551, %v1623
          %1625 = vmatmul.bf16.gmra.mxu0 %v1214
          %v1626 = vpop.f32.mrf.mxu0
          %v1627 = vadd.f32 %v1554, %v1626
          %v1628 = vpop.f32.mrf.mxu0
          %v1629 = vadd.f32 %v1556, %v1628
          %1630 = vmatmul.bf16.gmra.mxu0 %v1217
          %v1631 = vpop.f32.mrf.mxu0
          %v1632 = vadd.f32 %v1559, %v1631
          %v1633 = vpop.f32.mrf.mxu0
          %v1634 = vadd.f32 %v1561, %v1633
          %1635 = vmatmul.bf16.gmra.mxu0 %v1220
          %v1636 = vpop.f32.mrf.mxu0
          %v1637 = vadd.f32 %v1564, %v1636
          %v1638 = vpop.f32.mrf.mxu0
          %v1639 = vadd.f32 %v1566, %v1638
          %1640 = vmatmul.bf16.gmra.mxu0 %v1223
          %v1641 = vpop.f32.mrf.mxu0
          %v1642 = vadd.f32 %v1569, %v1641
          %v1643 = vpop.f32.mrf.mxu0
          %v1644 = vadd.f32 %v1571, %v1643
          %1645 = vmatmul.bf16.gmra.mxu0 %v1226
          %v1646 = vpop.f32.mrf.mxu0
          %v1647 = vadd.f32 %v1574, %v1646
          %v1648 = vpop.f32.mrf.mxu0
          %v1649 = vadd.f32 %v1576, %v1648
          %1650 = vmatmul.bf16.gmra.mxu0 %v1229
          %v1651 = vpop.f32.mrf.mxu0
          %v1652 = vadd.f32 %v1579, %v1651
          %v1653 = vpop.f32.mrf.mxu0
          %1654 = vdwg.mxu0
          %1655 = vmatpush.bf16.msra.mxu0 0
          %1656 = vmatpush.bf16.msra.mxu0 0
          %1657 = vmatpush.bf16.msra.mxu0 0
          %1658 = vmatpush.bf16.msra.mxu0 %v1504
          %1659 = vmatpush.bf16.msra.mxu0 %v1418
          %1660 = vmatpush.bf16.msra.mxu0 %v1416
          %1661 = vmatpush.bf16.msra.mxu0 %v1414
          %1662 = vmatpush.bf16.msra.mxu0 %v1412
          %1663 = vmatmul.bf16.gmra.mxu0 %v1464
          %v1664 = vpop.f32.mrf.mxu0
          %v1665 = vadd.f32 %v1592, %v1664
          %v1666 = vpop.f32.mrf.mxu0
          %v1667 = vadd.f32 %v1594, %v1666
          %1668 = vmatmul.bf16.gmra.mxu0 %v1467
          %v1669 = vpop.f32.mrf.mxu0
          %v1670 = vadd.f32 %v1597, %v1669
          %v1671 = vpop.f32.mrf.mxu0
          %v1672 = vadd.f32 %v1599, %v1671
          %1673 = vmatmul.bf16.gmra.mxu0 %v1470
          %v1674 = vpop.f32.mrf.mxu0
          %v1675 = vadd.f32 %v1602, %v1674
          %v1676 = vpop.f32.mrf.mxu0
          %v1677 = vadd.f32 %v1604, %v1676
          %1678 = vmatmul.bf16.gmra.mxu0 %v1473
          %v1679 = vpop.f32.mrf.mxu0
          %v1680 = vadd.f32 %v1607, %v1679
          %v1681 = vpop.f32.mrf.mxu0
          %v1682 = vadd.f32 %v1609, %v1681
          %1683 = vmatmul.bf16.gmra.mxu0 %v1476
          %v1684 = vpop.f32.mrf.mxu0
          %v1685 = vadd.f32 %v1612, %v1684
          %v1686 = vpop.f32.mrf.mxu0
          %v1687 = vadd.f32 %v1614, %v1686
          %1688 = vmatmul.bf16.gmra.mxu0 %v1479
          %v1689 = vpop.f32.mrf.mxu0
          %v1690 = vadd.f32 %v1617, %v1689
          %v1691 = vpop.f32.mrf.mxu0
          %v1692 = vadd.f32 %v1619, %v1691
          %1693 = vmatmul.bf16.gmra.mxu0 %v1482
          %v1694 = vpop.f32.mrf.mxu0
          %v1695 = vadd.f32 %v1622, %v1694
          %v1696 = vpop.f32.mrf.mxu0
          %v1697 = vadd.f32 %v1624, %v1696
          %1698 = vmatmul.bf16.gmra.mxu0 %v1485
          %v1699 = vpop.f32.mrf.mxu0
          %v1700 = vadd.f32 %v1627, %v1699
          %v1701 = vpop.f32.mrf.mxu0
          %v1702 = vadd.f32 %v1629, %v1701
          %1703 = vmatmul.bf16.gmra.mxu0 %v1488
          %v1704 = vpop.f32.mrf.mxu0
          %v1705 = vadd.f32 %v1632, %v1704
          %v1706 = vpop.f32.mrf.mxu0
          %v1707 = vadd.f32 %v1634, %v1706
          %1708 = vmatmul.bf16.gmra.mxu0 %v1491
          %v1709 = vpop.f32.mrf.mxu0
          %v1710 = vadd.f32 %v1637, %v1709
          %v1711 = vpop.f32.mrf.mxu0
          %v1712 = vadd.f32 %v1639, %v1711
          %1713 = vmatmul.bf16.gmra.mxu0 %v1494
          %v1714 = vpop.f32.mrf.mxu0
          %v1715 = vadd.f32 %v1642, %v1714
          %v1716 = vpop.f32.mrf.mxu0
          %v1717 = vadd.f32 %v1644, %v1716
          %1718 = vmatmul.bf16.gmra.mxu0 %v1497
          %v1719 = vpop.f32.mrf.mxu0
          %v1720 = vadd.f32 %v1647, %v1719
          %v1721 = vpop.f32.mrf.mxu0
          %v1722 = vadd.f32 %v1649, %v1721
          %1723 = vmatmul.bf16.gmra.mxu0 %v1500
          %v1724 = vpop.f32.mrf.mxu0
          %v1725 = vadd.f32 %v1652, %v1724
          %v1726 = vpop.f32.mrf.mxu0
          %1727 = vdwg.mxu0
          %1728 = vmatpush.bf16.msra.mxu0 %v1395
          %1729 = vmatpush.bf16.msra.mxu0 %v1393
          %1730 = vmatpush.bf16.msra.mxu0 %v1391
          %1731 = vmatpush.bf16.msra.mxu0 %v1389
          %1732 = vmatpush.bf16.msra.mxu0 %v1387
          %1733 = vmatpush.bf16.msra.mxu0 %v1385
          %1734 = vmatpush.bf16.msra.mxu0 %v1383
          %1735 = vmatpush.bf16.msra.mxu0 %v1381
          %1736 = vmatmul.bf16.gmra.mxu0 %v1192
          %v1737 = vpop.f32.mrf.mxu0
          %v1738 = vadd.f32 %v1064, %v1737
          %v1739 = vpop.f32.mrf.mxu0
          %v1740 = vadd.f32 %v1064, %v1739
          %1741 = vmatmul.bf16.gmra.mxu0 %v1195
          %v1742 = vpop.f32.mrf.mxu0
          %v1743 = vadd.f32 %v1064, %v1742
          %v1744 = vpop.f32.mrf.mxu0
          %v1745 = vadd.f32 %v1064, %v1744
          %1746 = vmatmul.bf16.gmra.mxu0 %v1198
          %v1747 = vpop.f32.mrf.mxu0
          %v1748 = vadd.f32 %v1064, %v1747
          %v1749 = vpop.f32.mrf.mxu0
          %v1750 = vadd.f32 %v1064, %v1749
          %1751 = vmatmul.bf16.gmra.mxu0 %v1201
          %v1752 = vpop.f32.mrf.mxu0
          %v1753 = vadd.f32 %v1064, %v1752
          %v1754 = vpop.f32.mrf.mxu0
          %v1755 = vadd.f32 %v1064, %v1754
          %1756 = vmatmul.bf16.gmra.mxu0 %v1204
          %v1757 = vpop.f32.mrf.mxu0
          %v1758 = vadd.f32 %v1064, %v1757
          %v1759 = vpop.f32.mrf.mxu0
          %v1760 = vadd.f32 %v1064, %v1759
          %1761 = vmatmul.bf16.gmra.mxu0 %v1207
          %v1762 = vpop.f32.mrf.mxu0
          %v1763 = vadd.f32 %v1064, %v1762
          %v1764 = vpop.f32.mrf.mxu0
          %v1765 = vadd.f32 %v1064, %v1764
          %1766 = vmatmul.bf16.gmra.mxu0 %v1210
          %v1767 = vpop.f32.mrf.mxu0
          %v1768 = vadd.f32 %v1064, %v1767
          %v1769 = vpop.f32.mrf.mxu0
          %v1770 = vadd.f32 %v1064, %v1769
          %1771 = vmatmul.bf16.gmra.mxu0 %v1213
          %v1772 = vpop.f32.mrf.mxu0
          %v1773 = vadd.f32 %v1064, %v1772
          %v1774 = vpop.f32.mrf.mxu0
          %v1775 = vadd.f32 %v1064, %v1774
          %1776 = vmatmul.bf16.gmra.mxu0 %v1216
          %v1777 = vpop.f32.mrf.mxu0
          %v1778 = vadd.f32 %v1064, %v1777
          %v1779 = vpop.f32.mrf.mxu0
          %v1780 = vadd.f32 %v1064, %v1779
          %1781 = vmatmul.bf16.gmra.mxu0 %v1219
          %v1782 = vpop.f32.mrf.mxu0
          %v1783 = vadd.f32 %v1064, %v1782
          %v1784 = vpop.f32.mrf.mxu0
          %v1785 = vadd.f32 %v1064, %v1784
          %1786 = vmatmul.bf16.gmra.mxu0 %v1222
          %v1787 = vpop.f32.mrf.mxu0
          %v1788 = vadd.f32 %v1064, %v1787
          %v1789 = vpop.f32.mrf.mxu0
          %v1790 = vadd.f32 %v1064, %v1789
          %1791 = vmatmul.bf16.gmra.mxu0 %v1225
          %v1792 = vpop.f32.mrf.mxu0
          %v1793 = vadd.f32 %v1064, %v1792
          %v1794 = vpop.f32.mrf.mxu0
          %v1795 = vadd.f32 %v1064, %v1794
          %1796 = vmatmul.bf16.gmra.mxu0 %v1228
          %v1797 = vpop.f32.mrf.mxu0
          %v1798 = vadd.f32 %v1064, %v1797
          %v1799 = vpop.f32.mrf.mxu0
          %1800 = vdwg.mxu0
          %1801 = vmatpush.bf16.msra.mxu0 %v1411
          %1802 = vmatpush.bf16.msra.mxu0 %v1409
          %1803 = vmatpush.bf16.msra.mxu0 %v1407
          %1804 = vmatpush.bf16.msra.mxu0 %v1405
          %1805 = vmatpush.bf16.msra.mxu0 %v1403
          %1806 = vmatpush.bf16.msra.mxu0 %v1401
          %1807 = vmatpush.bf16.msra.mxu0 %v1399
          %1808 = vmatpush.bf16.msra.mxu0 %v1397
          %1809 = vmatmul.bf16.gmra.mxu0 %v1193
          %v1810 = vpop.f32.mrf.mxu0
          %v1811 = vadd.f32 %v1738, %v1810
          %v1812 = vpop.f32.mrf.mxu0
          %v1813 = vadd.f32 %v1740, %v1812
          %1814 = vmatmul.bf16.gmra.mxu0 %v1196
          %v1815 = vpop.f32.mrf.mxu0
          %v1816 = vadd.f32 %v1743, %v1815
          %v1817 = vpop.f32.mrf.mxu0
          %v1818 = vadd.f32 %v1745, %v1817
          %1819 = vmatmul.bf16.gmra.mxu0 %v1199
          %v1820 = vpop.f32.mrf.mxu0
          %v1821 = vadd.f32 %v1748, %v1820
          %v1822 = vpop.f32.mrf.mxu0
          %v1823 = vadd.f32 %v1750, %v1822
          %1824 = vmatmul.bf16.gmra.mxu0 %v1202
          %v1825 = vpop.f32.mrf.mxu0
          %v1826 = vadd.f32 %v1753, %v1825
          %v1827 = vpop.f32.mrf.mxu0
          %v1828 = vadd.f32 %v1755, %v1827
          %1829 = vmatmul.bf16.gmra.mxu0 %v1205
          %v1830 = vpop.f32.mrf.mxu0
          %v1831 = vadd.f32 %v1758, %v1830
          %v1832 = vpop.f32.mrf.mxu0
          %v1833 = vadd.f32 %v1760, %v1832
          %1834 = vmatmul.bf16.gmra.mxu0 %v1208
          %v1835 = vpop.f32.mrf.mxu0
          %v1836 = vadd.f32 %v1763, %v1835
          %v1837 = vpop.f32.mrf.mxu0
          %v1838 = vadd.f32 %v1765, %v1837
          %1839 = vmatmul.bf16.gmra.mxu0 %v1211
          %v1840 = vpop.f32.mrf.mxu0
          %v1841 = vadd.f32 %v1768, %v1840
          %v1842 = vpop.f32.mrf.mxu0
          %v1843 = vadd.f32 %v1770, %v1842
          %1844 = vmatmul.bf16.gmra.mxu0 %v1214
          %v1845 = vpop.f32.mrf.mxu0
          %v1846 = vadd.f32 %v1773, %v1845
          %v1847 = vpop.f32.mrf.mxu0
          %v1848 = vadd.f32 %v1775, %v1847
          %1849 = vmatmul.bf16.gmra.mxu0 %v1217
          %v1850 = vpop.f32.mrf.mxu0
          %v1851 = vadd.f32 %v1778, %v1850
          %v1852 = vpop.f32.mrf.mxu0
          %v1853 = vadd.f32 %v1780, %v1852
          %1854 = vmatmul.bf16.gmra.mxu0 %v1220
          %v1855 = vpop.f32.mrf.mxu0
          %v1856 = vadd.f32 %v1783, %v1855
          %v1857 = vpop.f32.mrf.mxu0
          %v1858 = vadd.f32 %v1785, %v1857
          %1859 = vmatmul.bf16.gmra.mxu0 %v1223
          %v1860 = vpop.f32.mrf.mxu0
          %v1861 = vadd.f32 %v1788, %v1860
          %v1862 = vpop.f32.mrf.mxu0
          %v1863 = vadd.f32 %v1790, %v1862
          %1864 = vmatmul.bf16.gmra.mxu0 %v1226
          %v1865 = vpop.f32.mrf.mxu0
          %v1866 = vadd.f32 %v1793, %v1865
          %v1867 = vpop.f32.mrf.mxu0
          %v1868 = vadd.f32 %v1795, %v1867
          %1869 = vmatmul.bf16.gmra.mxu0 %v1229
          %v1870 = vpop.f32.mrf.mxu0
          %v1871 = vadd.f32 %v1798, %v1870
          %v1872 = vpop.f32.mrf.mxu0
          %1873 = vdwg.mxu0
          %1874 = vmatpush.bf16.msra.mxu0 0
          %1875 = vmatpush.bf16.msra.mxu0 0
          %1876 = vmatpush.bf16.msra.mxu0 0
          %1877 = vmatpush.bf16.msra.mxu0 %v1507
          %1878 = vmatpush.bf16.msra.mxu0 %v1419
          %1879 = vmatpush.bf16.msra.mxu0 %v1417
          %1880 = vmatpush.bf16.msra.mxu0 %v1415
          %1881 = vmatpush.bf16.msra.mxu0 %v1413
          %1882 = vmatmul.bf16.gmra.mxu0 %v1464
          %v1883 = vpop.f32.mrf.mxu0
          %v1884 = vadd.f32 %v1811, %v1883
          %v1885 = vpop.f32.mrf.mxu0
          %v1886 = vadd.f32 %v1813, %v1885
          %1887 = vmatmul.bf16.gmra.mxu0 %v1467
          %v1888 = vpop.f32.mrf.mxu0
          %v1889 = vadd.f32 %v1816, %v1888
          %v1890 = vpop.f32.mrf.mxu0
          %v1891 = vadd.f32 %v1818, %v1890
          %1892 = vmatmul.bf16.gmra.mxu0 %v1470
          %v1893 = vpop.f32.mrf.mxu0
          %v1894 = vadd.f32 %v1821, %v1893
          %v1895 = vpop.f32.mrf.mxu0
          %v1896 = vadd.f32 %v1823, %v1895
          %1897 = vmatmul.bf16.gmra.mxu0 %v1473
          %v1898 = vpop.f32.mrf.mxu0
          %v1899 = vadd.f32 %v1826, %v1898
          %v1900 = vpop.f32.mrf.mxu0
          %v1901 = vadd.f32 %v1828, %v1900
          %1902 = vmatmul.bf16.gmra.mxu0 %v1476
          %v1903 = vpop.f32.mrf.mxu0
          %v1904 = vadd.f32 %v1831, %v1903
          %v1905 = vpop.f32.mrf.mxu0
          %v1906 = vadd.f32 %v1833, %v1905
          %1907 = vmatmul.bf16.gmra.mxu0 %v1479
          %v1908 = vpop.f32.mrf.mxu0
          %v1909 = vadd.f32 %v1836, %v1908
          %v1910 = vpop.f32.mrf.mxu0
          %v1911 = vadd.f32 %v1838, %v1910
          %1912 = vmatmul.bf16.gmra.mxu0 %v1482
          %v1913 = vpop.f32.mrf.mxu0
          %v1914 = vadd.f32 %v1841, %v1913
          %v1915 = vpop.f32.mrf.mxu0
          %v1916 = vadd.f32 %v1843, %v1915
          %1917 = vmatmul.bf16.gmra.mxu0 %v1485
          %v1918 = vpop.f32.mrf.mxu0
          %v1919 = vadd.f32 %v1846, %v1918
          %v1920 = vpop.f32.mrf.mxu0
          %v1921 = vadd.f32 %v1848, %v1920
          %1922 = vmatmul.bf16.gmra.mxu0 %v1488
          %v1923 = vpop.f32.mrf.mxu0
          %v1924 = vadd.f32 %v1851, %v1923
          %v1925 = vpop.f32.mrf.mxu0
          %v1926 = vadd.f32 %v1853, %v1925
          %1927 = vmatmul.bf16.gmra.mxu0 %v1491
          %v1928 = vpop.f32.mrf.mxu0
          %v1929 = vadd.f32 %v1856, %v1928
          %v1930 = vpop.f32.mrf.mxu0
          %v1931 = vadd.f32 %v1858, %v1930
          %1932 = vmatmul.bf16.gmra.mxu0 %v1494
          %v1933 = vpop.f32.mrf.mxu0
          %v1934 = vadd.f32 %v1861, %v1933
          %v1935 = vpop.f32.mrf.mxu0
          %v1936 = vadd.f32 %v1863, %v1935
          %1937 = vmatmul.bf16.gmra.mxu0 %v1497
          %v1938 = vpop.f32.mrf.mxu0
          %v1939 = vadd.f32 %v1866, %v1938
          %v1940 = vpop.f32.mrf.mxu0
          %v1941 = vadd.f32 %v1868, %v1940
          %1942 = vmatmul.bf16.gmra.mxu0 %v1500
          %v1943 = vpop.f32.mrf.mxu0
          %v1944 = vadd.f32 %v1871, %v1943
          %v1945 = vpop.f32.mrf.mxu0
          %1946 = vdwg.mxu0
          %v1947 = vmax.f32 %v1665, 0.0
          %v1948 = vmax.f32 %v1884, 0.0
          %v1949 = vmax.f32 %v1667, 0.0
          %v1950 = vmax.f32 %v1886, 0.0
          %v1951 = vmax.f32 %v1670, 0.0
          %v1952 = vmax.f32 %v1889, 0.0
          %v1953 = vmax.f32 %v1672, 0.0
          %v1954 = vmax.f32 %v1891, 0.0
          %v1955 = vmax.f32 %v1675, 0.0
          %v1956 = vmax.f32 %v1894, 0.0
          %v1957 = vmax.f32 %v1677, 0.0
          %v1958 = vmax.f32 %v1896, 0.0
          %v1959 = vmax.f32 %v1680, 0.0
          %v1960 = vmax.f32 %v1899, 0.0
          %v1961 = vmax.f32 %v1682, 0.0
          %v1962 = vmax.f32 %v1901, 0.0
          %v1963 = vmax.f32 %v1685, 0.0
          %v1964 = vmax.f32 %v1904, 0.0
          %v1965 = vmax.f32 %v1687, 0.0
          %v1966 = vmax.f32 %v1906, 0.0
          %v1967 = vmax.f32 %v1690, 0.0
          %v1968 = vmax.f32 %v1909, 0.0
          %v1969 = vmax.f32 %v1692, 0.0
          %v1970 = vmax.f32 %v1911, 0.0
          %v1971 = vmax.f32 %v1695, 0.0
          %v1972 = vmax.f32 %v1914, 0.0
          %v1973 = vmax.f32 %v1697, 0.0
          %v1974 = vmax.f32 %v1916, 0.0
          %v1975 = vmax.f32 %v1700, 0.0
          %v1976 = vmax.f32 %v1919, 0.0
          %v1977 = vmax.f32 %v1702, 0.0
          %v1978 = vmax.f32 %v1921, 0.0
          %v1979 = vmax.f32 %v1705, 0.0
          %v1980 = vmax.f32 %v1924, 0.0
          %v1981 = vmax.f32 %v1707, 0.0
          %v1982 = vmax.f32 %v1926, 0.0
          %v1983 = vmax.f32 %v1710, 0.0
          %v1984 = vmax.f32 %v1929, 0.0
          %v1985 = vmax.f32 %v1712, 0.0
          %v1986 = vmax.f32 %v1931, 0.0
          %v1987 = vmax.f32 %v1715, 0.0
          %v1988 = vmax.f32 %v1934, 0.0
          %v1989 = vmax.f32 %v1717, 0.0
          %v1990 = vmax.f32 %v1936, 0.0
          %v1991 = vmax.f32 %v1720, 0.0
          %v1992 = vmax.f32 %v1939, 0.0
          %v1993 = vmax.f32 %v1722, 0.0
          %v1994 = vmax.f32 %v1941, 0.0
          %v1995 = vmax.f32 %v1725, 0.0
          %v1996 = vmax.f32 %v1944, 0.0
          %v1997 = vpack.c.bf16 %v1949, %v1947
          %v1998 = vpack.c.bf16 %v1950, %v1948
          %v1999 = vpack.c.bf16 %v1953, %v1951
          %v2000 = vpack.c.bf16 %v1954, %v1952
          %v2001 = vpack.c.bf16 %v1957, %v1955
          %v2002 = vpack.c.bf16 %v1958, %v1956
          %v2003 = vpack.c.bf16 %v1961, %v1959
          %v2004 = vpack.c.bf16 %v1962, %v1960
          %v2005 = vpack.c.bf16 %v1965, %v1963
          %v2006 = vpack.c.bf16 %v1966, %v1964
          %v2007 = vpack.c.bf16 %v1969, %v1967
          %v2008 = vpack.c.bf16 %v1970, %v1968
          %v2009 = vpack.c.bf16 %v1973, %v1971
          %v2010 = vpack.c.bf16 %v1974, %v1972
          %v2011 = vpack.c.bf16 %v1977, %v1975
          %v2012 = vpack.c.bf16 %v1978, %v1976
          %v2013 = vpack.c.bf16 %v1981, %v1979
          %v2014 = vpack.c.bf16 %v1982, %v1980
          %v2015 = vpack.c.bf16 %v1985, %v1983
          %v2016 = vpack.c.bf16 %v1986, %v1984
          %v2017 = vpack.c.bf16 %v1989, %v1987
          %v2018 = vpack.c.bf16 %v1990, %v1988
          %v2019 = vpack.c.bf16 %v1993, %v1991
          %v2020 = vpack.c.bf16 %v1994, %v1992
          %v2021 = vpack.c.bf16 %v1995, %v1995
          %v2022 = vpack.c.bf16 %v1996, %v1996
          %v2023 = vld [vmem:[%s679] sm:$0xf]
          %v2024 = vld [vmem:[%s679 + $0x4] sm:$0xf]
          %v2025 = vld [vmem:[%s679 + $0x8] sm:$0xf]
          %v2026 = vld [vmem:[%s679 + $0xc] sm:$0xf]
          %v2027 = vld [vmem:[%s679 + $0x10] sm:$0xf]
          %v2028 = vld [vmem:[%s679 + $0x14] sm:$0xf]
          %v2029 = vld [vmem:[%s679 + $0x18] sm:$0xf]
          %v2030 = vld [vmem:[%s679 + $0x1c] sm:$0xf]
          %v2031 = vld [vmem:[%s679 + $0x20] sm:$0xf]
          %v2032 = vld [vmem:[%s679 + $0x24] sm:$0xf]
          %v2033 = vld [vmem:[%s679 + $0x28] sm:$0xf]
          %v2034 = vld [vmem:[%s679 + $0x2c] sm:$0xf]
          %v2035 = vld [vmem:[%s679 + $0x30] sm:$0xf]
          %v2036 = vld [vmem:[%s679 + $0x34] sm:$0xf]
          %v2037 = vld [vmem:[%s679 + $0x38] sm:$0xf]
          %v2038 = vld [vmem:[%s679 + $0x3c] sm:$0xf]
          %v2039 = vld [vmem:[%s679 + $0x40] sm:$0xf]
          %v2040 = vld [vmem:[%s679 + $0x44] sm:$0xf]
          %v2041 = vld [vmem:[%s686] sm:$0x1]
          %v2043 = vperm.slane %v2041, 0
          %v2063 = vunpack.c.l.b16 %v2023
          %v2064 = vunpack.c.l.b16 %v2024
          %v2065 = vunpack.c.l.b16 %v2025
          %v2066 = vunpack.c.l.b16 %v2026
          %v2067 = vunpack.c.l.b16 %v2027
          %v2068 = vunpack.c.l.b16 %v2028
          %v2069 = vunpack.c.l.b16 %v2029
          %v2070 = vunpack.c.l.b16 %v2030
          %v2071 = vunpack.c.l.b16 %v2031
          %v2072 = vunpack.c.l.b16 %v2032
          %v2073 = vunpack.c.l.b16 %v2033
          %v2074 = vunpack.c.l.b16 %v2034
          %v2075 = vunpack.c.l.b16 %v2035
          %v2076 = vunpack.c.l.b16 %v2036
          %v2077 = vunpack.c.l.b16 %v2037
          %v2078 = vunpack.c.l.b16 %v2038
          %v2079 = vunpack.c.l.b16 %v2039
          %v2080 = vunpack.c.l.b16 %v2040
          %v2081 = vpack.c.b16 %v2064, %v2063
          %v2082 = vpack.c.b16 %v2066, %v2065
          %v2083 = vpack.c.b16 %v2068, %v2067
          %v2084 = vpack.c.b16 %v2070, %v2069
          %v2085 = vpack.c.b16 %v2072, %v2071
          %v2086 = vpack.c.b16 %v2074, %v2073
          %v2087 = vpack.c.b16 %v2076, %v2075
          %v2088 = vpack.c.b16 %v2078, %v2077
          %v2089 = vpack.c.b16 %v2080, %v2079
          %vm2099 = vcmask 130048
          %v2101 = vsel %vm2099, %v1998, 0
          %v2104 = vsel %vm2099, %v2000, 0
          %v2107 = vsel %vm2099, %v2002, 0
          %v2110 = vsel %vm2099, %v2004, 0
          %v2113 = vsel %vm2099, %v2006, 0
          %v2116 = vsel %vm2099, %v2008, 0
          %v2119 = vsel %vm2099, %v2010, 0
          %v2122 = vsel %vm2099, %v2012, 0
          %v2125 = vsel %vm2099, %v2014, 0
          %v2128 = vsel %vm2099, %v2016, 0
          %v2131 = vsel %vm2099, %v2018, 0
          %v2134 = vsel %vm2099, %v2020, 0
          %v2137 = vsel %vm2099, %v2022, 0
          %2139 = vmatpush.bf16.msra.mxu0 %v2088
          %2140 = vmatpush.bf16.msra.mxu0 %v2087
          %2141 = vmatpush.bf16.msra.mxu0 %v2086
          %2142 = vmatpush.bf16.msra.mxu0 %v2085
          %2143 = vmatpush.bf16.msra.mxu0 %v2084
          %2144 = vmatpush.bf16.msra.mxu0 %v2083
          %2145 = vmatpush.bf16.msra.mxu0 %v2082
          %2146 = vmatpush.bf16.msra.mxu0 %v2081
          %2147 = vmatmul.bf16.gmra.mxu0 %v1997
          %v2148 = vpop.f32.mrf.mxu0
          %v2149 = vadd.f32 %v2043, %v2148
          %v2150 = vpop.f32.mrf.mxu0
          %v2151 = vadd.f32 %v2043, %v2150
          %2152 = vmatmul.bf16.gmra.mxu0 %v1999
          %v2153 = vpop.f32.mrf.mxu0
          %v2154 = vadd.f32 %v2043, %v2153
          %v2155 = vpop.f32.mrf.mxu0
          %v2156 = vadd.f32 %v2043, %v2155
          %2157 = vmatmul.bf16.gmra.mxu0 %v2001
          %v2158 = vpop.f32.mrf.mxu0
          %v2159 = vadd.f32 %v2043, %v2158
          %v2160 = vpop.f32.mrf.mxu0
          %v2161 = vadd.f32 %v2043, %v2160
          %2162 = vmatmul.bf16.gmra.mxu0 %v2003
          %v2163 = vpop.f32.mrf.mxu0
          %v2164 = vadd.f32 %v2043, %v2163
          %v2165 = vpop.f32.mrf.mxu0
          %v2166 = vadd.f32 %v2043, %v2165
          %2167 = vmatmul.bf16.gmra.mxu0 %v2005
          %v2168 = vpop.f32.mrf.mxu0
          %v2169 = vadd.f32 %v2043, %v2168
          %v2170 = vpop.f32.mrf.mxu0
          %v2171 = vadd.f32 %v2043, %v2170
          %2172 = vmatmul.bf16.gmra.mxu0 %v2007
          %v2173 = vpop.f32.mrf.mxu0
          %v2174 = vadd.f32 %v2043, %v2173
          %v2175 = vpop.f32.mrf.mxu0
          %v2176 = vadd.f32 %v2043, %v2175
          %2177 = vmatmul.bf16.gmra.mxu0 %v2009
          %v2178 = vpop.f32.mrf.mxu0
          %v2179 = vadd.f32 %v2043, %v2178
          %v2180 = vpop.f32.mrf.mxu0
          %v2181 = vadd.f32 %v2043, %v2180
          %2182 = vmatmul.bf16.gmra.mxu0 %v2011
          %v2183 = vpop.f32.mrf.mxu0
          %v2184 = vadd.f32 %v2043, %v2183
          %v2185 = vpop.f32.mrf.mxu0
          %v2186 = vadd.f32 %v2043, %v2185
          %2187 = vmatmul.bf16.gmra.mxu0 %v2013
          %v2188 = vpop.f32.mrf.mxu0
          %v2189 = vadd.f32 %v2043, %v2188
          %v2190 = vpop.f32.mrf.mxu0
          %v2191 = vadd.f32 %v2043, %v2190
          %2192 = vmatmul.bf16.gmra.mxu0 %v2015
          %v2193 = vpop.f32.mrf.mxu0
          %v2194 = vadd.f32 %v2043, %v2193
          %v2195 = vpop.f32.mrf.mxu0
          %v2196 = vadd.f32 %v2043, %v2195
          %2197 = vmatmul.bf16.gmra.mxu0 %v2017
          %v2198 = vpop.f32.mrf.mxu0
          %v2199 = vadd.f32 %v2043, %v2198
          %v2200 = vpop.f32.mrf.mxu0
          %v2201 = vadd.f32 %v2043, %v2200
          %2202 = vmatmul.bf16.gmra.mxu0 %v2019
          %v2203 = vpop.f32.mrf.mxu0
          %v2204 = vadd.f32 %v2043, %v2203
          %v2205 = vpop.f32.mrf.mxu0
          %v2206 = vadd.f32 %v2043, %v2205
          %2207 = vmatmul.bf16.gmra.mxu0 %v2021
          %v2208 = vpop.f32.mrf.mxu0
          %v2209 = vadd.f32 %v2043, %v2208
          %v2210 = vpop.f32.mrf.mxu0
          %2211 = vdwg.mxu0
          %2212 = vmatpush.bf16.msra.mxu0 0
          %2213 = vmatpush.bf16.msra.mxu0 0
          %2214 = vmatpush.bf16.msra.mxu0 0
          %2215 = vmatpush.bf16.msra.mxu0 0
          %2216 = vmatpush.bf16.msra.mxu0 0
          %2217 = vmatpush.bf16.msra.mxu0 0
          %2218 = vmatpush.bf16.msra.mxu0 0
          %2219 = vmatpush.bf16.msra.mxu0 %v2089
          %2220 = vmatmul.bf16.gmra.mxu0 %v2101
          %v2221 = vpop.f32.mrf.mxu0
          %v2222 = vadd.f32 %v2149, %v2221
          %v2223 = vpop.f32.mrf.mxu0
          %v2224 = vadd.f32 %v2151, %v2223
          %2225 = vmatmul.bf16.gmra.mxu0 %v2104
          %v2226 = vpop.f32.mrf.mxu0
          %v2227 = vadd.f32 %v2154, %v2226
          %v2228 = vpop.f32.mrf.mxu0
          %v2229 = vadd.f32 %v2156, %v2228
          %2230 = vmatmul.bf16.gmra.mxu0 %v2107
          %v2231 = vpop.f32.mrf.mxu0
          %v2232 = vadd.f32 %v2159, %v2231
          %v2233 = vpop.f32.mrf.mxu0
          %v2234 = vadd.f32 %v2161, %v2233
          %2235 = vmatmul.bf16.gmra.mxu0 %v2110
          %v2236 = vpop.f32.mrf.mxu0
          %v2237 = vadd.f32 %v2164, %v2236
          %v2238 = vpop.f32.mrf.mxu0
          %v2239 = vadd.f32 %v2166, %v2238
          %2240 = vmatmul.bf16.gmra.mxu0 %v2113
          %v2241 = vpop.f32.mrf.mxu0
          %v2242 = vadd.f32 %v2169, %v2241
          %v2243 = vpop.f32.mrf.mxu0
          %v2244 = vadd.f32 %v2171, %v2243
          %2245 = vmatmul.bf16.gmra.mxu0 %v2116
          %v2246 = vpop.f32.mrf.mxu0
          %v2247 = vadd.f32 %v2174, %v2246
          %v2248 = vpop.f32.mrf.mxu0
          %v2249 = vadd.f32 %v2176, %v2248
          %2250 = vmatmul.bf16.gmra.mxu0 %v2119
          %v2251 = vpop.f32.mrf.mxu0
          %v2252 = vadd.f32 %v2179, %v2251
          %v2253 = vpop.f32.mrf.mxu0
          %v2254 = vadd.f32 %v2181, %v2253
          %2255 = vmatmul.bf16.gmra.mxu0 %v2122
          %v2256 = vpop.f32.mrf.mxu0
          %v2257 = vadd.f32 %v2184, %v2256
          %v2258 = vpop.f32.mrf.mxu0
          %v2259 = vadd.f32 %v2186, %v2258
          %2260 = vmatmul.bf16.gmra.mxu0 %v2125
          %v2261 = vpop.f32.mrf.mxu0
          %v2262 = vadd.f32 %v2189, %v2261
          %v2263 = vpop.f32.mrf.mxu0
          %v2264 = vadd.f32 %v2191, %v2263
          %2265 = vmatmul.bf16.gmra.mxu0 %v2128
          %v2266 = vpop.f32.mrf.mxu0
          %v2267 = vadd.f32 %v2194, %v2266
          %v2268 = vpop.f32.mrf.mxu0
          %v2269 = vadd.f32 %v2196, %v2268
          %2270 = vmatmul.bf16.gmra.mxu0 %v2131
          %v2271 = vpop.f32.mrf.mxu0
          %v2272 = vadd.f32 %v2199, %v2271
          %v2273 = vpop.f32.mrf.mxu0
          %v2274 = vadd.f32 %v2201, %v2273
          %2275 = vmatmul.bf16.gmra.mxu0 %v2134
          %v2276 = vpop.f32.mrf.mxu0
          %v2277 = vadd.f32 %v2204, %v2276
          %v2278 = vpop.f32.mrf.mxu0
          %v2279 = vadd.f32 %v2206, %v2278
          %2280 = vmatmul.bf16.gmra.mxu0 %v2137
          %v2281 = vpop.f32.mrf.mxu0
          %v2282 = vadd.f32 %v2209, %v2281
          %v2283 = vpop.f32.mrf.mxu0
          %2284 = vdwg.mxu0
          %v2285 = vmax.f32 %v2222, 0.0
          %v2286 = vmax.f32 %v2224, 0.0
          %v2287 = vmax.f32 %v2227, 0.0
          %v2288 = vmax.f32 %v2229, 0.0
          %v2289 = vmax.f32 %v2232, 0.0
          %v2290 = vmax.f32 %v2234, 0.0
          %v2291 = vmax.f32 %v2237, 0.0
          %v2292 = vmax.f32 %v2239, 0.0
          %v2293 = vmax.f32 %v2242, 0.0
          %v2294 = vmax.f32 %v2244, 0.0
          %v2295 = vmax.f32 %v2247, 0.0
          %v2296 = vmax.f32 %v2249, 0.0
          %v2297 = vmax.f32 %v2252, 0.0
          %v2298 = vmax.f32 %v2254, 0.0
          %v2299 = vmax.f32 %v2257, 0.0
          %v2300 = vmax.f32 %v2259, 0.0
          %v2301 = vmax.f32 %v2262, 0.0
          %v2302 = vmax.f32 %v2264, 0.0
          %v2303 = vmax.f32 %v2267, 0.0
          %v2304 = vmax.f32 %v2269, 0.0
          %v2305 = vmax.f32 %v2272, 0.0
          %v2306 = vmax.f32 %v2274, 0.0
          %v2307 = vmax.f32 %v2277, 0.0
          %v2308 = vmax.f32 %v2279, 0.0
          %v2309 = vmax.f32 %v2282, 0.0
          %v2310 = vpack.c.bf16 %v2285, %v2285
          %2311 = vst.msk [vmem:[#allocation4] sm:$0xf] %vm783, %v2310
          %v2312 = vpack.c.bf16 %v2286, %v2286
          %2314 = vrot.lane.b32.xlu0 %v2312, 16
          %v2315 = vpop.permute.xlu0 %2314
          %2317 = vst.msk [vmem:[#allocation4] sm:$0xf] %vm828, %v2315
          %v2318 = vpack.c.bf16 %v2287, %v2287
          %2320 = vrot.lane.b32.xlu0 %v2318, 32
          %v2321 = vpop.permute.xlu0 %2320
          %2323 = vst.msk [vmem:[#allocation4] sm:$0xf] %vm848, %v2321
          %v2324 = vpack.c.bf16 %v2288, %v2288
          %2326 = vrot.lane.b32.xlu0 %v2324, 48
          %v2327 = vpop.permute.xlu0 %2326
          %2329 = vst.msk [vmem:[#allocation4] sm:$0xf] %vm872, %v2327
          %v2330 = vpack.c.bf16 %v2289, %v2289
          %2332 = vrot.lane.b32.xlu0 %v2330, 64
          %v2333 = vpop.permute.xlu0 %2332
          %2335 = vst.msk [vmem:[#allocation4] sm:$0xf] %vm892, %v2333
          %v2336 = vpack.c.bf16 %v2290, %v2290
          %2338 = vrot.lane.b32.xlu0 %v2336, 80
          %v2339 = vpop.permute.xlu0 %2338
          %2341 = vst.msk [vmem:[#allocation4] sm:$0xf] %vm916, %v2339
          %v2342 = vpack.c.bf16 %v2291, %v2291
          %2344 = vrot.lane.b32.xlu0 %v2342, 96
          %v2345 = vpop.permute.xlu0 %2344
          %2347 = vst.msk [vmem:[#allocation4] sm:$0xf] %vm936, %v2345
          %v2348 = vpack.c.bf16 %v2292, %v2292
          %2350 = vrot.lane.b32.xlu0 %v2348, 112
          %v2351 = vpop.permute.xlu0 %2350
          %2353 = vst.msk [vmem:[#allocation4] sm:$0xf] %vm960, %v2351
          %v2354 = vpack.c.bf16 %v2293, %v2293
          %2355 = vst.msk [vmem:[#allocation4 + $0x4] sm:$0xf] %vm783, %v2354
          %v2356 = vpack.c.bf16 %v2294, %v2294
          %2358 = vrot.lane.b32.xlu0 %v2356, 16
          %v2359 = vpop.permute.xlu0 %2358
          %2361 = vst.msk [vmem:[#allocation4 + $0x4] sm:$0xf] %vm828, %v2359
          %v2362 = vpack.c.bf16 %v2295, %v2295
          %2364 = vrot.lane.b32.xlu0 %v2362, 32
          %v2365 = vpop.permute.xlu0 %2364
          %2367 = vst.msk [vmem:[#allocation4 + $0x4] sm:$0xf] %vm848, %v2365
          %v2368 = vpack.c.bf16 %v2296, %v2296
          %2370 = vrot.lane.b32.xlu0 %v2368, 48
          %v2371 = vpop.permute.xlu0 %2370
          %2373 = vst.msk [vmem:[#allocation4 + $0x4] sm:$0xf] %vm872, %v2371
          %v2374 = vpack.c.bf16 %v2297, %v2297
          %2376 = vrot.lane.b32.xlu0 %v2374, 64
          %v2377 = vpop.permute.xlu0 %2376
          %2379 = vst.msk [vmem:[#allocation4 + $0x4] sm:$0xf] %vm892, %v2377
          %v2380 = vpack.c.bf16 %v2298, %v2298
          %2382 = vrot.lane.b32.xlu0 %v2380, 80
          %v2383 = vpop.permute.xlu0 %2382
          %2385 = vst.msk [vmem:[#allocation4 + $0x4] sm:$0xf] %vm916, %v2383
          %v2386 = vpack.c.bf16 %v2299, %v2299
          %2388 = vrot.lane.b32.xlu0 %v2386, 96
          %v2389 = vpop.permute.xlu0 %2388
          %2391 = vst.msk [vmem:[#allocation4 + $0x4] sm:$0xf] %vm936, %v2389
          %v2392 = vpack.c.bf16 %v2300, %v2300
          %2394 = vrot.lane.b32.xlu0 %v2392, 112
          %v2395 = vpop.permute.xlu0 %2394
          %2397 = vst.msk [vmem:[#allocation4 + $0x4] sm:$0xf] %vm960, %v2395
          %v2398 = vpack.c.bf16 %v2301, %v2301
          %2399 = vst.msk [vmem:[#allocation4 + $0x8] sm:$0xf] %vm783, %v2398
          %v2400 = vpack.c.bf16 %v2302, %v2302
          %2402 = vrot.lane.b32.xlu0 %v2400, 16
          %v2403 = vpop.permute.xlu0 %2402
          %2405 = vst.msk [vmem:[#allocation4 + $0x8] sm:$0xf] %vm828, %v2403
          %v2406 = vpack.c.bf16 %v2303, %v2303
          %2408 = vrot.lane.b32.xlu0 %v2406, 32
          %v2409 = vpop.permute.xlu0 %2408
          %2411 = vst.msk [vmem:[#allocation4 + $0x8] sm:$0xf] %vm848, %v2409
          %v2412 = vpack.c.bf16 %v2304, %v2304
          %2414 = vrot.lane.b32.xlu0 %v2412, 48
          %v2415 = vpop.permute.xlu0 %2414
          %2417 = vst.msk [vmem:[#allocation4 + $0x8] sm:$0xf] %vm872, %v2415
          %v2418 = vpack.c.bf16 %v2305, %v2305
          %2420 = vrot.lane.b32.xlu0 %v2418, 64
          %v2421 = vpop.permute.xlu0 %2420
          %2423 = vst.msk [vmem:[#allocation4 + $0x8] sm:$0xf] %vm892, %v2421
          %v2424 = vpack.c.bf16 %v2306, %v2306
          %2426 = vrot.lane.b32.xlu0 %v2424, 80
          %v2427 = vpop.permute.xlu0 %2426
          %2429 = vst.msk [vmem:[#allocation4 + $0x8] sm:$0xf] %vm916, %v2427
          %v2430 = vpack.c.bf16 %v2307, %v2307
          %2432 = vrot.lane.b32.xlu0 %v2430, 96
          %v2433 = vpop.permute.xlu0 %2432
          %2435 = vst.msk [vmem:[#allocation4 + $0x8] sm:$0xf] %vm936, %v2433
          %v2436 = vpack.c.bf16 %v2308, %v2308
          %2438 = vrot.lane.b32.xlu0 %v2436, 112
          %v2439 = vpop.permute.xlu0 %2438
          %2441 = vst.msk [vmem:[#allocation4 + $0x8] sm:$0xf] %vm960, %v2439
          %v2442 = vpack.c.bf16 %v2309, %v2309
          %2443 = vst.msk [vmem:[#allocation4 + $0xc] sm:$0xf] %vm783, %v2442
          %v2444 = vld [vmem:[#allocation4] sm:$0xff]
          %v2445 = vld [vmem:[#allocation4 + $0x8] sm:$0xff]
          %v2446 = vld [vmem:[%s695] sm:$0xff]
          %v2447 = vld [vmem:[%s695 + $0x8] sm:$0xff]
          %v2448 = vld [vmem:[%s695 + $0x10] sm:$0xff]
          %v2449 = vld [vmem:[%s695 + $0x18] sm:$0xff]
          %v2450 = vld [vmem:[%s695 + $0x20] sm:$0xff]
          %v2451 = vld [vmem:[%s695 + $0x28] sm:$0xff]
          %v2452 = vld [vmem:[%s695 + $0x30] sm:$0xff]
          %v2453 = vld [vmem:[%s695 + $0x38] sm:$0xff]
          %v2454 = vld [vmem:[%s695 + $0x40] sm:$0xff]
          %v2455 = vld [vmem:[%s695 + $0x48] sm:$0xff]
          %v2456 = vld [vmem:[%s695 + $0x50] sm:$0xff]
          %v2457 = vld [vmem:[%s695 + $0x58] sm:$0xff]
          %v2458 = vld [vmem:[%s695 + $0x60] sm:$0xff]
          %v2459 = vld [vmem:[%s695 + $0x68] sm:$0xff]
          %v2460 = vld [vmem:[%s695 + $0x70] sm:$0xff]
          %v2461 = vld [vmem:[%s695 + $0x78] sm:$0xff]
          %v2462 = vld [vmem:[%s695 + $0x80] sm:$0xff]
          %v2463 = vld [vmem:[%s695 + $0x88] sm:$0xff]
          %v2464 = vld [vmem:[%s695 + $0x90] sm:$0xff]
          %v2465 = vld [vmem:[%s695 + $0x98] sm:$0xff]
          %v2466 = vld [vmem:[%s695 + $0xa0] sm:$0xff]
          %v2467 = vld [vmem:[%s695 + $0xa8] sm:$0xff]
          %v2468 = vld [vmem:[%s695 + $0xb0] sm:$0xff]
          %v2469 = vld [vmem:[%s695 + $0xb8] sm:$0xff]
          %v2470 = vld [vmem:[%s695 + $0xc0] sm:$0xff]
          %v2471 = vld [vmem:[%s695 + $0xc8] sm:$0xff]
          %v2472 = vld [vmem:[%s695 + $0xd0] sm:$0xff]
          %v2473 = vld [vmem:[%s695 + $0xd8] sm:$0xff]
          %v2474 = vld [vmem:[%s695 + $0xe0] sm:$0xff]
          %v2475 = vld [vmem:[%s695 + $0xe8] sm:$0xff]
          %v2476 = vld [vmem:[%s695 + $0xf0] sm:$0xff]
          %v2477 = vld [vmem:[%s695 + $0xf8] sm:$0xff]
          %v2478 = vld [vmem:[%s695 + $0x100] sm:$0xff]
          %v2479 = vld [vmem:[%s695 + $0x108] sm:$0xff]
          %v2480 = vld [vmem:[%s695 + $0x110] sm:$0xff]
          %v2481 = vld [vmem:[%s695 + $0x118] sm:$0xff]
          %v2482 = vld [vmem:[%s695 + $0x120] sm:$0xff]
          %v2483 = vld [vmem:[%s695 + $0x128] sm:$0xff]
          %v2484 = vld [vmem:[%s695 + $0x130] sm:$0xff]
          %v2485 = vld [vmem:[%s695 + $0x138] sm:$0xff]
          %v2486 = vld [vmem:[%s695 + $0x140] sm:$0xff]
          %v2487 = vld [vmem:[%s695 + $0x148] sm:$0xff]
          %v2488 = vld [vmem:[%s695 + $0x150] sm:$0xff]
          %v2489 = vld [vmem:[%s695 + $0x158] sm:$0xff]
          %v2490 = vld [vmem:[%s695 + $0x160] sm:$0xff]
          %v2491 = vld [vmem:[%s695 + $0x168] sm:$0xff]
          %v2492 = vld [vmem:[%s695 + $0x170] sm:$0xff]
          %v2493 = vld [vmem:[%s695 + $0x178] sm:$0xff]
          %v2494 = vld [vmem:[%s695 + $0x180] sm:$0xff]
          %v2495 = vld [vmem:[%s695 + $0x188] sm:$0xff]
          %v2496 = vld [vmem:[%s703] sm:$0x3]
          %v2498 = vperm.slane %v2496, 0
          %v2499 = vperm.slane %v2496, 1
          %v2504 = vunpack.c.l.b16 %v2444
          %v2505 = vunpack.c.h.b16 %v2444
          %v2506 = vunpack.c.l.b16 %v2445
          %v2507 = vunpack.c.h.b16 %v2445
          %v2508 = vpack.c.b16 %v2504, %v2504
          %v2509 = vpack.c.b16 %v2505, %v2505
          %v2510 = vpack.c.b16 %v2506, %v2506
          %v2511 = vpack.c.b16 %v2507, %v2507
          %v2565 = vunpack.c.l.b16 %v2446
          %v2566 = vunpack.c.h.b16 %v2446
          %v2567 = vunpack.c.l.b16 %v2447
          %v2568 = vunpack.c.h.b16 %v2447
          %v2569 = vunpack.c.l.b16 %v2448
          %v2570 = vunpack.c.h.b16 %v2448
          %v2571 = vunpack.c.l.b16 %v2449
          %v2572 = vunpack.c.h.b16 %v2449
          %v2573 = vunpack.c.l.b16 %v2450
          %v2574 = vunpack.c.h.b16 %v2450
          %v2575 = vunpack.c.l.b16 %v2451
          %v2576 = vunpack.c.h.b16 %v2451
          %v2577 = vunpack.c.l.b16 %v2452
          %v2578 = vunpack.c.h.b16 %v2452
          %v2579 = vunpack.c.l.b16 %v2453
          %v2580 = vunpack.c.h.b16 %v2453
          %v2581 = vunpack.c.l.b16 %v2454
          %v2582 = vunpack.c.h.b16 %v2454
          %v2583 = vunpack.c.l.b16 %v2455
          %v2584 = vunpack.c.h.b16 %v2455
          %v2585 = vunpack.c.l.b16 %v2456
          %v2586 = vunpack.c.h.b16 %v2456
          %v2587 = vunpack.c.l.b16 %v2457
          %v2588 = vunpack.c.h.b16 %v2457
          %v2589 = vunpack.c.l.b16 %v2458
          %v2590 = vunpack.c.h.b16 %v2458
          %v2591 = vunpack.c.l.b16 %v2459
          %v2592 = vunpack.c.h.b16 %v2459
          %v2593 = vunpack.c.l.b16 %v2460
          %v2594 = vunpack.c.h.b16 %v2460
          %v2595 = vunpack.c.l.b16 %v2461
          %v2596 = vunpack.c.h.b16 %v2461
          %v2597 = vunpack.c.l.b16 %v2462
          %v2598 = vunpack.c.h.b16 %v2462
          %v2599 = vunpack.c.l.b16 %v2463
          %v2600 = vunpack.c.h.b16 %v2463
          %v2601 = vunpack.c.l.b16 %v2464
          %v2602 = vunpack.c.h.b16 %v2464
          %v2603 = vunpack.c.l.b16 %v2465
          %v2604 = vunpack.c.h.b16 %v2465
          %v2605 = vunpack.c.l.b16 %v2466
          %v2606 = vunpack.c.h.b16 %v2466
          %v2607 = vunpack.c.l.b16 %v2467
          %v2608 = vunpack.c.h.b16 %v2467
          %v2609 = vunpack.c.l.b16 %v2468
          %v2610 = vunpack.c.h.b16 %v2468
          %v2611 = vunpack.c.l.b16 %v2469
          %v2612 = vunpack.c.h.b16 %v2469
          %v2613 = vunpack.c.l.b16 %v2470
          %v2614 = vunpack.c.h.b16 %v2470
          %v2615 = vunpack.c.l.b16 %v2471
          %v2616 = vunpack.c.h.b16 %v2471
          %v2617 = vunpack.c.l.b16 %v2472
          %v2618 = vunpack.c.h.b16 %v2472
          %v2619 = vunpack.c.l.b16 %v2473
          %v2620 = vunpack.c.h.b16 %v2473
          %v2621 = vunpack.c.l.b16 %v2474
          %v2622 = vunpack.c.h.b16 %v2474
          %v2623 = vunpack.c.l.b16 %v2475
          %v2624 = vunpack.c.h.b16 %v2475
          %v2625 = vunpack.c.l.b16 %v2476
          %v2626 = vunpack.c.h.b16 %v2476
          %v2627 = vunpack.c.l.b16 %v2477
          %v2628 = vunpack.c.h.b16 %v2477
          %v2629 = vunpack.c.l.b16 %v2478
          %v2630 = vunpack.c.h.b16 %v2478
          %v2631 = vunpack.c.l.b16 %v2479
          %v2632 = vunpack.c.h.b16 %v2479
          %v2633 = vunpack.c.l.b16 %v2480
          %v2634 = vunpack.c.h.b16 %v2480
          %v2635 = vunpack.c.l.b16 %v2481
          %v2636 = vunpack.c.h.b16 %v2481
          %v2637 = vunpack.c.l.b16 %v2482
          %v2638 = vunpack.c.h.b16 %v2482
          %v2639 = vunpack.c.l.b16 %v2483
          %v2640 = vunpack.c.h.b16 %v2483
          %v2641 = vunpack.c.l.b16 %v2484
          %v2642 = vunpack.c.h.b16 %v2484
          %v2643 = vunpack.c.l.b16 %v2485
          %v2644 = vunpack.c.h.b16 %v2485
          %v2645 = vunpack.c.l.b16 %v2486
          %v2646 = vunpack.c.h.b16 %v2486
          %v2647 = vunpack.c.l.b16 %v2487
          %v2648 = vunpack.c.h.b16 %v2487
          %v2649 = vunpack.c.l.b16 %v2488
          %v2650 = vunpack.c.h.b16 %v2488
          %v2651 = vunpack.c.l.b16 %v2489
          %v2652 = vunpack.c.h.b16 %v2489
          %v2653 = vunpack.c.l.b16 %v2490
          %v2654 = vunpack.c.h.b16 %v2490
          %v2655 = vunpack.c.l.b16 %v2491
          %v2656 = vunpack.c.h.b16 %v2491
          %v2657 = vunpack.c.l.b16 %v2492
          %v2658 = vunpack.c.h.b16 %v2492
          %v2659 = vunpack.c.l.b16 %v2493
          %v2660 = vunpack.c.h.b16 %v2493
          %v2661 = vunpack.c.l.b16 %v2494
          %v2662 = vunpack.c.h.b16 %v2494
          %v2663 = vunpack.c.l.b16 %v2495
          %v2664 = vunpack.c.h.b16 %v2495
          %v2665 = vpack.c.b16 %v2567, %v2565
          %v2666 = vpack.c.b16 %v2568, %v2566
          %v2667 = vpack.c.b16 %v2571, %v2569
          %v2668 = vpack.c.b16 %v2572, %v2570
          %v2669 = vpack.c.b16 %v2575, %v2573
          %v2670 = vpack.c.b16 %v2576, %v2574
          %v2671 = vpack.c.b16 %v2579, %v2577
          %v2672 = vpack.c.b16 %v2580, %v2578
          %v2673 = vpack.c.b16 %v2583, %v2581
          %v2674 = vpack.c.b16 %v2584, %v2582
          %v2675 = vpack.c.b16 %v2587, %v2585
          %v2676 = vpack.c.b16 %v2588, %v2586
          %v2677 = vpack.c.b16 %v2591, %v2589
          %v2678 = vpack.c.b16 %v2592, %v2590
          %v2679 = vpack.c.b16 %v2595, %v2593
          %v2680 = vpack.c.b16 %v2596, %v2594
          %v2681 = vpack.c.b16 %v2599, %v2597
          %v2682 = vpack.c.b16 %v2600, %v2598
          %v2683 = vpack.c.b16 %v2603, %v2601
          %v2684 = vpack.c.b16 %v2604, %v2602
          %v2685 = vpack.c.b16 %v2607, %v2605
          %v2686 = vpack.c.b16 %v2608, %v2606
          %v2687 = vpack.c.b16 %v2611, %v2609
          %v2688 = vpack.c.b16 %v2612, %v2610
          %v2689 = vpack.c.b16 %v2615, %v2613
          %v2690 = vpack.c.b16 %v2616, %v2614
          %v2691 = vpack.c.b16 %v2619, %v2617
          %v2692 = vpack.c.b16 %v2620, %v2618
          %v2693 = vpack.c.b16 %v2623, %v2621
          %v2694 = vpack.c.b16 %v2624, %v2622
          %v2695 = vpack.c.b16 %v2627, %v2625
          %v2696 = vpack.c.b16 %v2628, %v2626
          %v2697 = vpack.c.b16 %v2631, %v2629
          %v2698 = vpack.c.b16 %v2632, %v2630
          %v2699 = vpack.c.b16 %v2635, %v2633
          %v2700 = vpack.c.b16 %v2636, %v2634
          %v2701 = vpack.c.b16 %v2639, %v2637
          %v2702 = vpack.c.b16 %v2640, %v2638
          %v2703 = vpack.c.b16 %v2643, %v2641
          %v2704 = vpack.c.b16 %v2644, %v2642
          %v2705 = vpack.c.b16 %v2647, %v2645
          %v2706 = vpack.c.b16 %v2648, %v2646
          %v2707 = vpack.c.b16 %v2651, %v2649
          %v2708 = vpack.c.b16 %v2652, %v2650
          %v2709 = vpack.c.b16 %v2655, %v2653
          %v2710 = vpack.c.b16 %v2656, %v2654
          %v2711 = vpack.c.b16 %v2659, %v2657
          %v2712 = vpack.c.b16 %v2660, %v2658
          %v2713 = vpack.c.b16 %v2663, %v2661
          %v2714 = vpack.c.b16 %v2664, %v2662
          %v2766 = vsel %vm2099, %v2511, 0
          %2768 = vmatpush.bf16.msra.mxu0 %v2679
          %2769 = vmatpush.bf16.msra.mxu0 %v2677
          %2770 = vmatpush.bf16.msra.mxu0 %v2675
          %2771 = vmatpush.bf16.msra.mxu0 %v2673
          %2772 = vmatpush.bf16.msra.mxu0 %v2671
          %2773 = vmatpush.bf16.msra.mxu0 %v2669
          %2774 = vmatpush.bf16.msra.mxu0 %v2667
          %2775 = vmatpush.bf16.msra.mxu0 %v2665
          %2776 = vmatmul.bf16.gmra.mxu0 %v2508
          %v2777 = vpop.f32.mrf.mxu0
          %v2778 = vadd.f32 %v2498, %v2777
          %v2779 = vpop.f32.mrf.mxu0
          %2780 = vdwg.mxu0
          %2781 = vmatpush.bf16.msra.mxu0 %v2695
          %2782 = vmatpush.bf16.msra.mxu0 %v2693
          %2783 = vmatpush.bf16.msra.mxu0 %v2691
          %2784 = vmatpush.bf16.msra.mxu0 %v2689
          %2785 = vmatpush.bf16.msra.mxu0 %v2687
          %2786 = vmatpush.bf16.msra.mxu0 %v2685
          %2787 = vmatpush.bf16.msra.mxu0 %v2683
          %2788 = vmatpush.bf16.msra.mxu0 %v2681
          %2789 = vmatmul.bf16.gmra.mxu0 %v2509
          %v2790 = vpop.f32.mrf.mxu0
          %v2791 = vadd.f32 %v2778, %v2790
          %v2792 = vpop.f32.mrf.mxu0
          %2793 = vdwg.mxu0
          %2794 = vmatpush.bf16.msra.mxu0 %v2711
          %2795 = vmatpush.bf16.msra.mxu0 %v2709
          %2796 = vmatpush.bf16.msra.mxu0 %v2707
          %2797 = vmatpush.bf16.msra.mxu0 %v2705
          %2798 = vmatpush.bf16.msra.mxu0 %v2703
          %2799 = vmatpush.bf16.msra.mxu0 %v2701
          %2800 = vmatpush.bf16.msra.mxu0 %v2699
          %2801 = vmatpush.bf16.msra.mxu0 %v2697
          %2802 = vmatmul.bf16.gmra.mxu0 %v2510
          %v2803 = vpop.f32.mrf.mxu0
          %v2804 = vadd.f32 %v2791, %v2803
          %v2805 = vpop.f32.mrf.mxu0
          %2806 = vdwg.mxu0
          %2807 = vmatpush.bf16.msra.mxu0 0
          %2808 = vmatpush.bf16.msra.mxu0 0
          %2809 = vmatpush.bf16.msra.mxu0 0
          %2810 = vmatpush.bf16.msra.mxu0 0
          %2811 = vmatpush.bf16.msra.mxu0 0
          %2812 = vmatpush.bf16.msra.mxu0 0
          %2813 = vmatpush.bf16.msra.mxu0 0
          %2814 = vmatpush.bf16.msra.mxu0 %v2713
          %2815 = vmatmul.bf16.gmra.mxu0 %v2766
          %v2816 = vpop.f32.mrf.mxu0
          %v2817 = vadd.f32 %v2804, %v2816
          %v2818 = vpop.f32.mrf.mxu0
          %2819 = vdwg.mxu0
          %2820 = vmatpush.bf16.msra.mxu0 %v2680
          %2821 = vmatpush.bf16.msra.mxu0 %v2678
          %2822 = vmatpush.bf16.msra.mxu0 %v2676
          %2823 = vmatpush.bf16.msra.mxu0 %v2674
          %2824 = vmatpush.bf16.msra.mxu0 %v2672
          %2825 = vmatpush.bf16.msra.mxu0 %v2670
          %2826 = vmatpush.bf16.msra.mxu0 %v2668
          %2827 = vmatpush.bf16.msra.mxu0 %v2666
          %2828 = vmatmul.bf16.gmra.mxu0 %v2508
          %v2829 = vpop.f32.mrf.mxu0
          %v2830 = vadd.f32 %v2499, %v2829
          %v2831 = vpop.f32.mrf.mxu0
          %2832 = vdwg.mxu0
          %2833 = vmatpush.bf16.msra.mxu0 %v2696
          %2834 = vmatpush.bf16.msra.mxu0 %v2694
          %2835 = vmatpush.bf16.msra.mxu0 %v2692
          %2836 = vmatpush.bf16.msra.mxu0 %v2690
          %2837 = vmatpush.bf16.msra.mxu0 %v2688
          %2838 = vmatpush.bf16.msra.mxu0 %v2686
          %2839 = vmatpush.bf16.msra.mxu0 %v2684
          %2840 = vmatpush.bf16.msra.mxu0 %v2682
          %2841 = vmatmul.bf16.gmra.mxu0 %v2509
          %v2842 = vpop.f32.mrf.mxu0
          %v2843 = vadd.f32 %v2830, %v2842
          %v2844 = vpop.f32.mrf.mxu0
          %2845 = vdwg.mxu0
          %2846 = vmatpush.bf16.msra.mxu0 %v2712
          %2847 = vmatpush.bf16.msra.mxu0 %v2710
          %2848 = vmatpush.bf16.msra.mxu0 %v2708
          %2849 = vmatpush.bf16.msra.mxu0 %v2706
          %2850 = vmatpush.bf16.msra.mxu0 %v2704
          %2851 = vmatpush.bf16.msra.mxu0 %v2702
          %2852 = vmatpush.bf16.msra.mxu0 %v2700
          %2853 = vmatpush.bf16.msra.mxu0 %v2698
          %2854 = vmatmul.bf16.gmra.mxu0 %v2510
          %v2855 = vpop.f32.mrf.mxu0
          %v2856 = vadd.f32 %v2843, %v2855
          %v2857 = vpop.f32.mrf.mxu0
          %2858 = vdwg.mxu0
          %2859 = vmatpush.bf16.msra.mxu0 0
          %2860 = vmatpush.bf16.msra.mxu0 0
          %2861 = vmatpush.bf16.msra.mxu0 0
          %2862 = vmatpush.bf16.msra.mxu0 0
          %2863 = vmatpush.bf16.msra.mxu0 0
          %2864 = vmatpush.bf16.msra.mxu0 0
          %2865 = vmatpush.bf16.msra.mxu0 0
          %2866 = vmatpush.bf16.msra.mxu0 %v2714
          %2867 = vmatmul.bf16.gmra.mxu0 %v2766
          %v2868 = vpop.f32.mrf.mxu0
          %v2869 = vadd.f32 %v2856, %v2868
          %v2870 = vpop.f32.mrf.mxu0
          %2871 = vdwg.mxu0
          %v2872 = vadd.f32 %v2817, %v2869
          %2873 = vadd.xlane.f32.xlu0 %v2872
          %v2874 = vpop.xlane.xlu0 %2873
          %v2875 = vrcp.pop 256.0
          %v2876 = vmul.f32 256.0, %v2875
          %v2877 = vsub.f32 1.0, %v2876
          %v2878 = vmul.f32 %v2875, %v2877
          %v2879 = vadd.f32 %v2875, %v2878
          %vm2880 = vweird.f32 %v2875
          %v2881 = vsel %vm2880, %v2875, %v2879
          %v2882 = vmul.f32 %v2874, %v2881
          %v2883 = vsub.f32 %v2817, %v2882
          %v2884 = vsub.f32 %v2869, %v2882
          %v2885 = vmul.f32 %v2883, %v2883
          %v2886 = vmul.f32 %v2884, %v2884
          %v2887 = vadd.f32 %v2885, %v2886
          %2888 = vadd.xlane.f32.xlu0 %v2887
          %v2889 = vpop.xlane.xlu0 %2888
          %v2890 = vmul.f32 %v2889, %v2881
          %v2891 = vadd.f32 %v2890, 1e-05
          %v2892 = vrsqrt.pop %v2891
          %v2893 = vmul.f32 %v2892, %v2891
          %v2894 = vmul.f32 %v2893, %v2892
          %v2895 = vmul.f32 0.5, %v2894
          %v2896 = vsub.f32 1.5, %v2895
          %v2897 = vmul.f32 %v2892, %v2896
          %vm2898 = vweird.f32 %v2891
          %vm2899 = vweird.f32 %v2892
          %vm2900 = vmor %vm2898, %vm2899
          %v2901 = vsel %vm2900, %v2892, %v2897
          %v2902 = vmul.f32 %v2883, %v2901
          %v2903 = vmul.f32 %v2884, %v2901
          %v2904 = vld [vmem:[%s711] sm:$0x3]
          %v2906 = vperm.slane %v2904, 0
          %v2907 = vperm.slane %v2904, 1
          %v2910 = vmul.f32 %v2902, %v2906
          %v2911 = vmul.f32 %v2903, %v2907
          %v2912 = vld [vmem:[%s719] sm:$0x3]
          %v2914 = vperm.slane %v2912, 0
          %v2915 = vperm.slane %v2912, 1
          %v2918 = vadd.f32 %v2910, %v2914
          %v2919 = vadd.f32 %v2911, %v2915
          %v2920 = vtanh.pop %v2918
          %v2921 = vtanh.pop %v2919
          %s2922 = smul.u32 %s26, 2
          %s2923 = smul.addr %s2922, 8
          %s2924 = scalar_lea.vmem [#allocation2], %s2923
          %2925 = vst [vmem:[%s2924] sm:$0xff] %v2920
          %2926 = vst [vmem:[%s2924 + $0x8] sm:$0xff] %v2921
        $region84: #{curl_atc_forward.1} parent=75 // pred_fallthru
          _
        %p2927 = scmp.eq.s32.totalorder %s26, 2
        // Predicated region
        $region85: #{curl_atc_forward.1} parent=75 // pred_check
          %p2928 = pneg %p2927
        $region86: #{curl_atc_forward.1} parent=75 // pred_check_branch
          %2930 = sbr.rel (%p2928) target = $region88
        $region87: #{curl_atc_forward.1} parent=75 // pred_region
          %v2931 = vld [vmem:[#allocation2] sm:$0xff]
          %v2932 = vld [vmem:[#allocation2 + $0x8] sm:$0xff]
          %s2933 = scalar_lea.vmem [#allocation2], 16
          %v2934 = vld [vmem:[%s2933] sm:$0xff]
          %v2935 = vld [vmem:[%s2933 + $0x8] sm:$0xff]
          %v2936 = vpack.c.bf16 %v2931, %v2931
          %v2937 = vpack.c.bf16 %v2932, %v2932
          %v2938 = vld [vmem:[%s9] sm:$0xff]
          %v2939 = vld [vmem:[%s9 + $0x8] sm:$0xff]
          %v2940 = vld [vmem:[%s9 + $0x10] sm:$0xff]
          %v2941 = vld [vmem:[%s9 + $0x18] sm:$0xff]
          %v2942 = vld [vmem:[%s9 + $0x20] sm:$0xff]
          %v2943 = vld [vmem:[%s9 + $0x28] sm:$0xff]
          %v2944 = vld [vmem:[%s9 + $0x30] sm:$0xff]
          %v2945 = vld [vmem:[%s9 + $0x38] sm:$0xff]
          %v2946 = vld [vmem:[%s9 + $0x40] sm:$0xff]
          %v2947 = vld [vmem:[%s9 + $0x48] sm:$0xff]
          %v2948 = vld [vmem:[%s9 + $0x50] sm:$0xff]
          %v2949 = vld [vmem:[%s9 + $0x58] sm:$0xff]
          %v2950 = vld [vmem:[%s9 + $0x60] sm:$0xff]
          %v2951 = vld [vmem:[%s9 + $0x68] sm:$0xff]
          %v2952 = vld [vmem:[%s9 + $0x70] sm:$0xff]
          %v2953 = vld [vmem:[%s9 + $0x78] sm:$0xff]
          %v2954 = vld [vmem:[%s9 + $0x80] sm:$0xff]
          %v2955 = vld [vmem:[%s9 + $0x88] sm:$0xff]
          %v2956 = vld [vmem:[%s9 + $0x90] sm:$0xff]
          %v2957 = vld [vmem:[%s9 + $0x98] sm:$0xff]
          %v2958 = vld [vmem:[%s9 + $0xa0] sm:$0xff]
          %v2959 = vld [vmem:[%s9 + $0xa8] sm:$0xff]
          %v2960 = vld [vmem:[%s9 + $0xb0] sm:$0xff]
          %v2961 = vld [vmem:[%s9 + $0xb8] sm:$0xff]
          %v2962 = vld [vmem:[%s9 + $0xc0] sm:$0xff]
          %v2963 = vld [vmem:[%s9 + $0xc8] sm:$0xff]
          %v2964 = vld [vmem:[%s9 + $0xd0] sm:$0xff]
          %v2965 = vld [vmem:[%s9 + $0xd8] sm:$0xff]
          %v2966 = vld [vmem:[%s9 + $0xe0] sm:$0xff]
          %v2967 = vld [vmem:[%s9 + $0xe8] sm:$0xff]
          %v2968 = vld [vmem:[%s9 + $0xf0] sm:$0xff]
          %v2969 = vld [vmem:[%s9 + $0xf8] sm:$0xff]
          %v2970 = vld [vmem:[%s10] sm:$0x3]
          %v2972 = vperm.slane %v2970, 0
          %v2973 = vperm.slane %v2970, 1
          %v3008 = vunpack.c.l.b16 %v2938
          %v3009 = vunpack.c.h.b16 %v2938
          %v3010 = vunpack.c.l.b16 %v2939
          %v3011 = vunpack.c.h.b16 %v2939
          %v3012 = vunpack.c.l.b16 %v2940
          %v3013 = vunpack.c.h.b16 %v2940
          %v3014 = vunpack.c.l.b16 %v2941
          %v3015 = vunpack.c.h.b16 %v2941
          %v3016 = vunpack.c.l.b16 %v2942
          %v3017 = vunpack.c.h.b16 %v2942
          %v3018 = vunpack.c.l.b16 %v2943
          %v3019 = vunpack.c.h.b16 %v2943
          %v3020 = vunpack.c.l.b16 %v2944
          %v3021 = vunpack.c.h.b16 %v2944
          %v3022 = vunpack.c.l.b16 %v2945
          %v3023 = vunpack.c.h.b16 %v2945
          %v3024 = vunpack.c.l.b16 %v2946
          %v3025 = vunpack.c.h.b16 %v2946
          %v3026 = vunpack.c.l.b16 %v2947
          %v3027 = vunpack.c.h.b16 %v2947
          %v3028 = vunpack.c.l.b16 %v2948
          %v3029 = vunpack.c.h.b16 %v2948
          %v3030 = vunpack.c.l.b16 %v2949
          %v3031 = vunpack.c.h.b16 %v2949
          %v3032 = vunpack.c.l.b16 %v2950
          %v3033 = vunpack.c.h.b16 %v2950
          %v3034 = vunpack.c.l.b16 %v2951
          %v3035 = vunpack.c.h.b16 %v2951
          %v3036 = vunpack.c.l.b16 %v2952
          %v3037 = vunpack.c.h.b16 %v2952
          %v3038 = vunpack.c.l.b16 %v2953
          %v3039 = vunpack.c.h.b16 %v2953
          %v3040 = vunpack.c.l.b16 %v2954
          %v3041 = vunpack.c.h.b16 %v2954
          %v3042 = vunpack.c.l.b16 %v2955
          %v3043 = vunpack.c.h.b16 %v2955
          %v3044 = vunpack.c.l.b16 %v2956
          %v3045 = vunpack.c.h.b16 %v2956
          %v3046 = vunpack.c.l.b16 %v2957
          %v3047 = vunpack.c.h.b16 %v2957
          %v3048 = vunpack.c.l.b16 %v2958
          %v3049 = vunpack.c.h.b16 %v2958
          %v3050 = vunpack.c.l.b16 %v2959
          %v3051 = vunpack.c.h.b16 %v2959
          %v3052 = vunpack.c.l.b16 %v2960
          %v3053 = vunpack.c.h.b16 %v2960
          %v3054 = vunpack.c.l.b16 %v2961
          %v3055 = vunpack.c.h.b16 %v2961
          %v3056 = vunpack.c.l.b16 %v2962
          %v3057 = vunpack.c.h.b16 %v2962
          %v3058 = vunpack.c.l.b16 %v2963
          %v3059 = vunpack.c.h.b16 %v2963
          %v3060 = vunpack.c.l.b16 %v2964
          %v3061 = vunpack.c.h.b16 %v2964
          %v3062 = vunpack.c.l.b16 %v2965
          %v3063 = vunpack.c.h.b16 %v2965
          %v3064 = vunpack.c.l.b16 %v2966
          %v3065 = vunpack.c.h.b16 %v2966
          %v3066 = vunpack.c.l.b16 %v2967
          %v3067 = vunpack.c.h.b16 %v2967
          %v3068 = vunpack.c.l.b16 %v2968
          %v3069 = vunpack.c.h.b16 %v2968
          %v3070 = vunpack.c.l.b16 %v2969
          %v3071 = vunpack.c.h.b16 %v2969
          %v3072 = vpack.c.b16 %v3010, %v3008
          %v3073 = vpack.c.b16 %v3011, %v3009
          %v3074 = vpack.c.b16 %v3014, %v3012
          %v3075 = vpack.c.b16 %v3015, %v3013
          %v3076 = vpack.c.b16 %v3018, %v3016
          %v3077 = vpack.c.b16 %v3019, %v3017
          %v3078 = vpack.c.b16 %v3022, %v3020
          %v3079 = vpack.c.b16 %v3023, %v3021
          %v3080 = vpack.c.b16 %v3026, %v3024
          %v3081 = vpack.c.b16 %v3027, %v3025
          %v3082 = vpack.c.b16 %v3030, %v3028
          %v3083 = vpack.c.b16 %v3031, %v3029
          %v3084 = vpack.c.b16 %v3034, %v3032
          %v3085 = vpack.c.b16 %v3035, %v3033
          %v3086 = vpack.c.b16 %v3038, %v3036
          %v3087 = vpack.c.b16 %v3039, %v3037
          %v3088 = vpack.c.b16 %v3042, %v3040
          %v3089 = vpack.c.b16 %v3043, %v3041
          %v3090 = vpack.c.b16 %v3046, %v3044
          %v3091 = vpack.c.b16 %v3047, %v3045
          %v3092 = vpack.c.b16 %v3050, %v3048
          %v3093 = vpack.c.b16 %v3051, %v3049
          %v3094 = vpack.c.b16 %v3054, %v3052
          %v3095 = vpack.c.b16 %v3055, %v3053
          %v3096 = vpack.c.b16 %v3058, %v3056
          %v3097 = vpack.c.b16 %v3059, %v3057
          %v3098 = vpack.c.b16 %v3062, %v3060
          %v3099 = vpack.c.b16 %v3063, %v3061
          %v3100 = vpack.c.b16 %v3066, %v3064
          %v3101 = vpack.c.b16 %v3067, %v3065
          %v3102 = vpack.c.b16 %v3070, %v3068
          %v3103 = vpack.c.b16 %v3071, %v3069
          %3136 = vmatpush.bf16.msra.mxu0 %v3086
          %3137 = vmatpush.bf16.msra.mxu0 %v3084
          %3138 = vmatpush.bf16.msra.mxu0 %v3082
          %3139 = vmatpush.bf16.msra.mxu0 %v3080
          %3140 = vmatpush.bf16.msra.mxu0 %v3078
          %3141 = vmatpush.bf16.msra.mxu0 %v3076
          %3142 = vmatpush.bf16.msra.mxu0 %v3074
          %3143 = vmatpush.bf16.msra.mxu0 %v3072
          %3144 = vmatmul.bf16.gmra.mxu0 %v2936
          %v3145 = vpop.f32.mrf.mxu0
          %v3146 = vadd.f32 %v2972, %v3145
          %v3147 = vpop.f32.mrf.mxu0
          %3148 = vdwg.mxu0
          %3149 = vmatpush.bf16.msra.mxu0 %v3102
          %3150 = vmatpush.bf16.msra.mxu0 %v3100
          %3151 = vmatpush.bf16.msra.mxu0 %v3098
          %3152 = vmatpush.bf16.msra.mxu0 %v3096
          %3153 = vmatpush.bf16.msra.mxu0 %v3094
          %3154 = vmatpush.bf16.msra.mxu0 %v3092
          %3155 = vmatpush.bf16.msra.mxu0 %v3090
          %3156 = vmatpush.bf16.msra.mxu0 %v3088
          %3157 = vmatmul.bf16.gmra.mxu0 %v2937
          %v3158 = vpop.f32.mrf.mxu0
          %v3159 = vadd.f32 %v3146, %v3158
          %v3160 = vpop.f32.mrf.mxu0
          %3161 = vdwg.mxu0
          %3162 = vmatpush.bf16.msra.mxu0 %v3087
          %3163 = vmatpush.bf16.msra.mxu0 %v3085
          %3164 = vmatpush.bf16.msra.mxu0 %v3083
          %3165 = vmatpush.bf16.msra.mxu0 %v3081
          %3166 = vmatpush.bf16.msra.mxu0 %v3079
          %3167 = vmatpush.bf16.msra.mxu0 %v3077
          %3168 = vmatpush.bf16.msra.mxu0 %v3075
          %3169 = vmatpush.bf16.msra.mxu0 %v3073
          %3170 = vmatmul.bf16.gmra.mxu0 %v2936
          %v3171 = vpop.f32.mrf.mxu0
          %v3172 = vadd.f32 %v2973, %v3171
          %v3173 = vpop.f32.mrf.mxu0
          %3174 = vdwg.mxu0
          %3175 = vmatpush.bf16.msra.mxu0 %v3103
          %3176 = vmatpush.bf16.msra.mxu0 %v3101
          %3177 = vmatpush.bf16.msra.mxu0 %v3099
          %3178 = vmatpush.bf16.msra.mxu0 %v3097
          %3179 = vmatpush.bf16.msra.mxu0 %v3095
          %3180 = vmatpush.bf16.msra.mxu0 %v3093
          %3181 = vmatpush.bf16.msra.mxu0 %v3091
          %3182 = vmatpush.bf16.msra.mxu0 %v3089
          %3183 = vmatmul.bf16.gmra.mxu0 %v2937
          %v3184 = vpop.f32.mrf.mxu0
          %v3185 = vadd.f32 %v3172, %v3184
          %v3186 = vpop.f32.mrf.mxu0
          %3187 = vdwg.mxu0
          %v3188 = vmax.f32 %v3159, 0.0
          %v3189 = vmax.f32 %v3185, 0.0
          %v3190 = vpack.c.bf16 %v3188, %v3188
          %v3191 = vpack.c.bf16 %v3189, %v3189
          %v3192 = vld [vmem:[%s11] sm:$0xff]
          %v3193 = vld [vmem:[%s11 + $0x8] sm:$0xff]
          %v3194 = vld [vmem:[%s11 + $0x10] sm:$0xff]
          %v3195 = vld [vmem:[%s11 + $0x18] sm:$0xff]
          %v3196 = vld [vmem:[%s11 + $0x20] sm:$0xff]
          %v3197 = vld [vmem:[%s11 + $0x28] sm:$0xff]
          %v3198 = vld [vmem:[%s11 + $0x30] sm:$0xff]
          %v3199 = vld [vmem:[%s11 + $0x38] sm:$0xff]
          %v3200 = vld [vmem:[%s11 + $0x40] sm:$0xff]
          %v3201 = vld [vmem:[%s11 + $0x48] sm:$0xff]
          %v3202 = vld [vmem:[%s11 + $0x50] sm:$0xff]
          %v3203 = vld [vmem:[%s11 + $0x58] sm:$0xff]
          %v3204 = vld [vmem:[%s11 + $0x60] sm:$0xff]
          %v3205 = vld [vmem:[%s11 + $0x68] sm:$0xff]
          %v3206 = vld [vmem:[%s11 + $0x70] sm:$0xff]
          %v3207 = vld [vmem:[%s11 + $0x78] sm:$0xff]
          %v3208 = vld [vmem:[%s11 + $0x80] sm:$0xff]
          %v3209 = vld [vmem:[%s11 + $0x88] sm:$0xff]
          %v3210 = vld [vmem:[%s11 + $0x90] sm:$0xff]
          %v3211 = vld [vmem:[%s11 + $0x98] sm:$0xff]
          %v3212 = vld [vmem:[%s11 + $0xa0] sm:$0xff]
          %v3213 = vld [vmem:[%s11 + $0xa8] sm:$0xff]
          %v3214 = vld [vmem:[%s11 + $0xb0] sm:$0xff]
          %v3215 = vld [vmem:[%s11 + $0xb8] sm:$0xff]
          %v3216 = vld [vmem:[%s11 + $0xc0] sm:$0xff]
          %v3217 = vld [vmem:[%s11 + $0xc8] sm:$0xff]
          %v3218 = vld [vmem:[%s11 + $0xd0] sm:$0xff]
          %v3219 = vld [vmem:[%s11 + $0xd8] sm:$0xff]
          %v3220 = vld [vmem:[%s11 + $0xe0] sm:$0xff]
          %v3221 = vld [vmem:[%s11 + $0xe8] sm:$0xff]
          %v3222 = vld [vmem:[%s11 + $0xf0] sm:$0xff]
          %v3223 = vld [vmem:[%s11 + $0xf8] sm:$0xff]
          %v3224 = vld [vmem:[%s12] sm:$0x3]
          %v3226 = vperm.slane %v3224, 0
          %v3227 = vperm.slane %v3224, 1
          %v3262 = vunpack.c.l.b16 %v3192
          %v3263 = vunpack.c.h.b16 %v3192
          %v3264 = vunpack.c.l.b16 %v3193
          %v3265 = vunpack.c.h.b16 %v3193
          %v3266 = vunpack.c.l.b16 %v3194
          %v3267 = vunpack.c.h.b16 %v3194
          %v3268 = vunpack.c.l.b16 %v3195
          %v3269 = vunpack.c.h.b16 %v3195
          %v3270 = vunpack.c.l.b16 %v3196
          %v3271 = vunpack.c.h.b16 %v3196
          %v3272 = vunpack.c.l.b16 %v3197
          %v3273 = vunpack.c.h.b16 %v3197
          %v3274 = vunpack.c.l.b16 %v3198
          %v3275 = vunpack.c.h.b16 %v3198
          %v3276 = vunpack.c.l.b16 %v3199
          %v3277 = vunpack.c.h.b16 %v3199
          %v3278 = vunpack.c.l.b16 %v3200
          %v3279 = vunpack.c.h.b16 %v3200
          %v3280 = vunpack.c.l.b16 %v3201
          %v3281 = vunpack.c.h.b16 %v3201
          %v3282 = vunpack.c.l.b16 %v3202
          %v3283 = vunpack.c.h.b16 %v3202
          %v3284 = vunpack.c.l.b16 %v3203
          %v3285 = vunpack.c.h.b16 %v3203
          %v3286 = vunpack.c.l.b16 %v3204
          %v3287 = vunpack.c.h.b16 %v3204
          %v3288 = vunpack.c.l.b16 %v3205
          %v3289 = vunpack.c.h.b16 %v3205
          %v3290 = vunpack.c.l.b16 %v3206
          %v3291 = vunpack.c.h.b16 %v3206
          %v3292 = vunpack.c.l.b16 %v3207
          %v3293 = vunpack.c.h.b16 %v3207
          %v3294 = vunpack.c.l.b16 %v3208
          %v3295 = vunpack.c.h.b16 %v3208
          %v3296 = vunpack.c.l.b16 %v3209
          %v3297 = vunpack.c.h.b16 %v3209
          %v3298 = vunpack.c.l.b16 %v3210
          %v3299 = vunpack.c.h.b16 %v3210
          %v3300 = vunpack.c.l.b16 %v3211
          %v3301 = vunpack.c.h.b16 %v3211
          %v3302 = vunpack.c.l.b16 %v3212
          %v3303 = vunpack.c.h.b16 %v3212
          %v3304 = vunpack.c.l.b16 %v3213
          %v3305 = vunpack.c.h.b16 %v3213
          %v3306 = vunpack.c.l.b16 %v3214
          %v3307 = vunpack.c.h.b16 %v3214
          %v3308 = vunpack.c.l.b16 %v3215
          %v3309 = vunpack.c.h.b16 %v3215
          %v3310 = vunpack.c.l.b16 %v3216
          %v3311 = vunpack.c.h.b16 %v3216
          %v3312 = vunpack.c.l.b16 %v3217
          %v3313 = vunpack.c.h.b16 %v3217
          %v3314 = vunpack.c.l.b16 %v3218
          %v3315 = vunpack.c.h.b16 %v3218
          %v3316 = vunpack.c.l.b16 %v3219
          %v3317 = vunpack.c.h.b16 %v3219
          %v3318 = vunpack.c.l.b16 %v3220
          %v3319 = vunpack.c.h.b16 %v3220
          %v3320 = vunpack.c.l.b16 %v3221
          %v3321 = vunpack.c.h.b16 %v3221
          %v3322 = vunpack.c.l.b16 %v3222
          %v3323 = vunpack.c.h.b16 %v3222
          %v3324 = vunpack.c.l.b16 %v3223
          %v3325 = vunpack.c.h.b16 %v3223
          %v3326 = vpack.c.b16 %v3264, %v3262
          %v3327 = vpack.c.b16 %v3265, %v3263
          %v3328 = vpack.c.b16 %v3268, %v3266
          %v3329 = vpack.c.b16 %v3269, %v3267
          %v3330 = vpack.c.b16 %v3272, %v3270
          %v3331 = vpack.c.b16 %v3273, %v3271
          %v3332 = vpack.c.b16 %v3276, %v3274
          %v3333 = vpack.c.b16 %v3277, %v3275
          %v3334 = vpack.c.b16 %v3280, %v3278
          %v3335 = vpack.c.b16 %v3281, %v3279
          %v3336 = vpack.c.b16 %v3284, %v3282
          %v3337 = vpack.c.b16 %v3285, %v3283
          %v3338 = vpack.c.b16 %v3288, %v3286
          %v3339 = vpack.c.b16 %v3289, %v3287
          %v3340 = vpack.c.b16 %v3292, %v3290
          %v3341 = vpack.c.b16 %v3293, %v3291
          %v3342 = vpack.c.b16 %v3296, %v3294
          %v3343 = vpack.c.b16 %v3297, %v3295
          %v3344 = vpack.c.b16 %v3300, %v3298
          %v3345 = vpack.c.b16 %v3301, %v3299
          %v3346 = vpack.c.b16 %v3304, %v3302
          %v3347 = vpack.c.b16 %v3305, %v3303
          %v3348 = vpack.c.b16 %v3308, %v3306
          %v3349 = vpack.c.b16 %v3309, %v3307
          %v3350 = vpack.c.b16 %v3312, %v3310
          %v3351 = vpack.c.b16 %v3313, %v3311
          %v3352 = vpack.c.b16 %v3316, %v3314
          %v3353 = vpack.c.b16 %v3317, %v3315
          %v3354 = vpack.c.b16 %v3320, %v3318
          %v3355 = vpack.c.b16 %v3321, %v3319
          %v3356 = vpack.c.b16 %v3324, %v3322
          %v3357 = vpack.c.b16 %v3325, %v3323
          %3390 = vmatpush.bf16.msra.mxu0 %v3340
          %3391 = vmatpush.bf16.msra.mxu0 %v3338
          %3392 = vmatpush.bf16.msra.mxu0 %v3336
          %3393 = vmatpush.bf16.msra.mxu0 %v3334
          %3394 = vmatpush.bf16.msra.mxu0 %v3332
          %3395 = vmatpush.bf16.msra.mxu0 %v3330
          %3396 = vmatpush.bf16.msra.mxu0 %v3328
          %3397 = vmatpush.bf16.msra.mxu0 %v3326
          %3398 = vmatmul.bf16.gmra.mxu0 %v3190
          %v3399 = vpop.f32.mrf.mxu0
          %v3400 = vadd.f32 %v3226, %v3399
          %v3401 = vpop.f32.mrf.mxu0
          %3402 = vdwg.mxu0
          %3403 = vmatpush.bf16.msra.mxu0 %v3356
          %3404 = vmatpush.bf16.msra.mxu0 %v3354
          %3405 = vmatpush.bf16.msra.mxu0 %v3352
          %3406 = vmatpush.bf16.msra.mxu0 %v3350
          %3407 = vmatpush.bf16.msra.mxu0 %v3348
          %3408 = vmatpush.bf16.msra.mxu0 %v3346
          %3409 = vmatpush.bf16.msra.mxu0 %v3344
          %3410 = vmatpush.bf16.msra.mxu0 %v3342
          %3411 = vmatmul.bf16.gmra.mxu0 %v3191
          %v3412 = vpop.f32.mrf.mxu0
          %v3413 = vadd.f32 %v3400, %v3412
          %v3414 = vpop.f32.mrf.mxu0
          %3415 = vdwg.mxu0
          %3416 = vmatpush.bf16.msra.mxu0 %v3341
          %3417 = vmatpush.bf16.msra.mxu0 %v3339
          %3418 = vmatpush.bf16.msra.mxu0 %v3337
          %3419 = vmatpush.bf16.msra.mxu0 %v3335
          %3420 = vmatpush.bf16.msra.mxu0 %v3333
          %3421 = vmatpush.bf16.msra.mxu0 %v3331
          %3422 = vmatpush.bf16.msra.mxu0 %v3329
          %3423 = vmatpush.bf16.msra.mxu0 %v3327
          %3424 = vmatmul.bf16.gmra.mxu0 %v3190
          %v3425 = vpop.f32.mrf.mxu0
          %v3426 = vadd.f32 %v3227, %v3425
          %v3427 = vpop.f32.mrf.mxu0
          %3428 = vdwg.mxu0
          %3429 = vmatpush.bf16.msra.mxu0 %v3357
          %3430 = vmatpush.bf16.msra.mxu0 %v3355
          %3431 = vmatpush.bf16.msra.mxu0 %v3353
          %3432 = vmatpush.bf16.msra.mxu0 %v3351
          %3433 = vmatpush.bf16.msra.mxu0 %v3349
          %3434 = vmatpush.bf16.msra.mxu0 %v3347
          %3435 = vmatpush.bf16.msra.mxu0 %v3345
          %3436 = vmatpush.bf16.msra.mxu0 %v3343
          %3437 = vmatmul.bf16.gmra.mxu0 %v3191
          %v3438 = vpop.f32.mrf.mxu0
          %v3439 = vadd.f32 %v3426, %v3438
          %v3440 = vpop.f32.mrf.mxu0
          %3441 = vdwg.mxu0
          %v3442 = vadd.f32 %v3413, %v2931
          %v3443 = vadd.f32 %v3439, %v2932
          %v3444 = vpack.c.bf16 %v3442, %v3442
          %v3445 = vpack.c.bf16 %v3443, %v3443
          %v3446 = vld [vmem:[%s13] sm:$0xff]
          %v3447 = vld [vmem:[%s13 + $0x8] sm:$0xff]
          %v3448 = vld [vmem:[%s13 + $0x10] sm:$0xff]
          %v3449 = vld [vmem:[%s13 + $0x18] sm:$0xff]
          %v3450 = vld [vmem:[%s13 + $0x20] sm:$0xff]
          %v3451 = vld [vmem:[%s13 + $0x28] sm:$0xff]
          %v3452 = vld [vmem:[%s13 + $0x30] sm:$0xff]
          %v3453 = vld [vmem:[%s13 + $0x38] sm:$0xff]
          %v3454 = vld [vmem:[%s13 + $0x40] sm:$0xff]
          %v3455 = vld [vmem:[%s13 + $0x48] sm:$0xff]
          %v3456 = vld [vmem:[%s13 + $0x50] sm:$0xff]
          %v3457 = vld [vmem:[%s13 + $0x58] sm:$0xff]
          %v3458 = vld [vmem:[%s13 + $0x60] sm:$0xff]
          %v3459 = vld [vmem:[%s13 + $0x68] sm:$0xff]
          %v3460 = vld [vmem:[%s13 + $0x70] sm:$0xff]
          %v3461 = vld [vmem:[%s13 + $0x78] sm:$0xff]
          %v3462 = vld [vmem:[%s13 + $0x80] sm:$0xff]
          %v3463 = vld [vmem:[%s13 + $0x88] sm:$0xff]
          %v3464 = vld [vmem:[%s13 + $0x90] sm:$0xff]
          %v3465 = vld [vmem:[%s13 + $0x98] sm:$0xff]
          %v3466 = vld [vmem:[%s13 + $0xa0] sm:$0xff]
          %v3467 = vld [vmem:[%s13 + $0xa8] sm:$0xff]
          %v3468 = vld [vmem:[%s13 + $0xb0] sm:$0xff]
          %v3469 = vld [vmem:[%s13 + $0xb8] sm:$0xff]
          %v3470 = vld [vmem:[%s13 + $0xc0] sm:$0xff]
          %v3471 = vld [vmem:[%s13 + $0xc8] sm:$0xff]
          %v3472 = vld [vmem:[%s13 + $0xd0] sm:$0xff]
          %v3473 = vld [vmem:[%s13 + $0xd8] sm:$0xff]
          %v3474 = vld [vmem:[%s13 + $0xe0] sm:$0xff]
          %v3475 = vld [vmem:[%s13 + $0xe8] sm:$0xff]
          %v3476 = vld [vmem:[%s13 + $0xf0] sm:$0xff]
          %v3477 = vld [vmem:[%s13 + $0xf8] sm:$0xff]
          %v3510 = vunpack.c.l.b16 %v3446
          %v3511 = vunpack.c.h.b16 %v3446
          %v3512 = vunpack.c.l.b16 %v3447
          %v3513 = vunpack.c.h.b16 %v3447
          %v3514 = vunpack.c.l.b16 %v3448
          %v3515 = vunpack.c.h.b16 %v3448
          %v3516 = vunpack.c.l.b16 %v3449
          %v3517 = vunpack.c.h.b16 %v3449
          %v3518 = vunpack.c.l.b16 %v3450
          %v3519 = vunpack.c.h.b16 %v3450
          %v3520 = vunpack.c.l.b16 %v3451
          %v3521 = vunpack.c.h.b16 %v3451
          %v3522 = vunpack.c.l.b16 %v3452
          %v3523 = vunpack.c.h.b16 %v3452
          %v3524 = vunpack.c.l.b16 %v3453
          %v3525 = vunpack.c.h.b16 %v3453
          %v3526 = vunpack.c.l.b16 %v3454
          %v3527 = vunpack.c.h.b16 %v3454
          %v3528 = vunpack.c.l.b16 %v3455
          %v3529 = vunpack.c.h.b16 %v3455
          %v3530 = vunpack.c.l.b16 %v3456
          %v3531 = vunpack.c.h.b16 %v3456
          %v3532 = vunpack.c.l.b16 %v3457
          %v3533 = vunpack.c.h.b16 %v3457
          %v3534 = vunpack.c.l.b16 %v3458
          %v3535 = vunpack.c.h.b16 %v3458
          %v3536 = vunpack.c.l.b16 %v3459
          %v3537 = vunpack.c.h.b16 %v3459
          %v3538 = vunpack.c.l.b16 %v3460
          %v3539 = vunpack.c.h.b16 %v3460
          %v3540 = vunpack.c.l.b16 %v3461
          %v3541 = vunpack.c.h.b16 %v3461
          %v3542 = vunpack.c.l.b16 %v3462
          %v3543 = vunpack.c.h.b16 %v3462
          %v3544 = vunpack.c.l.b16 %v3463
          %v3545 = vunpack.c.h.b16 %v3463
          %v3546 = vunpack.c.l.b16 %v3464
          %v3547 = vunpack.c.h.b16 %v3464
          %v3548 = vunpack.c.l.b16 %v3465
          %v3549 = vunpack.c.h.b16 %v3465
          %v3550 = vunpack.c.l.b16 %v3466
          %v3551 = vunpack.c.h.b16 %v3466
          %v3552 = vunpack.c.l.b16 %v3467
          %v3553 = vunpack.c.h.b16 %v3467
          %v3554 = vunpack.c.l.b16 %v3468
          %v3555 = vunpack.c.h.b16 %v3468
          %v3556 = vunpack.c.l.b16 %v3469
          %v3557 = vunpack.c.h.b16 %v3469
          %v3558 = vunpack.c.l.b16 %v3470
          %v3559 = vunpack.c.h.b16 %v3470
          %v3560 = vunpack.c.l.b16 %v3471
          %v3561 = vunpack.c.h.b16 %v3471
          %v3562 = vunpack.c.l.b16 %v3472
          %v3563 = vunpack.c.h.b16 %v3472
          %v3564 = vunpack.c.l.b16 %v3473
          %v3565 = vunpack.c.h.b16 %v3473
          %v3566 = vunpack.c.l.b16 %v3474
          %v3567 = vunpack.c.h.b16 %v3474
          %v3568 = vunpack.c.l.b16 %v3475
          %v3569 = vunpack.c.h.b16 %v3475
          %v3570 = vunpack.c.l.b16 %v3476
          %v3571 = vunpack.c.h.b16 %v3476
          %v3572 = vunpack.c.l.b16 %v3477
          %v3573 = vunpack.c.h.b16 %v3477
          %v3574 = vpack.c.b16 %v3512, %v3510
          %v3575 = vpack.c.b16 %v3513, %v3511
          %v3576 = vpack.c.b16 %v3516, %v3514
          %v3577 = vpack.c.b16 %v3517, %v3515
          %v3578 = vpack.c.b16 %v3520, %v3518
          %v3579 = vpack.c.b16 %v3521, %v3519
          %v3580 = vpack.c.b16 %v3524, %v3522
          %v3581 = vpack.c.b16 %v3525, %v3523
          %v3582 = vpack.c.b16 %v3528, %v3526
          %v3583 = vpack.c.b16 %v3529, %v3527
          %v3584 = vpack.c.b16 %v3532, %v3530
          %v3585 = vpack.c.b16 %v3533, %v3531
          %v3586 = vpack.c.b16 %v3536, %v3534
          %v3587 = vpack.c.b16 %v3537, %v3535
          %v3588 = vpack.c.b16 %v3540, %v3538
          %v3589 = vpack.c.b16 %v3541, %v3539
          %v3590 = vpack.c.b16 %v3544, %v3542
          %v3591 = vpack.c.b16 %v3545, %v3543
          %v3592 = vpack.c.b16 %v3548, %v3546
          %v3593 = vpack.c.b16 %v3549, %v3547
          %v3594 = vpack.c.b16 %v3552, %v3550
          %v3595 = vpack.c.b16 %v3553, %v3551
          %v3596 = vpack.c.b16 %v3556, %v3554
          %v3597 = vpack.c.b16 %v3557, %v3555
          %v3598 = vpack.c.b16 %v3560, %v3558
          %v3599 = vpack.c.b16 %v3561, %v3559
          %v3600 = vpack.c.b16 %v3564, %v3562
          %v3601 = vpack.c.b16 %v3565, %v3563
          %v3602 = vpack.c.b16 %v3568, %v3566
          %v3603 = vpack.c.b16 %v3569, %v3567
          %v3604 = vpack.c.b16 %v3572, %v3570
          %v3605 = vpack.c.b16 %v3573, %v3571
          %3638 = vmatpush.bf16.msra.mxu0 %v3588
          %3639 = vmatpush.bf16.msra.mxu0 %v3586
          %3640 = vmatpush.bf16.msra.mxu0 %v3584
          %3641 = vmatpush.bf16.msra.mxu0 %v3582
          %3642 = vmatpush.bf16.msra.mxu0 %v3580
          %3643 = vmatpush.bf16.msra.mxu0 %v3578
          %3644 = vmatpush.bf16.msra.mxu0 %v3576
          %3645 = vmatpush.bf16.msra.mxu0 %v3574
          %3646 = vmatmul.bf16.gmra.mxu0 %v3444
          %v3647 = vpop.f32.mrf.mxu0
          %v3648 = vadd.f32 0.0, %v3647
          %v3649 = vpop.f32.mrf.mxu0
          %3650 = vdwg.mxu0
          %3651 = vmatpush.bf16.msra.mxu0 %v3604
          %3652 = vmatpush.bf16.msra.mxu0 %v3602
          %3653 = vmatpush.bf16.msra.mxu0 %v3600
          %3654 = vmatpush.bf16.msra.mxu0 %v3598
          %3655 = vmatpush.bf16.msra.mxu0 %v3596
          %3656 = vmatpush.bf16.msra.mxu0 %v3594
          %3657 = vmatpush.bf16.msra.mxu0 %v3592
          %3658 = vmatpush.bf16.msra.mxu0 %v3590
          %3659 = vmatmul.bf16.gmra.mxu0 %v3445
          %v3660 = vpop.f32.mrf.mxu0
          %v3661 = vadd.f32 %v3648, %v3660
          %v3662 = vpop.f32.mrf.mxu0
          %3663 = vdwg.mxu0
          %3664 = vmatpush.bf16.msra.mxu0 %v3589
          %3665 = vmatpush.bf16.msra.mxu0 %v3587
          %3666 = vmatpush.bf16.msra.mxu0 %v3585
          %3667 = vmatpush.bf16.msra.mxu0 %v3583
          %3668 = vmatpush.bf16.msra.mxu0 %v3581
          %3669 = vmatpush.bf16.msra.mxu0 %v3579
          %3670 = vmatpush.bf16.msra.mxu0 %v3577
          %3671 = vmatpush.bf16.msra.mxu0 %v3575
          %3672 = vmatmul.bf16.gmra.mxu0 %v3444
          %v3673 = vpop.f32.mrf.mxu0
          %v3674 = vadd.f32 0.0, %v3673
          %v3675 = vpop.f32.mrf.mxu0
          %3676 = vdwg.mxu0
          %3677 = vmatpush.bf16.msra.mxu0 %v3605
          %3678 = vmatpush.bf16.msra.mxu0 %v3603
          %3679 = vmatpush.bf16.msra.mxu0 %v3601
          %3680 = vmatpush.bf16.msra.mxu0 %v3599
          %3681 = vmatpush.bf16.msra.mxu0 %v3597
          %3682 = vmatpush.bf16.msra.mxu0 %v3595
          %3683 = vmatpush.bf16.msra.mxu0 %v3593
          %3684 = vmatpush.bf16.msra.mxu0 %v3591
          %3685 = vmatmul.bf16.gmra.mxu0 %v3445
          %v3686 = vpop.f32.mrf.mxu0
          %v3687 = vadd.f32 %v3674, %v3686
          %v3688 = vpop.f32.mrf.mxu0
          %3689 = vdwg.mxu0
          %3690 = vmatpush.xpose.msra.mxu0 0.0
          %3691 = vmatpush.xpose.msra.mxu0 0.0
          %3692 = vmatpush.xpose.msra.mxu0 0.0
          %3693 = vmatpush.xpose.msra.mxu0 0.0
          %3694 = vmatpush.xpose.msra.mxu0 0.0
          %3695 = vmatpush.xpose.msra.mxu0 0.0
          %3696 = vmatpush.xpose.msra.mxu0 0.0
          %3697 = vmatpush.xpose.msra.mxu0 0.0
          %3698 = vmatpush.xpose.msra.mxu0 0.0
          %3699 = vmatpush.xpose.msra.mxu0 0.0
          %3700 = vmatpush.xpose.msra.mxu0 0.0
          %3701 = vmatpush.xpose.msra.mxu0 0.0
          %3702 = vmatpush.xpose.msra.mxu0 0.0
          %3703 = vmatpush.xpose.msra.mxu0 0.0
          %3704 = vmatpush.xpose.msra.mxu0 0.0
          %3705 = vmatpush.xpose.msra.mxu0 %v2934
          %3706 = vmatmul.f32.gmra.mxu0 %v3661
          %v3707 = vpop.f32.mrf.mxu0
          %v3708 = vadd.f32 0.0, %v3707
          %3709 = vdwg.mxu0
          %3710 = vmatpush.xpose.msra.mxu0 0.0
          %3711 = vmatpush.xpose.msra.mxu0 0.0
          %3712 = vmatpush.xpose.msra.mxu0 0.0
          %3713 = vmatpush.xpose.msra.mxu0 0.0
          %3714 = vmatpush.xpose.msra.mxu0 0.0
          %3715 = vmatpush.xpose.msra.mxu0 0.0
          %3716 = vmatpush.xpose.msra.mxu0 0.0
          %3717 = vmatpush.xpose.msra.mxu0 0.0
          %3718 = vmatpush.xpose.msra.mxu0 0.0
          %3719 = vmatpush.xpose.msra.mxu0 0.0
          %3720 = vmatpush.xpose.msra.mxu0 0.0
          %3721 = vmatpush.xpose.msra.mxu0 0.0
          %3722 = vmatpush.xpose.msra.mxu0 0.0
          %3723 = vmatpush.xpose.msra.mxu0 0.0
          %3724 = vmatpush.xpose.msra.mxu0 0.0
          %3725 = vmatpush.xpose.msra.mxu0 %v2935
          %3726 = vmatmul.f32.gmra.mxu0 %v3687
          %v3727 = vpop.f32.mrf.mxu0
          %v3728 = vadd.f32 %v3708, %v3727
          %3729 = vdwg.mxu0
          %vm3730 = vcmask 64512
          %v3731 = vsel %vm3730, %v3728, -inf
          %3732 = vmax.xlane.f32.xlu0 %v3731
          %v3733 = vpop.xlane.xlu0 %3732
          %v3734 = vsub.f32 %v3728, %v3733
          %3735 = vst.msk [vmem:[#allocation5] sm:$0xff] %vm3730, %v3734
        $region88: #{curl_atc_forward.1} parent=75 // pred_fallthru
          _
        // Predicated region
        $region89: #{curl_atc_forward.1} parent=75 // pred_check
          %p3736 = pneg %p414
        $region90: #{curl_atc_forward.1} parent=75 // pred_check_branch
          %3738 = sbr.rel (%p3736) target = $region92
        $region91: #{curl_atc_forward.1} parent=75 // pred_region
          %3740 = vsyncadd [#allocation6], 0
          %s3742 = sshll.u32 [#allocation5], 4
          %s3743 = int_to_ptr.vmem [resolvable:$true] %s3742
          %s3744 = sshll.u32 %s14, 4
          %s3745 = int_to_ptr.hbm [resolvable:$true] %s3744
          %3747 = dma.vmem_to_hbm [thread:$0]  %s3743, 128, %s3745, [#allocation6]
        $region92: #{curl_atc_forward.1} parent=75 // pred_fallthru
          _
        // Predicated region
        $region93: #{curl_atc_forward.1} parent=75 // pred_check
          %p3748 = pneg %p414
        $region94: #{curl_atc_forward.1} parent=75 // pred_check_branch
          %3750 = sbr.rel (%p3748) target = $region96
        $region95: #{curl_atc_forward.1} parent=75 // pred_region
          %3752 = dma.done [#allocation6], 128
        $region96: #{curl_atc_forward.1} parent=75 // pred_fallthru
          _
      $region76: #{curl_atc_forward.1} parent=5 // pred_fallthru
        _
      %p3753 = scmp.le.s32.totalorder 2, %s21
      // Predicated region
      $region97: #{curl_atc_forward.1} parent=5 // pred_check
        %p3754 = pneg %p3753
      $region98: #{curl_atc_forward.1} parent=5 // pred_check_branch
        %3756 = sbr.rel (%p3754) target = $region100
      $region99: #{curl_atc_forward.1} parent=5 // pred_region
        %s3757 = ssub.s32 %s21, 2
      $region100: #{curl_atc_forward.1} parent=5 // pred_fallthru
        _
    $region6: #{curl_atc_forward.1} parent=1 // loop_footer
      %s25 = sadd.s32 1, %s21
    $region7: #{curl_atc_forward.1} parent=1 // loop_footer_branch
      %20 = sbr.rel target = $region3
    $region8: #{curl_atc_forward.1} parent=1 // loop_exit
      _
    %3758 = vsyncpa [#allocation6], 1
    %s3759 = scalar_lea.sflag [#allocation6], 1
    %3760 = vsyncpa %s3759, 1

</llo_original>
